<compile_context>
chip_gen: v5e
topology: v5e:2x2
jax: 0.10.0
libtpu: 0.0.40
codegen_flags: <defaults>
</compile_context>

<pallas_src>
import jax
import jax.numpy as jnp
from jax import lax
from jax.experimental import pallas as pl
from jax.experimental.pallas import tpu as pltpu

# ----------------------- model configuration (small) -----------------------
B = 2               # batch
P = 16              # args.window
M = 8               # data.m
HIDC = 16           # args.hidCNN
HIDR = 32           # args.hidRNN
HIDS = 8            # args.hidSkip
CK = 3              # args.CNN_kernel
SKIP = 2            # args.skip
HW = 4              # args.highway_window
POOL = 4            # pooling_factor
PT = (P - CK) // SKIP                 # 6
TOUT = P - (CK - 1)                   # 14 : height after conv
HP = (TOUT - 1) // POOL + 1           # 4  : height after MaxPool2d(1, 4)
DH = P - HP + 1                       # 13 : deconv height
SBASE = P - PT * SKIP                 # 4  : first time index of the skip tail
G1 = 3 * HIDR                         # 96 : GRU1 gate lanes
GS = 3 * HIDS                         # 24 : skip-GRU gate lanes


# ------------------------------ fused kernel --------------------------------
def _aernn_kernel(x_ref,            # (B, P, M)
                  enc_w_ref,        # (CK, M, HIDC)
                  enc_b_ref,        # (1, HIDC)
                  dec_w_ref,        # (HP, HIDC, P*M) block-Toeplitz deconv
                  dec_b_ref,        # (1, P*M)
                  ch_w_ref,         # (M, HIDC)
                  ch_b_ref,         # (1, HIDC)
                  wih_ref,          # (HIDC, G1+GS)   both GRUs' W_ih fused
                  bih_ref,          # (1, G1+GS)      b_ih (+ folded b_hh r/z)
                  w1hh_ref,         # (HIDR, 3*HIDR)
                  b1hhn_ref,        # (1, HIDR)       n-gate hidden bias
                  wShh_ref,         # (HIDS, 3*HIDS)
                  bShhn_ref,        # (1, HIDS)
                  lw_r_ref,         # (HIDR, M)
                  lw_s_ref,         # (SKIP, HIDS, M)
                  lin_b_ref,        # (1, M)  == lin1_b + hw_b
                  hw_w_ref,         # (HW, M) highway tap weight per feature
                  o_ref,            # (B, M)
                  dec_s):           # VMEM scratch (P*B, M), rows (t-major, b)
    f32 = jnp.float32

    # ---- Conv2d(1,hidC,(Ck,m)) fused with MaxPool2d(1,4): only the pooled
    #      rows (t = 0, 4, 8, 12) are ever consumed, so compute just those.
    #      Then ConvTranspose2d as a block-Toeplitz GEMM accumulated over i. ---
    dec_flat = None
    for i in range(HP):
        acc = None
        for k in range(CK):
            xk = x_ref[:, i * POOL + k, :]                       # (B, M)
            term = jnp.dot(xk, enc_w_ref[k], preferred_element_type=f32)
            acc = term if acc is None else acc + term
        pooled_i = acc + enc_b_ref[...]                          # (B, HIDC)
        contrib = jnp.dot(pooled_i, dec_w_ref[i], preferred_element_type=f32)
        dec_flat = contrib if dec_flat is None else dec_flat + contrib
    dec_flat = dec_flat + dec_b_ref[...]                         # (B, P*M)

    # ---- one-time lane -> sublane relayout into (t-major, b) rows -----------
    for t in range(P):
        dec_s[t * B:(t + 1) * B, :] = dec_flat[:, t * M:(t + 1) * M]
    dec2d = dec_s[...]                                           # (P*B, M)

    # ---- change_hidden + ReLU: one GEMM over all (t, b) rows ----------------
    cfeat = jnp.dot(dec2d, ch_w_ref[...], preferred_element_type=f32)
    cfeat = jnp.maximum(cfeat + ch_b_ref[...], 0.0)              # (P*B, HIDC)

    # ---- BOTH GRUs' input projections in ONE lane-dense GEMM ----------------
    gi_all = jnp.dot(cfeat, wih_ref[...], preferred_element_type=f32)
    gi_all = gi_all + bih_ref[...]                               # (P*B, 120)
    gi1 = gi_all[:, :G1]                                         # (P*B, 96)
    giS = gi_all[:, G1:]                                         # (P*B, 24)

    def gru_step(gi_t, h, w_hh, b_hh_n, hid):
        # r/z hidden biases were folded into gi_t's bias on the host.
        gh = jnp.dot(h, w_hh, preferred_element_type=f32)
        r = jax.nn.sigmoid(gi_t[:, :hid] + gh[:, :hid])
        z = jax.nn.sigmoid(gi_t[:, hid:2 * hid] + gh[:, hid:2 * hid])
        n = jnp.tanh(gi_t[:, 2 * hid:] + r * (gh[:, 2 * hid:] + b_hh_n))
        return (1.0 - z) * n + z * h

    # ---- GRU1 over the full window: unrolled, one recurrent dot per step ----
    w1hh = w1hh_ref[...]
    b1hhn = b1hhn_ref[...]
    h1 = jnp.zeros((B, HIDR), f32)
    for t in range(P):
        h1 = gru_step(gi1[t * B:(t + 1) * B, :], h1, w1hh, b1hhn, HIDR)

    # ---- skip GRU: BOTH phase chains batched into one (SKIP*B) recurrence.
    #      Rows of each per-step block are contiguous in the (t, b) layout. ----
    wShh = wShh_ref[...]
    bShhn = bShhn_ref[...]
    hS = jnp.zeros((SKIP * B, HIDS), f32)                        # rows (q, b)
    for j in range(PT):
        r0 = (SBASE + j * SKIP) * B
        hS = gru_step(giS[r0:r0 + SKIP * B, :], hS, wShh, bShhn, HIDS)

    # ---- fused epilogue: linear1 + highway + sigmoid ------------------------
    res = jnp.dot(h1, lw_r_ref[...], preferred_element_type=f32) + lin_b_ref[...]
    for q in range(SKIP):
        res = res + jnp.dot(hS[q * B:(q + 1) * B, :], lw_s_ref[q],
                            preferred_element_type=f32)
    hww = hw_w_ref[...]                                          # (HW, M)
    for k in range(HW):
        tail_k = dec_flat[:, (P - HW + k) * M:(P - HW + k + 1) * M]   # (B, M)
        res = res + tail_k * hww[k:k + 1, :]
    o_ref[...] = jax.nn.sigmoid(res).astype(o_ref.dtype)


def _full_spec(shape):
    n = len(shape)
    return pl.BlockSpec(shape, lambda i: (0,) * n)


def forward(p, x):
    args = (x,
            p["enc_w"], p["enc_b"], p["dec_w"], p["dec_b"],
            p["ch_w"], p["ch_b"],
            p["w_ih_cat"], p["b_ih_cat"],
            p["w1_hh"], p["b1_hh_n"], p["wS_hh"], p["bS_hh_n"],
            p["lw_r"], p["lw_s"], p["lin_b"], p["hw_w_bc"])
    return pl.pallas_call(
        _aernn_kernel,
        out_shape=jax.ShapeDtypeStruct((B, M), jnp.float32),
        grid=(1,),
        in_specs=[_full_spec(a.shape) for a in args],
        out_specs=_full_spec((B, M)),
        scratch_shapes=[pltpu.VMEM((B * P, M), jnp.float32)],
        compiler_params=pltpu.CompilerParams(
            dimension_semantics=("arbitrary",)),
    )(*args)


# ------------------------------ parameters ----------------------------------
def init_raw_params(key):
    ks = jax.random.split(key, 18)

    def rnd(k, shape, scale=0.1):
        return (scale * jax.random.normal(k, shape)).astype(jnp.float32)

    return {
        "enc_w": rnd(ks[0], (HIDC, 1, CK, M)),          # Conv2d(1, hidC, (Ck, m))
        "enc_b": rnd(ks[1], (HIDC,)),
        "dec_w": rnd(ks[2], (HIDC, 1, DH, M)),          # ConvTranspose2d(hidC, 1, (Dh, m))
        "dec_b": rnd(ks[3], (1,)),
        "ch_w": rnd(ks[4], (HIDC, M)),                  # Linear(m, hidC)
        "ch_b": rnd(ks[5], (HIDC,)),
        "gru1_w_ih": rnd(ks[6], (3 * HIDR, HIDC)),
        "gru1_w_hh": rnd(ks[7], (3 * HIDR, HIDR)),
        "gru1_b_ih": rnd(ks[8], (3 * HIDR,)),
        "gru1_b_hh": rnd(ks[9], (3 * HIDR,)),
        "gruS_w_ih": rnd(ks[10], (3 * HIDS, HIDC)),
        "gruS_w_hh": rnd(ks[11], (3 * HIDS, HIDS)),
        "gruS_b_ih": rnd(ks[12], (3 * HIDS,)),
        "gruS_b_hh": rnd(ks[13], (3 * HIDS,)),
        "lin1_w": rnd(ks[14], (M, HIDR + SKIP * HIDS)),  # Linear(hidR+skip*hidS, m)
        "lin1_b": rnd(ks[15], (M,)),
        "hw_w": rnd(ks[16], (1, HW)),                    # Linear(hw, 1)
        "hw_b": rnd(ks[17], (1,)),
    }


def prep_params(raw):
    p = {}
    # Conv2d(1, hidC, (Ck, m)) -> per-tap GEMM weights (CK, M, HIDC)
    p["enc_w"] = jnp.transpose(raw["enc_w"][:, 0, :, :], (1, 2, 0))
    p["enc_b"] = raw["enc_b"].reshape(1, HIDC)
    # ConvTranspose2d(hidC, 1, (Dh, m)) -> block-Toeplitz weight (HP, HIDC, P*M)
    wd_flat = raw["dec_w"].reshape(HIDC, DH * M)
    p["dec_w"] = jnp.stack(
        [jnp.pad(wd_flat, ((0, 0), (i * M, (P - DH - i) * M))) for i in range(HP)],
        axis=0)
    p["dec_b"] = jnp.full((1, P * M), raw["dec_b"][0], jnp.float32)
    p["ch_w"] = raw["ch_w"].T                            # (M, HIDC)
    p["ch_b"] = raw["ch_b"].reshape(1, HIDC)

    # GRUs: both input projections fused (gates r,z,n in PyTorch order). The
    # r/z halves of b_hh are folded into the hoisted input bias; the n half
    # stays per-step (scaled by r inside the cell).
    def fold_bias(b_ih, b_hh, hid):
        return b_ih + jnp.concatenate(
            [b_hh[:2 * hid], jnp.zeros((hid,), jnp.float32)])

    p["w_ih_cat"] = jnp.concatenate(
        [raw["gru1_w_ih"].T, raw["gruS_w_ih"].T], axis=1)         # (HIDC, 120)
    p["b_ih_cat"] = jnp.concatenate(
        [fold_bias(raw["gru1_b_ih"], raw["gru1_b_hh"], HIDR),
         fold_bias(raw["gruS_b_ih"], raw["gruS_b_hh"], HIDS)]).reshape(1, G1 + GS)
    p["w1_hh"] = raw["gru1_w_hh"].T                               # (HIDR, 3*HIDR)
    p["b1_hh_n"] = raw["gru1_b_hh"][2 * HIDR:].reshape(1, HIDR)
    p["wS_hh"] = raw["gruS_w_hh"].T                               # (HIDS, 3*HIDS)
    p["bS_hh_n"] = raw["gruS_b_hh"][2 * HIDS:].reshape(1, HIDS)

    # linear1 split into the GRU1 block and the per-skip-phase blocks
    lin_wT = raw["lin1_w"].T                             # (HIDR + SKIP*HIDS, M)
    p["lw_r"] = lin_wT[:HIDR, :]
    p["lw_s"] = lin_wT[HIDR:, :].reshape(SKIP, HIDS, M)
    # highway: per-tap weight broadcast over features; bias folded into lin bias
    p["hw_w_bc"] = (jnp.ones((HW, M), jnp.float32)
                    * raw["hw_w"].reshape(HW, 1))
    p["lin_b"] = (raw["lin1_b"] + raw["hw_b"][0]).reshape(1, M)
    return p


# --------------------------- pure-JAX reference -------------------------------
def reference_forward(raw, x):
    bsz = x.shape[0]
    ae = jnp.stack(
        [jnp.einsum("bkm,ckm->bc", x[:, t:t + CK, :], raw["enc_w"][:, 0]) for t in range(TOUT)],
        axis=1) + raw["enc_b"][None, None, :]
    pooled = ae[:, ::POOL, :]
    dec = jnp.zeros((bsz, P, M), jnp.float32) + raw["dec_b"][0]
    for i in range(HP):
        contrib = jnp.einsum("bc,cdm->bdm", pooled[:, i, :], raw["dec_w"][:, 0])
        dec = dec.at[:, i:i + DH, :].add(contrib)
    cfeat = jax.nn.relu(jnp.einsum("bpm,hm->bph", dec, raw["ch_w"]) + raw["ch_b"])

    def gru_ref(x_seq, w_ih, w_hh, b_ih, b_hh, hid):
        def step(h, x_t):
            gi = x_t @ w_ih.T + b_ih
            gh = h @ w_hh.T + b_hh
            r = jax.nn.sigmoid(gi[:, :hid] + gh[:, :hid])
            z = jax.nn.sigmoid(gi[:, hid:2 * hid] + gh[:, hid:2 * hid])
            n = jnp.tanh(gi[:, 2 * hid:] + r * gh[:, 2 * hid:])
            return (1.0 - z) * n + z * h, None
        h0 = jnp.zeros((x_seq.shape[1], hid), jnp.float32)
        hT, _ = lax.scan(step, h0, x_seq)
        return hT

    r_seq = jnp.transpose(cfeat, (1, 0, 2))
    h_r = gru_ref(r_seq, raw["gru1_w_ih"], raw["gru1_w_hh"],
                  raw["gru1_b_ih"], raw["gru1_b_hh"], HIDR)
    tail = cfeat[:, P - PT * SKIP:, :]
    s_seq = tail.reshape(bsz, PT, SKIP, HIDC).transpose(1, 0, 2, 3).reshape(PT, bsz * SKIP, HIDC)
    h_s = gru_ref(s_seq, raw["gruS_w_ih"], raw["gruS_w_hh"],
                  raw["gruS_b_ih"], raw["gruS_b_hh"], HIDS).reshape(bsz, SKIP * HIDS)
    r = jnp.concatenate([h_r, h_s], axis=1)
    res = r @ raw["lin1_w"].T + raw["lin1_b"]
    z_in = jnp.transpose(dec[:, P - HW:, :], (0, 2, 1)).reshape(bsz * M, HW)
    zz = (z_in @ raw["hw_w"].T + raw["hw_b"]).reshape(bsz, M)
    return jax.nn.sigmoid(res + zz)


# ----------------------------------- main -------------------------------------
if __name__ == "__main__":
    key = jax.random.PRNGKey(0)
    k_param, k_x = jax.random.split(key)
    raw = init_raw_params(k_param)
    params = prep_params(raw)
    x = jax.random.normal(k_x, (B, P, M), dtype=jnp.float32)

    out = jax.jit(forward)(params, x)
    out = jax.block_until_ready(out)
    assert out.shape == (B, M), out.shape

    ref = jax.block_until_ready(reference_forward(raw, x))
    assert jnp.allclose(out, ref, atol=5e-3, rtol=5e-3), (out, ref)

    print("KERNEL_OK")
</pallas_src>

<mosaic_0001>
module attributes {stable_mosaic.version = 11 : i64} {
  func.func @_aernn_kernel(%arg0: i32, %arg1: memref<2x16x8xf32, #tpu.memory_space<vmem>>, %arg2: memref<3x8x16xf32, #tpu.memory_space<vmem>>, %arg3: memref<1x16xf32, #tpu.memory_space<vmem>>, %arg4: memref<4x16x128xf32, #tpu.memory_space<vmem>>, %arg5: memref<1x128xf32, #tpu.memory_space<vmem>>, %arg6: memref<8x16xf32, #tpu.memory_space<vmem>>, %arg7: memref<1x16xf32, #tpu.memory_space<vmem>>, %arg8: memref<16x120xf32, #tpu.memory_space<vmem>>, %arg9: memref<1x120xf32, #tpu.memory_space<vmem>>, %arg10: memref<32x96xf32, #tpu.memory_space<vmem>>, %arg11: memref<1x32xf32, #tpu.memory_space<vmem>>, %arg12: memref<8x24xf32, #tpu.memory_space<vmem>>, %arg13: memref<1x8xf32, #tpu.memory_space<vmem>>, %arg14: memref<32x8xf32, #tpu.memory_space<vmem>>, %arg15: memref<2x8x8xf32, #tpu.memory_space<vmem>>, %arg16: memref<1x8xf32, #tpu.memory_space<vmem>>, %arg17: memref<4x8xf32, #tpu.memory_space<vmem>>, %arg18: memref<2x8xf32, #tpu.memory_space<vmem>>, %arg19: memref<32x8xf32, #tpu.memory_space<vmem>>) attributes {dimension_semantics = [#tpu.dimension_semantics<arbitrary>], iteration_bounds = array<i64: 1>, scalar_prefetch = 0 : i64, scratch_operands = 1 : i64, tpu.core_type = #tpu.core_type<tc>, window_params = [{pipeline_mode = #tpu.pipeline_mode<synchronous>, transform_indices = @transform_0, window_bounds = array<i64: 2, 16, 8>}, {pipeline_mode = #tpu.pipeline_mode<synchronous>, transform_indices = @transform_1, window_bounds = array<i64: 3, 8, 16>}, {pipeline_mode = #tpu.pipeline_mode<synchronous>, transform_indices = @transform_2, window_bounds = array<i64: 1, 16>}, {pipeline_mode = #tpu.pipeline_mode<synchronous>, transform_indices = @transform_3, window_bounds = array<i64: 4, 16, 128>}, {pipeline_mode = #tpu.pipeline_mode<synchronous>, transform_indices = @transform_4, window_bounds = array<i64: 1, 128>}, {pipeline_mode = #tpu.pipeline_mode<synchronous>, transform_indices = @transform_5, window_bounds = array<i64: 8, 16>}, {pipeline_mode = #tpu.pipeline_mode<synchronous>, transform_indices = @transform_6, window_bounds = array<i64: 1, 16>}, {pipeline_mode = #tpu.pipeline_mode<synchronous>, transform_indices = @transform_7, window_bounds = array<i64: 16, 120>}, {pipeline_mode = #tpu.pipeline_mode<synchronous>, transform_indices = @transform_8, window_bounds = array<i64: 1, 120>}, {pipeline_mode = #tpu.pipeline_mode<synchronous>, transform_indices = @transform_9, window_bounds = array<i64: 32, 96>}, {pipeline_mode = #tpu.pipeline_mode<synchronous>, transform_indices = @transform_10, window_bounds = array<i64: 1, 32>}, {pipeline_mode = #tpu.pipeline_mode<synchronous>, transform_indices = @transform_11, window_bounds = array<i64: 8, 24>}, {pipeline_mode = #tpu.pipeline_mode<synchronous>, transform_indices = @transform_12, window_bounds = array<i64: 1, 8>}, {pipeline_mode = #tpu.pipeline_mode<synchronous>, transform_indices = @transform_13, window_bounds = array<i64: 32, 8>}, {pipeline_mode = #tpu.pipeline_mode<synchronous>, transform_indices = @transform_14, window_bounds = array<i64: 2, 8, 8>}, {pipeline_mode = #tpu.pipeline_mode<synchronous>, transform_indices = @transform_15, window_bounds = array<i64: 1, 8>}, {pipeline_mode = #tpu.pipeline_mode<synchronous>, transform_indices = @transform_16, window_bounds = array<i64: 4, 8>}, {pipeline_mode = #tpu.pipeline_mode<synchronous>, transform_indices = @transform_17, window_bounds = array<i64: 2, 8>}]} {
    %c0 = arith.constant 0 : index
    %c0_0 = arith.constant 0 : index
    %c0_1 = arith.constant 0 : index
    %0 = vector.load %arg1[%c0, %c0_0, %c0_1] : memref<2x16x8xf32, #tpu.memory_space<vmem>>, vector<2x1x8xf32>
    %1 = vector.shape_cast %0 : vector<2x1x8xf32> to vector<2x8xf32>
    %c0_2 = arith.constant 0 : index
    %c0_3 = arith.constant 0 : index
    %c0_4 = arith.constant 0 : index
    %2 = vector.load %arg2[%c0_2, %c0_3, %c0_4] : memref<3x8x16xf32, #tpu.memory_space<vmem>>, vector<1x8x16xf32>
    %3 = vector.shape_cast %2 : vector<1x8x16xf32> to vector<8x16xf32>
    %cst = arith.constant dense<0.000000e+00> : vector<2x16xf32>
    %4 = tpu.matmul %1, %3, %cst {dimension_numbers = #tpu.dot_dimension_numbers<[1], [0], [0], [1], [0, 0, 1, 1], [], []>} : vector<2x8xf32>, vector<8x16xf32>, vector<2x16xf32> -> vector<2x16xf32>
    %c0_5 = arith.constant 0 : index
    %c1 = arith.constant 1 : index
    %c0_6 = arith.constant 0 : index
    %5 = vector.load %arg1[%c0_5, %c1, %c0_6] : memref<2x16x8xf32, #tpu.memory_space<vmem>>, vector<2x1x8xf32>
    %6 = vector.shape_cast %5 : vector<2x1x8xf32> to vector<2x8xf32>
    %c1_7 = arith.constant 1 : index
    %c0_8 = arith.constant 0 : index
    %c0_9 = arith.constant 0 : index
    %7 = vector.load %arg2[%c1_7, %c0_8, %c0_9] : memref<3x8x16xf32, #tpu.memory_space<vmem>>, vector<1x8x16xf32>
    %8 = vector.shape_cast %7 : vector<1x8x16xf32> to vector<8x16xf32>
    %cst_10 = arith.constant dense<0.000000e+00> : vector<2x16xf32>
    %9 = tpu.matmul %6, %8, %cst_10 {dimension_numbers = #tpu.dot_dimension_numbers<[1], [0], [0], [1], [0, 0, 1, 1], [], []>} : vector<2x8xf32>, vector<8x16xf32>, vector<2x16xf32> -> vector<2x16xf32>
    %10 = arith.addf %4, %9 : vector<2x16xf32>
    %c0_11 = arith.constant 0 : index
    %c2 = arith.constant 2 : index
    %c0_12 = arith.constant 0 : index
    %11 = vector.load %arg1[%c0_11, %c2, %c0_12] : memref<2x16x8xf32, #tpu.memory_space<vmem>>, vector<2x1x8xf32>
    %12 = vector.shape_cast %11 : vector<2x1x8xf32> to vector<2x8xf32>
    %c2_13 = arith.constant 2 : index
    %c0_14 = arith.constant 0 : index
    %c0_15 = arith.constant 0 : index
    %13 = vector.load %arg2[%c2_13, %c0_14, %c0_15] : memref<3x8x16xf32, #tpu.memory_space<vmem>>, vector<1x8x16xf32>
    %14 = vector.shape_cast %13 : vector<1x8x16xf32> to vector<8x16xf32>
    %cst_16 = arith.constant dense<0.000000e+00> : vector<2x16xf32>
    %15 = tpu.matmul %12, %14, %cst_16 {dimension_numbers = #tpu.dot_dimension_numbers<[1], [0], [0], [1], [0, 0, 1, 1], [], []>} : vector<2x8xf32>, vector<8x16xf32>, vector<2x16xf32> -> vector<2x16xf32>
    %16 = arith.addf %10, %15 : vector<2x16xf32>
    %c0_17 = arith.constant 0 : index
    %c0_18 = arith.constant 0 : index
    %17 = vector.load %arg3[%c0_17, %c0_18] : memref<1x16xf32, #tpu.memory_space<vmem>>, vector<1x16xf32>
    %18 = vector.broadcast %17 : vector<1x16xf32> to vector<2x16xf32>
    %19 = arith.addf %16, %18 : vector<2x16xf32>
    %c0_19 = arith.constant 0 : index
    %c0_20 = arith.constant 0 : index
    %c0_21 = arith.constant 0 : index
    %20 = vector.load %arg4[%c0_19, %c0_20, %c0_21] : memref<4x16x128xf32, #tpu.memory_space<vmem>>, vector<1x16x128xf32>
    %21 = vector.shape_cast %20 : vector<1x16x128xf32> to vector<16x128xf32>
    %cst_22 = arith.constant dense<0.000000e+00> : vector<2x128xf32>
    %22 = tpu.matmul %19, %21, %cst_22 {dimension_numbers = #tpu.dot_dimension_numbers<[1], [0], [0], [1], [0, 0, 1, 1], [], []>} : vector<2x16xf32>, vector<16x128xf32>, vector<2x128xf32> -> vector<2x128xf32>
    %c0_23 = arith.constant 0 : index
    %c4 = arith.constant 4 : index
    %c0_24 = arith.constant 0 : index
    %23 = vector.load %arg1[%c0_23, %c4, %c0_24] : memref<2x16x8xf32, #tpu.memory_space<vmem>>, vector<2x1x8xf32>
    %24 = vector.shape_cast %23 : vector<2x1x8xf32> to vector<2x8xf32>
    %c0_25 = arith.constant 0 : index
    %c0_26 = arith.constant 0 : index
    %c0_27 = arith.constant 0 : index
    %25 = vector.load %arg2[%c0_25, %c0_26, %c0_27] : memref<3x8x16xf32, #tpu.memory_space<vmem>>, vector<1x8x16xf32>
    %26 = vector.shape_cast %25 : vector<1x8x16xf32> to vector<8x16xf32>
    %cst_28 = arith.constant dense<0.000000e+00> : vector<2x16xf32>
    %27 = tpu.matmul %24, %26, %cst_28 {dimension_numbers = #tpu.dot_dimension_numbers<[1], [0], [0], [1], [0, 0, 1, 1], [], []>} : vector<2x8xf32>, vector<8x16xf32>, vector<2x16xf32> -> vector<2x16xf32>
    %c0_29 = arith.constant 0 : index
    %c5 = arith.constant 5 : index
    %c0_30 = arith.constant 0 : index
    %28 = vector.load %arg1[%c0_29, %c5, %c0_30] : memref<2x16x8xf32, #tpu.memory_space<vmem>>, vector<2x1x8xf32>
    %29 = vector.shape_cast %28 : vector<2x1x8xf32> to vector<2x8xf32>
    %c1_31 = arith.constant 1 : index
    %c0_32 = arith.constant 0 : index
    %c0_33 = arith.constant 0 : index
    %30 = vector.load %arg2[%c1_31, %c0_32, %c0_33] : memref<3x8x16xf32, #tpu.memory_space<vmem>>, vector<1x8x16xf32>
    %31 = vector.shape_cast %30 : vector<1x8x16xf32> to vector<8x16xf32>
    %cst_34 = arith.constant dense<0.000000e+00> : vector<2x16xf32>
    %32 = tpu.matmul %29, %31, %cst_34 {dimension_numbers = #tpu.dot_dimension_numbers<[1], [0], [0], [1], [0, 0, 1, 1], [], []>} : vector<2x8xf32>, vector<8x16xf32>, vector<2x16xf32> -> vector<2x16xf32>
    %33 = arith.addf %27, %32 : vector<2x16xf32>
    %c0_35 = arith.constant 0 : index
    %c6 = arith.constant 6 : index
    %c0_36 = arith.constant 0 : index
    %34 = vector.load %arg1[%c0_35, %c6, %c0_36] : memref<2x16x8xf32, #tpu.memory_space<vmem>>, vector<2x1x8xf32>
    %35 = vector.shape_cast %34 : vector<2x1x8xf32> to vector<2x8xf32>
    %c2_37 = arith.constant 2 : index
    %c0_38 = arith.constant 0 : index
    %c0_39 = arith.constant 0 : index
    %36 = vector.load %arg2[%c2_37, %c0_38, %c0_39] : memref<3x8x16xf32, #tpu.memory_space<vmem>>, vector<1x8x16xf32>
    %37 = vector.shape_cast %36 : vector<1x8x16xf32> to vector<8x16xf32>
    %cst_40 = arith.constant dense<0.000000e+00> : vector<2x16xf32>
    %38 = tpu.matmul %35, %37, %cst_40 {dimension_numbers = #tpu.dot_dimension_numbers<[1], [0], [0], [1], [0, 0, 1, 1], [], []>} : vector<2x8xf32>, vector<8x16xf32>, vector<2x16xf32> -> vector<2x16xf32>
    %39 = arith.addf %33, %38 : vector<2x16xf32>
    %c0_41 = arith.constant 0 : index
    %c0_42 = arith.constant 0 : index
    %40 = vector.load %arg3[%c0_41, %c0_42] : memref<1x16xf32, #tpu.memory_space<vmem>>, vector<1x16xf32>
    %41 = vector.broadcast %40 : vector<1x16xf32> to vector<2x16xf32>
    %42 = arith.addf %39, %41 : vector<2x16xf32>
    %c1_43 = arith.constant 1 : index
    %c0_44 = arith.constant 0 : index
    %c0_45 = arith.constant 0 : index
    %43 = vector.load %arg4[%c1_43, %c0_44, %c0_45] : memref<4x16x128xf32, #tpu.memory_space<vmem>>, vector<1x16x128xf32>
    %44 = vector.shape_cast %43 : vector<1x16x128xf32> to vector<16x128xf32>
    %cst_46 = arith.constant dense<0.000000e+00> : vector<2x128xf32>
    %45 = tpu.matmul %42, %44, %cst_46 {dimension_numbers = #tpu.dot_dimension_numbers<[1], [0], [0], [1], [0, 0, 1, 1], [], []>} : vector<2x16xf32>, vector<16x128xf32>, vector<2x128xf32> -> vector<2x128xf32>
    %46 = arith.addf %22, %45 : vector<2x128xf32>
    %c0_47 = arith.constant 0 : index
    %c8 = arith.constant 8 : index
    %c0_48 = arith.constant 0 : index
    %47 = vector.load %arg1[%c0_47, %c8, %c0_48] : memref<2x16x8xf32, #tpu.memory_space<vmem>>, vector<2x1x8xf32>
    %48 = vector.shape_cast %47 : vector<2x1x8xf32> to vector<2x8xf32>
    %c0_49 = arith.constant 0 : index
    %c0_50 = arith.constant 0 : index
    %c0_51 = arith.constant 0 : index
    %49 = vector.load %arg2[%c0_49, %c0_50, %c0_51] : memref<3x8x16xf32, #tpu.memory_space<vmem>>, vector<1x8x16xf32>
    %50 = vector.shape_cast %49 : vector<1x8x16xf32> to vector<8x16xf32>
    %cst_52 = arith.constant dense<0.000000e+00> : vector<2x16xf32>
    %51 = tpu.matmul %48, %50, %cst_52 {dimension_numbers = #tpu.dot_dimension_numbers<[1], [0], [0], [1], [0, 0, 1, 1], [], []>} : vector<2x8xf32>, vector<8x16xf32>, vector<2x16xf32> -> vector<2x16xf32>
    %c0_53 = arith.constant 0 : index
    %c9 = arith.constant 9 : index
    %c0_54 = arith.constant 0 : index
    %52 = vector.load %arg1[%c0_53, %c9, %c0_54] : memref<2x16x8xf32, #tpu.memory_space<vmem>>, vector<2x1x8xf32>
    %53 = vector.shape_cast %52 : vector<2x1x8xf32> to vector<2x8xf32>
    %c1_55 = arith.constant 1 : index
    %c0_56 = arith.constant 0 : index
    %c0_57 = arith.constant 0 : index
    %54 = vector.load %arg2[%c1_55, %c0_56, %c0_57] : memref<3x8x16xf32, #tpu.memory_space<vmem>>, vector<1x8x16xf32>
    %55 = vector.shape_cast %54 : vector<1x8x16xf32> to vector<8x16xf32>
    %cst_58 = arith.constant dense<0.000000e+00> : vector<2x16xf32>
    %56 = tpu.matmul %53, %55, %cst_58 {dimension_numbers = #tpu.dot_dimension_numbers<[1], [0], [0], [1], [0, 0, 1, 1], [], []>} : vector<2x8xf32>, vector<8x16xf32>, vector<2x16xf32> -> vector<2x16xf32>
    %57 = arith.addf %51, %56 : vector<2x16xf32>
    %c0_59 = arith.constant 0 : index
    %c10 = arith.constant 10 : index
    %c0_60 = arith.constant 0 : index
    %58 = vector.load %arg1[%c0_59, %c10, %c0_60] : memref<2x16x8xf32, #tpu.memory_space<vmem>>, vector<2x1x8xf32>
    %59 = vector.shape_cast %58 : vector<2x1x8xf32> to vector<2x8xf32>
    %c2_61 = arith.constant 2 : index
    %c0_62 = arith.constant 0 : index
    %c0_63 = arith.constant 0 : index
    %60 = vector.load %arg2[%c2_61, %c0_62, %c0_63] : memref<3x8x16xf32, #tpu.memory_space<vmem>>, vector<1x8x16xf32>
    %61 = vector.shape_cast %60 : vector<1x8x16xf32> to vector<8x16xf32>
    %cst_64 = arith.constant dense<0.000000e+00> : vector<2x16xf32>
    %62 = tpu.matmul %59, %61, %cst_64 {dimension_numbers = #tpu.dot_dimension_numbers<[1], [0], [0], [1], [0, 0, 1, 1], [], []>} : vector<2x8xf32>, vector<8x16xf32>, vector<2x16xf32> -> vector<2x16xf32>
    %63 = arith.addf %57, %62 : vector<2x16xf32>
    %c0_65 = arith.constant 0 : index
    %c0_66 = arith.constant 0 : index
    %64 = vector.load %arg3[%c0_65, %c0_66] : memref<1x16xf32, #tpu.memory_space<vmem>>, vector<1x16xf32>
    %65 = vector.broadcast %64 : vector<1x16xf32> to vector<2x16xf32>
    %66 = arith.addf %63, %65 : vector<2x16xf32>
    %c2_67 = arith.constant 2 : index
    %c0_68 = arith.constant 0 : index
    %c0_69 = arith.constant 0 : index
    %67 = vector.load %arg4[%c2_67, %c0_68, %c0_69] : memref<4x16x128xf32, #tpu.memory_space<vmem>>, vector<1x16x128xf32>
    %68 = vector.shape_cast %67 : vector<1x16x128xf32> to vector<16x128xf32>
    %cst_70 = arith.constant dense<0.000000e+00> : vector<2x128xf32>
    %69 = tpu.matmul %66, %68, %cst_70 {dimension_numbers = #tpu.dot_dimension_numbers<[1], [0], [0], [1], [0, 0, 1, 1], [], []>} : vector<2x16xf32>, vector<16x128xf32>, vector<2x128xf32> -> vector<2x128xf32>
    %70 = arith.addf %46, %69 : vector<2x128xf32>
    %c0_71 = arith.constant 0 : index
    %c12 = arith.constant 12 : index
    %c0_72 = arith.constant 0 : index
    %71 = vector.load %arg1[%c0_71, %c12, %c0_72] : memref<2x16x8xf32, #tpu.memory_space<vmem>>, vector<2x1x8xf32>
    %72 = vector.shape_cast %71 : vector<2x1x8xf32> to vector<2x8xf32>
    %c0_73 = arith.constant 0 : index
    %c0_74 = arith.constant 0 : index
    %c0_75 = arith.constant 0 : index
    %73 = vector.load %arg2[%c0_73, %c0_74, %c0_75] : memref<3x8x16xf32, #tpu.memory_space<vmem>>, vector<1x8x16xf32>
    %74 = vector.shape_cast %73 : vector<1x8x16xf32> to vector<8x16xf32>
    %cst_76 = arith.constant dense<0.000000e+00> : vector<2x16xf32>
    %75 = tpu.matmul %72, %74, %cst_76 {dimension_numbers = #tpu.dot_dimension_numbers<[1], [0], [0], [1], [0, 0, 1, 1], [], []>} : vector<2x8xf32>, vector<8x16xf32>, vector<2x16xf32> -> vector<2x16xf32>
    %c0_77 = arith.constant 0 : index
    %c13 = arith.constant 13 : index
    %c0_78 = arith.constant 0 : index
    %76 = vector.load %arg1[%c0_77, %c13, %c0_78] : memref<2x16x8xf32, #tpu.memory_space<vmem>>, vector<2x1x8xf32>
    %77 = vector.shape_cast %76 : vector<2x1x8xf32> to vector<2x8xf32>
    %c1_79 = arith.constant 1 : index
    %c0_80 = arith.constant 0 : index
    %c0_81 = arith.constant 0 : index
    %78 = vector.load %arg2[%c1_79, %c0_80, %c0_81] : memref<3x8x16xf32, #tpu.memory_space<vmem>>, vector<1x8x16xf32>
    %79 = vector.shape_cast %78 : vector<1x8x16xf32> to vector<8x16xf32>
    %cst_82 = arith.constant dense<0.000000e+00> : vector<2x16xf32>
    %80 = tpu.matmul %77, %79, %cst_82 {dimension_numbers = #tpu.dot_dimension_numbers<[1], [0], [0], [1], [0, 0, 1, 1], [], []>} : vector<2x8xf32>, vector<8x16xf32>, vector<2x16xf32> -> vector<2x16xf32>
    %81 = arith.addf %75, %80 : vector<2x16xf32>
    %c0_83 = arith.constant 0 : index
    %c14 = arith.constant 14 : index
    %c0_84 = arith.constant 0 : index
    %82 = vector.load %arg1[%c0_83, %c14, %c0_84] : memref<2x16x8xf32, #tpu.memory_space<vmem>>, vector<2x1x8xf32>
    %83 = vector.shape_cast %82 : vector<2x1x8xf32> to vector<2x8xf32>
    %c2_85 = arith.constant 2 : index
    %c0_86 = arith.constant 0 : index
    %c0_87 = arith.constant 0 : index
    %84 = vector.load %arg2[%c2_85, %c0_86, %c0_87] : memref<3x8x16xf32, #tpu.memory_space<vmem>>, vector<1x8x16xf32>
    %85 = vector.shape_cast %84 : vector<1x8x16xf32> to vector<8x16xf32>
    %cst_88 = arith.constant dense<0.000000e+00> : vector<2x16xf32>
    %86 = tpu.matmul %83, %85, %cst_88 {dimension_numbers = #tpu.dot_dimension_numbers<[1], [0], [0], [1], [0, 0, 1, 1], [], []>} : vector<2x8xf32>, vector<8x16xf32>, vector<2x16xf32> -> vector<2x16xf32>
    %87 = arith.addf %81, %86 : vector<2x16xf32>
    %c0_89 = arith.constant 0 : index
    %c0_90 = arith.constant 0 : index
    %88 = vector.load %arg3[%c0_89, %c0_90] : memref<1x16xf32, #tpu.memory_space<vmem>>, vector<1x16xf32>
    %89 = vector.broadcast %88 : vector<1x16xf32> to vector<2x16xf32>
    %90 = arith.addf %87, %89 : vector<2x16xf32>
    %c3 = arith.constant 3 : index
    %c0_91 = arith.constant 0 : index
    %c0_92 = arith.constant 0 : index
    %91 = vector.load %arg4[%c3, %c0_91, %c0_92] : memref<4x16x128xf32, #tpu.memory_space<vmem>>, vector<1x16x128xf32>
    %92 = vector.shape_cast %91 : vector<1x16x128xf32> to vector<16x128xf32>
    %cst_93 = arith.constant dense<0.000000e+00> : vector<2x128xf32>
    %93 = tpu.matmul %90, %92, %cst_93 {dimension_numbers = #tpu.dot_dimension_numbers<[1], [0], [0], [1], [0, 0, 1, 1], [], []>} : vector<2x16xf32>, vector<16x128xf32>, vector<2x128xf32> -> vector<2x128xf32>
    %94 = arith.addf %70, %93 : vector<2x128xf32>
    %c0_94 = arith.constant 0 : index
    %c0_95 = arith.constant 0 : index
    %95 = vector.load %arg5[%c0_94, %c0_95] : memref<1x128xf32, #tpu.memory_space<vmem>>, vector<1x128xf32>
    %96 = vector.broadcast %95 : vector<1x128xf32> to vector<2x128xf32>
    %97 = arith.addf %94, %96 : vector<2x128xf32>
    %98 = vector.extract_strided_slice %97 {offsets = [0, 0], sizes = [2, 8], strides = [1, 1]} : vector<2x128xf32> to vector<2x8xf32>
    %c0_96 = arith.constant 0 : index
    %c0_97 = arith.constant 0 : index
    %99 = vector.load %arg19[%c0_96, %c0_97] : memref<32x8xf32, #tpu.memory_space<vmem>>, vector<2x8xf32>
    tpu.vector_store %arg19[%c0_96, %c0_97], %98 {strides = array<i32>} : memref<32x8xf32, #tpu.memory_space<vmem>>, vector<2x8xf32>,
    %100 = vector.extract_strided_slice %97 {offsets = [0, 8], sizes = [2, 8], strides = [1, 1]} : vector<2x128xf32> to vector<2x8xf32>
    %c2_98 = arith.constant 2 : index
    %c0_99 = arith.constant 0 : index
    %101 = vector.load %arg19[%c2_98, %c0_99] : memref<32x8xf32, #tpu.memory_space<vmem>>, vector<2x8xf32>
    tpu.vector_store %arg19[%c2_98, %c0_99], %100 {strides = array<i32>} : memref<32x8xf32, #tpu.memory_space<vmem>>, vector<2x8xf32>,
    %102 = vector.extract_strided_slice %97 {offsets = [0, 16], sizes = [2, 8], strides = [1, 1]} : vector<2x128xf32> to vector<2x8xf32>
    %c4_100 = arith.constant 4 : index
    %c0_101 = arith.constant 0 : index
    %103 = vector.load %arg19[%c4_100, %c0_101] : memref<32x8xf32, #tpu.memory_space<vmem>>, vector<2x8xf32>
    tpu.vector_store %arg19[%c4_100, %c0_101], %102 {strides = array<i32>} : memref<32x8xf32, #tpu.memory_space<vmem>>, vector<2x8xf32>,
    %104 = vector.extract_strided_slice %97 {offsets = [0, 24], sizes = [2, 8], strides = [1, 1]} : vector<2x128xf32> to vector<2x8xf32>
    %c6_102 = arith.constant 6 : index
    %c0_103 = arith.constant 0 : index
    %105 = vector.load %arg19[%c6_102, %c0_103] : memref<32x8xf32, #tpu.memory_space<vmem>>, vector<2x8xf32>
    tpu.vector_store %arg19[%c6_102, %c0_103], %104 {strides = array<i32>} : memref<32x8xf32, #tpu.memory_space<vmem>>, vector<2x8xf32>,
    %106 = vector.extract_strided_slice %97 {offsets = [0, 32], sizes = [2, 8], strides = [1, 1]} : vector<2x128xf32> to vector<2x8xf32>
    %c8_104 = arith.constant 8 : index
    %c0_105 = arith.constant 0 : index
    %107 = vector.load %arg19[%c8_104, %c0_105] : memref<32x8xf32, #tpu.memory_space<vmem>>, vector<2x8xf32>
    tpu.vector_store %arg19[%c8_104, %c0_105], %106 {strides = array<i32>} : memref<32x8xf32, #tpu.memory_space<vmem>>, vector<2x8xf32>,
    %108 = vector.extract_strided_slice %97 {offsets = [0, 40], sizes = [2, 8], strides = [1, 1]} : vector<2x128xf32> to vector<2x8xf32>
    %c10_106 = arith.constant 10 : index
    %c0_107 = arith.constant 0 : index
    %109 = vector.load %arg19[%c10_106, %c0_107] : memref<32x8xf32, #tpu.memory_space<vmem>>, vector<2x8xf32>
    tpu.vector_store %arg19[%c10_106, %c0_107], %108 {strides = array<i32>} : memref<32x8xf32, #tpu.memory_space<vmem>>, vector<2x8xf32>,
    %110 = vector.extract_strided_slice %97 {offsets = [0, 48], sizes = [2, 8], strides = [1, 1]} : vector<2x128xf32> to vector<2x8xf32>
    %c12_108 = arith.constant 12 : index
    %c0_109 = arith.constant 0 : index
    %111 = vector.load %arg19[%c12_108, %c0_109] : memref<32x8xf32, #tpu.memory_space<vmem>>, vector<2x8xf32>
    tpu.vector_store %arg19[%c12_108, %c0_109], %110 {strides = array<i32>} : memref<32x8xf32, #tpu.memory_space<vmem>>, vector<2x8xf32>,
    %112 = vector.extract_strided_slice %97 {offsets = [0, 56], sizes = [2, 8], strides = [1, 1]} : vector<2x128xf32> to vector<2x8xf32>
    %c14_110 = arith.constant 14 : index
    %c0_111 = arith.constant 0 : index
    %113 = vector.load %arg19[%c14_110, %c0_111] : memref<32x8xf32, #tpu.memory_space<vmem>>, vector<2x8xf32>
    tpu.vector_store %arg19[%c14_110, %c0_111], %112 {strides = array<i32>} : memref<32x8xf32, #tpu.memory_space<vmem>>, vector<2x8xf32>,
    %114 = vector.extract_strided_slice %97 {offsets = [0, 64], sizes = [2, 8], strides = [1, 1]} : vector<2x128xf32> to vector<2x8xf32>
    %c16 = arith.constant 16 : index
    %c0_112 = arith.constant 0 : index
    %115 = vector.load %arg19[%c16, %c0_112] : memref<32x8xf32, #tpu.memory_space<vmem>>, vector<2x8xf32>
    tpu.vector_store %arg19[%c16, %c0_112], %114 {strides = array<i32>} : memref<32x8xf32, #tpu.memory_space<vmem>>, vector<2x8xf32>,
    %116 = vector.extract_strided_slice %97 {offsets = [0, 72], sizes = [2, 8], strides = [1, 1]} : vector<2x128xf32> to vector<2x8xf32>
    %c18 = arith.constant 18 : index
    %c0_113 = arith.constant 0 : index
    %117 = vector.load %arg19[%c18, %c0_113] : memref<32x8xf32, #tpu.memory_space<vmem>>, vector<2x8xf32>
    tpu.vector_store %arg19[%c18, %c0_113], %116 {strides = array<i32>} : memref<32x8xf32, #tpu.memory_space<vmem>>, vector<2x8xf32>,
    %118 = vector.extract_strided_slice %97 {offsets = [0, 80], sizes = [2, 8], strides = [1, 1]} : vector<2x128xf32> to vector<2x8xf32>
    %c20 = arith.constant 20 : index
    %c0_114 = arith.constant 0 : index
    %119 = vector.load %arg19[%c20, %c0_114] : memref<32x8xf32, #tpu.memory_space<vmem>>, vector<2x8xf32>
    tpu.vector_store %arg19[%c20, %c0_114], %118 {strides = array<i32>} : memref<32x8xf32, #tpu.memory_space<vmem>>, vector<2x8xf32>,
    %120 = vector.extract_strided_slice %97 {offsets = [0, 88], sizes = [2, 8], strides = [1, 1]} : vector<2x128xf32> to vector<2x8xf32>
    %c22 = arith.constant 22 : index
    %c0_115 = arith.constant 0 : index
    %121 = vector.load %arg19[%c22, %c0_115] : memref<32x8xf32, #tpu.memory_space<vmem>>, vector<2x8xf32>
    tpu.vector_store %arg19[%c22, %c0_115], %120 {strides = array<i32>} : memref<32x8xf32, #tpu.memory_space<vmem>>, vector<2x8xf32>,
    %122 = vector.extract_strided_slice %97 {offsets = [0, 96], sizes = [2, 8], strides = [1, 1]} : vector<2x128xf32> to vector<2x8xf32>
    %c24 = arith.constant 24 : index
    %c0_116 = arith.constant 0 : index
    %123 = vector.load %arg19[%c24, %c0_116] : memref<32x8xf32, #tpu.memory_space<vmem>>, vector<2x8xf32>
    tpu.vector_store %arg19[%c24, %c0_116], %122 {strides = array<i32>} : memref<32x8xf32, #tpu.memory_space<vmem>>, vector<2x8xf32>,
    %124 = vector.extract_strided_slice %97 {offsets = [0, 104], sizes = [2, 8], strides = [1, 1]} : vector<2x128xf32> to vector<2x8xf32>
    %c26 = arith.constant 26 : index
    %c0_117 = arith.constant 0 : index
    %125 = vector.load %arg19[%c26, %c0_117] : memref<32x8xf32, #tpu.memory_space<vmem>>, vector<2x8xf32>
    tpu.vector_store %arg19[%c26, %c0_117], %124 {strides = array<i32>} : memref<32x8xf32, #tpu.memory_space<vmem>>, vector<2x8xf32>,
    %126 = vector.extract_strided_slice %97 {offsets = [0, 112], sizes = [2, 8], strides = [1, 1]} : vector<2x128xf32> to vector<2x8xf32>
    %c28 = arith.constant 28 : index
    %c0_118 = arith.constant 0 : index
    %127 = vector.load %arg19[%c28, %c0_118] : memref<32x8xf32, #tpu.memory_space<vmem>>, vector<2x8xf32>
    tpu.vector_store %arg19[%c28, %c0_118], %126 {strides = array<i32>} : memref<32x8xf32, #tpu.memory_space<vmem>>, vector<2x8xf32>,
    %128 = vector.extract_strided_slice %97 {offsets = [0, 120], sizes = [2, 8], strides = [1, 1]} : vector<2x128xf32> to vector<2x8xf32>
    %c30 = arith.constant 30 : index
    %c0_119 = arith.constant 0 : index
    %129 = vector.load %arg19[%c30, %c0_119] : memref<32x8xf32, #tpu.memory_space<vmem>>, vector<2x8xf32>
    tpu.vector_store %arg19[%c30, %c0_119], %128 {strides = array<i32>} : memref<32x8xf32, #tpu.memory_space<vmem>>, vector<2x8xf32>,
    %c0_120 = arith.constant 0 : index
    %c0_121 = arith.constant 0 : index
    %130 = vector.load %arg19[%c0_120, %c0_121] : memref<32x8xf32, #tpu.memory_space<vmem>>, vector<32x8xf32>
    %c0_122 = arith.constant 0 : index
    %c0_123 = arith.constant 0 : index
    %131 = vector.load %arg6[%c0_122, %c0_123] : memref<8x16xf32, #tpu.memory_space<vmem>>, vector<8x16xf32>
    %cst_124 = arith.constant dense<0.000000e+00> : vector<32x16xf32>
    %132 = tpu.matmul %130, %131, %cst_124 {dimension_numbers = #tpu.dot_dimension_numbers<[1], [0], [0], [1], [0, 0, 1, 1], [], []>} : vector<32x8xf32>, vector<8x16xf32>, vector<32x16xf32> -> vector<32x16xf32>
    %c0_125 = arith.constant 0 : index
    %c0_126 = arith.constant 0 : index
    %133 = vector.load %arg7[%c0_125, %c0_126] : memref<1x16xf32, #tpu.memory_space<vmem>>, vector<1x16xf32>
    %134 = vector.broadcast %133 : vector<1x16xf32> to vector<32x16xf32>
    %135 = arith.addf %132, %134 : vector<32x16xf32>
    %cst_127 = arith.constant 0.000000e+00 : f32
    %136 = vector.broadcast %cst_127 : f32 to vector<32x16xf32>
    %137 = arith.maximumf %135, %136 : vector<32x16xf32>
    %c0_128 = arith.constant 0 : index
    %c0_129 = arith.constant 0 : index
    %138 = vector.load %arg8[%c0_128, %c0_129] : memref<16x120xf32, #tpu.memory_space<vmem>>, vector<16x120xf32>
    %cst_130 = arith.constant dense<0.000000e+00> : vector<32x120xf32>
    %139 = tpu.matmul %137, %138, %cst_130 {dimension_numbers = #tpu.dot_dimension_numbers<[1], [0], [0], [1], [0, 0, 1, 1], [], []>} : vector<32x16xf32>, vector<16x120xf32>, vector<32x120xf32> -> vector<32x120xf32>
    %c0_131 = arith.constant 0 : index
    %c0_132 = arith.constant 0 : index
    %140 = vector.load %arg9[%c0_131, %c0_132] : memref<1x120xf32, #tpu.memory_space<vmem>>, vector<1x120xf32>
    %141 = vector.broadcast %140 : vector<1x120xf32> to vector<32x120xf32>
    %142 = arith.addf %139, %141 : vector<32x120xf32>
    %143 = vector.extract_strided_slice %142 {offsets = [0, 0], sizes = [32, 96], strides = [1, 1]} : vector<32x120xf32> to vector<32x96xf32>
    %144 = vector.extract_strided_slice %142 {offsets = [0, 96], sizes = [32, 24], strides = [1, 1]} : vector<32x120xf32> to vector<32x24xf32>
    %c0_133 = arith.constant 0 : index
    %c0_134 = arith.constant 0 : index
    %145 = vector.load %arg10[%c0_133, %c0_134] : memref<32x96xf32, #tpu.memory_space<vmem>>, vector<32x96xf32>
    %c0_135 = arith.constant 0 : index
    %c0_136 = arith.constant 0 : index
    %146 = vector.load %arg11[%c0_135, %c0_136] : memref<1x32xf32, #tpu.memory_space<vmem>>, vector<1x32xf32>
    %cst_137 = arith.constant 0.000000e+00 : f32
    %147 = vector.broadcast %cst_137 : f32 to vector<2x32xf32>
    %148 = vector.extract_strided_slice %143 {offsets = [0, 0], sizes = [2, 96], strides = [1, 1]} : vector<32x96xf32> to vector<2x96xf32>
    %cst_138 = arith.constant dense<0.000000e+00> : vector<2x96xf32>
    %149 = tpu.matmul %147, %145, %cst_138 {dimension_numbers = #tpu.dot_dimension_numbers<[1], [0], [0], [1], [0, 0, 1, 1], [], []>} : vector<2x32xf32>, vector<32x96xf32>, vector<2x96xf32> -> vector<2x96xf32>
    %150 = vector.extract_strided_slice %148 {offsets = [0, 0], sizes = [2, 32], strides = [1, 1]} : vector<2x96xf32> to vector<2x32xf32>
    %151 = vector.extract_strided_slice %149 {offsets = [0, 0], sizes = [2, 32], strides = [1, 1]} : vector<2x96xf32> to vector<2x32xf32>
    %152 = arith.addf %150, %151 : vector<2x32xf32>
    %153 = arith.negf %152 : vector<2x32xf32>
    %154 = math.exp %153 : vector<2x32xf32>
    %cst_139 = arith.constant 1.000000e+00 : f32
    %155 = vector.broadcast %cst_139 : f32 to vector<2x32xf32>
    %156 = arith.addf %155, %154 : vector<2x32xf32>
    %157 = arith.divf %155, %156 : vector<2x32xf32>
    %158 = vector.extract_strided_slice %148 {offsets = [0, 32], sizes = [2, 32], strides = [1, 1]} : vector<2x96xf32> to vector<2x32xf32>
    %159 = vector.extract_strided_slice %149 {offsets = [0, 32], sizes = [2, 32], strides = [1, 1]} : vector<2x96xf32> to vector<2x32xf32>
    %160 = arith.addf %158, %159 : vector<2x32xf32>
    %161 = arith.negf %160 : vector<2x32xf32>
    %162 = math.exp %161 : vector<2x32xf32>
    %cst_140 = arith.constant 1.000000e+00 : f32
    %163 = vector.broadcast %cst_140 : f32 to vector<2x32xf32>
    %164 = arith.addf %163, %162 : vector<2x32xf32>
    %165 = arith.divf %163, %164 : vector<2x32xf32>
    %166 = vector.extract_strided_slice %148 {offsets = [0, 64], sizes = [2, 32], strides = [1, 1]} : vector<2x96xf32> to vector<2x32xf32>
    %167 = vector.extract_strided_slice %149 {offsets = [0, 64], sizes = [2, 32], strides = [1, 1]} : vector<2x96xf32> to vector<2x32xf32>
    %168 = vector.broadcast %146 : vector<1x32xf32> to vector<2x32xf32>
    %169 = arith.addf %167, %168 : vector<2x32xf32>
    %170 = arith.mulf %157, %169 : vector<2x32xf32>
    %171 = arith.addf %166, %170 : vector<2x32xf32>
    %172 = math.tanh %171 : vector<2x32xf32>
    %cst_141 = arith.constant 1.000000e+00 : f32
    %173 = vector.broadcast %cst_141 : f32 to vector<2x32xf32>
    %174 = arith.subf %173, %165 : vector<2x32xf32>
    %175 = arith.mulf %174, %172 : vector<2x32xf32>
    %176 = arith.mulf %165, %147 : vector<2x32xf32>
    %177 = arith.addf %175, %176 : vector<2x32xf32>
    %178 = vector.extract_strided_slice %143 {offsets = [2, 0], sizes = [2, 96], strides = [1, 1]} : vector<32x96xf32> to vector<2x96xf32>
    %cst_142 = arith.constant dense<0.000000e+00> : vector<2x96xf32>
    %179 = tpu.matmul %177, %145, %cst_142 {dimension_numbers = #tpu.dot_dimension_numbers<[1], [0], [0], [1], [0, 0, 1, 1], [], []>} : vector<2x32xf32>, vector<32x96xf32>, vector<2x96xf32> -> vector<2x96xf32>
    %180 = vector.extract_strided_slice %178 {offsets = [0, 0], sizes = [2, 32], strides = [1, 1]} : vector<2x96xf32> to vector<2x32xf32>
    %181 = vector.extract_strided_slice %179 {offsets = [0, 0], sizes = [2, 32], strides = [1, 1]} : vector<2x96xf32> to vector<2x32xf32>
    %182 = arith.addf %180, %181 : vector<2x32xf32>
    %183 = arith.negf %182 : vector<2x32xf32>
    %184 = math.exp %183 : vector<2x32xf32>
    %cst_143 = arith.constant 1.000000e+00 : f32
    %185 = vector.broadcast %cst_143 : f32 to vector<2x32xf32>
    %186 = arith.addf %185, %184 : vector<2x32xf32>
    %187 = arith.divf %185, %186 : vector<2x32xf32>
    %188 = vector.extract_strided_slice %178 {offsets = [0, 32], sizes = [2, 32], strides = [1, 1]} : vector<2x96xf32> to vector<2x32xf32>
    %189 = vector.extract_strided_slice %179 {offsets = [0, 32], sizes = [2, 32], strides = [1, 1]} : vector<2x96xf32> to vector<2x32xf32>
    %190 = arith.addf %188, %189 : vector<2x32xf32>
    %191 = arith.negf %190 : vector<2x32xf32>
    %192 = math.exp %191 : vector<2x32xf32>
    %cst_144 = arith.constant 1.000000e+00 : f32
    %193 = vector.broadcast %cst_144 : f32 to vector<2x32xf32>
    %194 = arith.addf %193, %192 : vector<2x32xf32>
    %195 = arith.divf %193, %194 : vector<2x32xf32>
    %196 = vector.extract_strided_slice %178 {offsets = [0, 64], sizes = [2, 32], strides = [1, 1]} : vector<2x96xf32> to vector<2x32xf32>
    %197 = vector.extract_strided_slice %179 {offsets = [0, 64], sizes = [2, 32], strides = [1, 1]} : vector<2x96xf32> to vector<2x32xf32>
    %198 = vector.broadcast %146 : vector<1x32xf32> to vector<2x32xf32>
    %199 = arith.addf %197, %198 : vector<2x32xf32>
    %200 = arith.mulf %187, %199 : vector<2x32xf32>
    %201 = arith.addf %196, %200 : vector<2x32xf32>
    %202 = math.tanh %201 : vector<2x32xf32>
    %cst_145 = arith.constant 1.000000e+00 : f32
    %203 = vector.broadcast %cst_145 : f32 to vector<2x32xf32>
    %204 = arith.subf %203, %195 : vector<2x32xf32>
    %205 = arith.mulf %204, %202 : vector<2x32xf32>
    %206 = arith.mulf %195, %177 : vector<2x32xf32>
    %207 = arith.addf %205, %206 : vector<2x32xf32>
    %208 = vector.extract_strided_slice %143 {offsets = [4, 0], sizes = [2, 96], strides = [1, 1]} : vector<32x96xf32> to vector<2x96xf32>
    %cst_146 = arith.constant dense<0.000000e+00> : vector<2x96xf32>
    %209 = tpu.matmul %207, %145, %cst_146 {dimension_numbers = #tpu.dot_dimension_numbers<[1], [0], [0], [1], [0, 0, 1, 1], [], []>} : vector<2x32xf32>, vector<32x96xf32>, vector<2x96xf32> -> vector<2x96xf32>
    %210 = vector.extract_strided_slice %208 {offsets = [0, 0], sizes = [2, 32], strides = [1, 1]} : vector<2x96xf32> to vector<2x32xf32>
    %211 = vector.extract_strided_slice %209 {offsets = [0, 0], sizes = [2, 32], strides = [1, 1]} : vector<2x96xf32> to vector<2x32xf32>
    %212 = arith.addf %210, %211 : vector<2x32xf32>
    %213 = arith.negf %212 : vector<2x32xf32>
    %214 = math.exp %213 : vector<2x32xf32>
    %cst_147 = arith.constant 1.000000e+00 : f32
    %215 = vector.broadcast %cst_147 : f32 to vector<2x32xf32>
    %216 = arith.addf %215, %214 : vector<2x32xf32>
    %217 = arith.divf %215, %216 : vector<2x32xf32>
    %218 = vector.extract_strided_slice %208 {offsets = [0, 32], sizes = [2, 32], strides = [1, 1]} : vector<2x96xf32> to vector<2x32xf32>
    %219 = vector.extract_strided_slice %209 {offsets = [0, 32], sizes = [2, 32], strides = [1, 1]} : vector<2x96xf32> to vector<2x32xf32>
    %220 = arith.addf %218, %219 : vector<2x32xf32>
    %221 = arith.negf %220 : vector<2x32xf32>
    %222 = math.exp %221 : vector<2x32xf32>
    %cst_148 = arith.constant 1.000000e+00 : f32
    %223 = vector.broadcast %cst_148 : f32 to vector<2x32xf32>
    %224 = arith.addf %223, %222 : vector<2x32xf32>
    %225 = arith.divf %223, %224 : vector<2x32xf32>
    %226 = vector.extract_strided_slice %208 {offsets = [0, 64], sizes = [2, 32], strides = [1, 1]} : vector<2x96xf32> to vector<2x32xf32>
    %227 = vector.extract_strided_slice %209 {offsets = [0, 64], sizes = [2, 32], strides = [1, 1]} : vector<2x96xf32> to vector<2x32xf32>
    %228 = vector.broadcast %146 : vector<1x32xf32> to vector<2x32xf32>
    %229 = arith.addf %227, %228 : vector<2x32xf32>
    %230 = arith.mulf %217, %229 : vector<2x32xf32>
    %231 = arith.addf %226, %230 : vector<2x32xf32>
    %232 = math.tanh %231 : vector<2x32xf32>
    %cst_149 = arith.constant 1.000000e+00 : f32
    %233 = vector.broadcast %cst_149 : f32 to vector<2x32xf32>
    %234 = arith.subf %233, %225 : vector<2x32xf32>
    %235 = arith.mulf %234, %232 : vector<2x32xf32>
    %236 = arith.mulf %225, %207 : vector<2x32xf32>
    %237 = arith.addf %235, %236 : vector<2x32xf32>
    %238 = vector.extract_strided_slice %143 {offsets = [6, 0], sizes = [2, 96], strides = [1, 1]} : vector<32x96xf32> to vector<2x96xf32>
    %cst_150 = arith.constant dense<0.000000e+00> : vector<2x96xf32>
    %239 = tpu.matmul %237, %145, %cst_150 {dimension_numbers = #tpu.dot_dimension_numbers<[1], [0], [0], [1], [0, 0, 1, 1], [], []>} : vector<2x32xf32>, vector<32x96xf32>, vector<2x96xf32> -> vector<2x96xf32>
    %240 = vector.extract_strided_slice %238 {offsets = [0, 0], sizes = [2, 32], strides = [1, 1]} : vector<2x96xf32> to vector<2x32xf32>
    %241 = vector.extract_strided_slice %239 {offsets = [0, 0], sizes = [2, 32], strides = [1, 1]} : vector<2x96xf32> to vector<2x32xf32>
    %242 = arith.addf %240, %241 : vector<2x32xf32>
    %243 = arith.negf %242 : vector<2x32xf32>
    %244 = math.exp %243 : vector<2x32xf32>
    %cst_151 = arith.constant 1.000000e+00 : f32
    %245 = vector.broadcast %cst_151 : f32 to vector<2x32xf32>
    %246 = arith.addf %245, %244 : vector<2x32xf32>
    %247 = arith.divf %245, %246 : vector<2x32xf32>
    %248 = vector.extract_strided_slice %238 {offsets = [0, 32], sizes = [2, 32], strides = [1, 1]} : vector<2x96xf32> to vector<2x32xf32>
    %249 = vector.extract_strided_slice %239 {offsets = [0, 32], sizes = [2, 32], strides = [1, 1]} : vector<2x96xf32> to vector<2x32xf32>
    %250 = arith.addf %248, %249 : vector<2x32xf32>
    %251 = arith.negf %250 : vector<2x32xf32>
    %252 = math.exp %251 : vector<2x32xf32>
    %cst_152 = arith.constant 1.000000e+00 : f32
    %253 = vector.broadcast %cst_152 : f32 to vector<2x32xf32>
    %254 = arith.addf %253, %252 : vector<2x32xf32>
    %255 = arith.divf %253, %254 : vector<2x32xf32>
    %256 = vector.extract_strided_slice %238 {offsets = [0, 64], sizes = [2, 32], strides = [1, 1]} : vector<2x96xf32> to vector<2x32xf32>
    %257 = vector.extract_strided_slice %239 {offsets = [0, 64], sizes = [2, 32], strides = [1, 1]} : vector<2x96xf32> to vector<2x32xf32>
    %258 = vector.broadcast %146 : vector<1x32xf32> to vector<2x32xf32>
    %259 = arith.addf %257, %258 : vector<2x32xf32>
    %260 = arith.mulf %247, %259 : vector<2x32xf32>
    %261 = arith.addf %256, %260 : vector<2x32xf32>
    %262 = math.tanh %261 : vector<2x32xf32>
    %cst_153 = arith.constant 1.000000e+00 : f32
    %263 = vector.broadcast %cst_153 : f32 to vector<2x32xf32>
    %264 = arith.subf %263, %255 : vector<2x32xf32>
    %265 = arith.mulf %264, %262 : vector<2x32xf32>
    %266 = arith.mulf %255, %237 : vector<2x32xf32>
    %267 = arith.addf %265, %266 : vector<2x32xf32>
    %268 = vector.extract_strided_slice %143 {offsets = [8, 0], sizes = [2, 96], strides = [1, 1]} : vector<32x96xf32> to vector<2x96xf32>
    %cst_154 = arith.constant dense<0.000000e+00> : vector<2x96xf32>
    %269 = tpu.matmul %267, %145, %cst_154 {dimension_numbers = #tpu.dot_dimension_numbers<[1], [0], [0], [1], [0, 0, 1, 1], [], []>} : vector<2x32xf32>, vector<32x96xf32>, vector<2x96xf32> -> vector<2x96xf32>
    %270 = vector.extract_strided_slice %268 {offsets = [0, 0], sizes = [2, 32], strides = [1, 1]} : vector<2x96xf32> to vector<2x32xf32>
    %271 = vector.extract_strided_slice %269 {offsets = [0, 0], sizes = [2, 32], strides = [1, 1]} : vector<2x96xf32> to vector<2x32xf32>
    %272 = arith.addf %270, %271 : vector<2x32xf32>
    %273 = arith.negf %272 : vector<2x32xf32>
    %274 = math.exp %273 : vector<2x32xf32>
    %cst_155 = arith.constant 1.000000e+00 : f32
    %275 = vector.broadcast %cst_155 : f32 to vector<2x32xf32>
    %276 = arith.addf %275, %274 : vector<2x32xf32>
    %277 = arith.divf %275, %276 : vector<2x32xf32>
    %278 = vector.extract_strided_slice %268 {offsets = [0, 32], sizes = [2, 32], strides = [1, 1]} : vector<2x96xf32> to vector<2x32xf32>
    %279 = vector.extract_strided_slice %269 {offsets = [0, 32], sizes = [2, 32], strides = [1, 1]} : vector<2x96xf32> to vector<2x32xf32>
    %280 = arith.addf %278, %279 : vector<2x32xf32>
    %281 = arith.negf %280 : vector<2x32xf32>
    %282 = math.exp %281 : vector<2x32xf32>
    %cst_156 = arith.constant 1.000000e+00 : f32
    %283 = vector.broadcast %cst_156 : f32 to vector<2x32xf32>
    %284 = arith.addf %283, %282 : vector<2x32xf32>
    %285 = arith.divf %283, %284 : vector<2x32xf32>
    %286 = vector.extract_strided_slice %268 {offsets = [0, 64], sizes = [2, 32], strides = [1, 1]} : vector<2x96xf32> to vector<2x32xf32>
    %287 = vector.extract_strided_slice %269 {offsets = [0, 64], sizes = [2, 32], strides = [1, 1]} : vector<2x96xf32> to vector<2x32xf32>
    %288 = vector.broadcast %146 : vector<1x32xf32> to vector<2x32xf32>
    %289 = arith.addf %287, %288 : vector<2x32xf32>
    %290 = arith.mulf %277, %289 : vector<2x32xf32>
    %291 = arith.addf %286, %290 : vector<2x32xf32>
    %292 = math.tanh %291 : vector<2x32xf32>
    %cst_157 = arith.constant 1.000000e+00 : f32
    %293 = vector.broadcast %cst_157 : f32 to vector<2x32xf32>
    %294 = arith.subf %293, %285 : vector<2x32xf32>
    %295 = arith.mulf %294, %292 : vector<2x32xf32>
    %296 = arith.mulf %285, %267 : vector<2x32xf32>
    %297 = arith.addf %295, %296 : vector<2x32xf32>
    %298 = vector.extract_strided_slice %143 {offsets = [10, 0], sizes = [2, 96], strides = [1, 1]} : vector<32x96xf32> to vector<2x96xf32>
    %cst_158 = arith.constant dense<0.000000e+00> : vector<2x96xf32>
    %299 = tpu.matmul %297, %145, %cst_158 {dimension_numbers = #tpu.dot_dimension_numbers<[1], [0], [0], [1], [0, 0, 1, 1], [], []>} : vector<2x32xf32>, vector<32x96xf32>, vector<2x96xf32> -> vector<2x96xf32>
    %300 = vector.extract_strided_slice %298 {offsets = [0, 0], sizes = [2, 32], strides = [1, 1]} : vector<2x96xf32> to vector<2x32xf32>
    %301 = vector.extract_strided_slice %299 {offsets = [0, 0], sizes = [2, 32], strides = [1, 1]} : vector<2x96xf32> to vector<2x32xf32>
    %302 = arith.addf %300, %301 : vector<2x32xf32>
    %303 = arith.negf %302 : vector<2x32xf32>
    %304 = math.exp %303 : vector<2x32xf32>
    %cst_159 = arith.constant 1.000000e+00 : f32
    %305 = vector.broadcast %cst_159 : f32 to vector<2x32xf32>
    %306 = arith.addf %305, %304 : vector<2x32xf32>
    %307 = arith.divf %305, %306 : vector<2x32xf32>
    %308 = vector.extract_strided_slice %298 {offsets = [0, 32], sizes = [2, 32], strides = [1, 1]} : vector<2x96xf32> to vector<2x32xf32>
    %309 = vector.extract_strided_slice %299 {offsets = [0, 32], sizes = [2, 32], strides = [1, 1]} : vector<2x96xf32> to vector<2x32xf32>
    %310 = arith.addf %308, %309 : vector<2x32xf32>
    %311 = arith.negf %310 : vector<2x32xf32>
    %312 = math.exp %311 : vector<2x32xf32>
    %cst_160 = arith.constant 1.000000e+00 : f32
    %313 = vector.broadcast %cst_160 : f32 to vector<2x32xf32>
    %314 = arith.addf %313, %312 : vector<2x32xf32>
    %315 = arith.divf %313, %314 : vector<2x32xf32>
    %316 = vector.extract_strided_slice %298 {offsets = [0, 64], sizes = [2, 32], strides = [1, 1]} : vector<2x96xf32> to vector<2x32xf32>
    %317 = vector.extract_strided_slice %299 {offsets = [0, 64], sizes = [2, 32], strides = [1, 1]} : vector<2x96xf32> to vector<2x32xf32>
    %318 = vector.broadcast %146 : vector<1x32xf32> to vector<2x32xf32>
    %319 = arith.addf %317, %318 : vector<2x32xf32>
    %320 = arith.mulf %307, %319 : vector<2x32xf32>
    %321 = arith.addf %316, %320 : vector<2x32xf32>
    %322 = math.tanh %321 : vector<2x32xf32>
    %cst_161 = arith.constant 1.000000e+00 : f32
    %323 = vector.broadcast %cst_161 : f32 to vector<2x32xf32>
    %324 = arith.subf %323, %315 : vector<2x32xf32>
    %325 = arith.mulf %324, %322 : vector<2x32xf32>
    %326 = arith.mulf %315, %297 : vector<2x32xf32>
    %327 = arith.addf %325, %326 : vector<2x32xf32>
    %328 = vector.extract_strided_slice %143 {offsets = [12, 0], sizes = [2, 96], strides = [1, 1]} : vector<32x96xf32> to vector<2x96xf32>
    %cst_162 = arith.constant dense<0.000000e+00> : vector<2x96xf32>
    %329 = tpu.matmul %327, %145, %cst_162 {dimension_numbers = #tpu.dot_dimension_numbers<[1], [0], [0], [1], [0, 0, 1, 1], [], []>} : vector<2x32xf32>, vector<32x96xf32>, vector<2x96xf32> -> vector<2x96xf32>
    %330 = vector.extract_strided_slice %328 {offsets = [0, 0], sizes = [2, 32], strides = [1, 1]} : vector<2x96xf32> to vector<2x32xf32>
    %331 = vector.extract_strided_slice %329 {offsets = [0, 0], sizes = [2, 32], strides = [1, 1]} : vector<2x96xf32> to vector<2x32xf32>
    %332 = arith.addf %330, %331 : vector<2x32xf32>
    %333 = arith.negf %332 : vector<2x32xf32>
    %334 = math.exp %333 : vector<2x32xf32>
    %cst_163 = arith.constant 1.000000e+00 : f32
    %335 = vector.broadcast %cst_163 : f32 to vector<2x32xf32>
    %336 = arith.addf %335, %334 : vector<2x32xf32>
    %337 = arith.divf %335, %336 : vector<2x32xf32>
    %338 = vector.extract_strided_slice %328 {offsets = [0, 32], sizes = [2, 32], strides = [1, 1]} : vector<2x96xf32> to vector<2x32xf32>
    %339 = vector.extract_strided_slice %329 {offsets = [0, 32], sizes = [2, 32], strides = [1, 1]} : vector<2x96xf32> to vector<2x32xf32>
    %340 = arith.addf %338, %339 : vector<2x32xf32>
    %341 = arith.negf %340 : vector<2x32xf32>
    %342 = math.exp %341 : vector<2x32xf32>
    %cst_164 = arith.constant 1.000000e+00 : f32
    %343 = vector.broadcast %cst_164 : f32 to vector<2x32xf32>
    %344 = arith.addf %343, %342 : vector<2x32xf32>
    %345 = arith.divf %343, %344 : vector<2x32xf32>
    %346 = vector.extract_strided_slice %328 {offsets = [0, 64], sizes = [2, 32], strides = [1, 1]} : vector<2x96xf32> to vector<2x32xf32>
    %347 = vector.extract_strided_slice %329 {offsets = [0, 64], sizes = [2, 32], strides = [1, 1]} : vector<2x96xf32> to vector<2x32xf32>
    %348 = vector.broadcast %146 : vector<1x32xf32> to vector<2x32xf32>
    %349 = arith.addf %347, %348 : vector<2x32xf32>
    %350 = arith.mulf %337, %349 : vector<2x32xf32>
    %351 = arith.addf %346, %350 : vector<2x32xf32>
    %352 = math.tanh %351 : vector<2x32xf32>
    %cst_165 = arith.constant 1.000000e+00 : f32
    %353 = vector.broadcast %cst_165 : f32 to vector<2x32xf32>
    %354 = arith.subf %353, %345 : vector<2x32xf32>
    %355 = arith.mulf %354, %352 : vector<2x32xf32>
    %356 = arith.mulf %345, %327 : vector<2x32xf32>
    %357 = arith.addf %355, %356 : vector<2x32xf32>
    %358 = vector.extract_strided_slice %143 {offsets = [14, 0], sizes = [2, 96], strides = [1, 1]} : vector<32x96xf32> to vector<2x96xf32>
    %cst_166 = arith.constant dense<0.000000e+00> : vector<2x96xf32>
    %359 = tpu.matmul %357, %145, %cst_166 {dimension_numbers = #tpu.dot_dimension_numbers<[1], [0], [0], [1], [0, 0, 1, 1], [], []>} : vector<2x32xf32>, vector<32x96xf32>, vector<2x96xf32> -> vector<2x96xf32>
    %360 = vector.extract_strided_slice %358 {offsets = [0, 0], sizes = [2, 32], strides = [1, 1]} : vector<2x96xf32> to vector<2x32xf32>
    %361 = vector.extract_strided_slice %359 {offsets = [0, 0], sizes = [2, 32], strides = [1, 1]} : vector<2x96xf32> to vector<2x32xf32>
    %362 = arith.addf %360, %361 : vector<2x32xf32>
    %363 = arith.negf %362 : vector<2x32xf32>
    %364 = math.exp %363 : vector<2x32xf32>
    %cst_167 = arith.constant 1.000000e+00 : f32
    %365 = vector.broadcast %cst_167 : f32 to vector<2x32xf32>
    %366 = arith.addf %365, %364 : vector<2x32xf32>
    %367 = arith.divf %365, %366 : vector<2x32xf32>
    %368 = vector.extract_strided_slice %358 {offsets = [0, 32], sizes = [2, 32], strides = [1, 1]} : vector<2x96xf32> to vector<2x32xf32>
    %369 = vector.extract_strided_slice %359 {offsets = [0, 32], sizes = [2, 32], strides = [1, 1]} : vector<2x96xf32> to vector<2x32xf32>
    %370 = arith.addf %368, %369 : vector<2x32xf32>
    %371 = arith.negf %370 : vector<2x32xf32>
    %372 = math.exp %371 : vector<2x32xf32>
    %cst_168 = arith.constant 1.000000e+00 : f32
    %373 = vector.broadcast %cst_168 : f32 to vector<2x32xf32>
    %374 = arith.addf %373, %372 : vector<2x32xf32>
    %375 = arith.divf %373, %374 : vector<2x32xf32>
    %376 = vector.extract_strided_slice %358 {offsets = [0, 64], sizes = [2, 32], strides = [1, 1]} : vector<2x96xf32> to vector<2x32xf32>
    %377 = vector.extract_strided_slice %359 {offsets = [0, 64], sizes = [2, 32], strides = [1, 1]} : vector<2x96xf32> to vector<2x32xf32>
    %378 = vector.broadcast %146 : vector<1x32xf32> to vector<2x32xf32>
    %379 = arith.addf %377, %378 : vector<2x32xf32>
    %380 = arith.mulf %367, %379 : vector<2x32xf32>
    %381 = arith.addf %376, %380 : vector<2x32xf32>
    %382 = math.tanh %381 : vector<2x32xf32>
    %cst_169 = arith.constant 1.000000e+00 : f32
    %383 = vector.broadcast %cst_169 : f32 to vector<2x32xf32>
    %384 = arith.subf %383, %375 : vector<2x32xf32>
    %385 = arith.mulf %384, %382 : vector<2x32xf32>
    %386 = arith.mulf %375, %357 : vector<2x32xf32>
    %387 = arith.addf %385, %386 : vector<2x32xf32>
    %388 = vector.extract_strided_slice %143 {offsets = [16, 0], sizes = [2, 96], strides = [1, 1]} : vector<32x96xf32> to vector<2x96xf32>
    %cst_170 = arith.constant dense<0.000000e+00> : vector<2x96xf32>
    %389 = tpu.matmul %387, %145, %cst_170 {dimension_numbers = #tpu.dot_dimension_numbers<[1], [0], [0], [1], [0, 0, 1, 1], [], []>} : vector<2x32xf32>, vector<32x96xf32>, vector<2x96xf32> -> vector<2x96xf32>
    %390 = vector.extract_strided_slice %388 {offsets = [0, 0], sizes = [2, 32], strides = [1, 1]} : vector<2x96xf32> to vector<2x32xf32>
    %391 = vector.extract_strided_slice %389 {offsets = [0, 0], sizes = [2, 32], strides = [1, 1]} : vector<2x96xf32> to vector<2x32xf32>
    %392 = arith.addf %390, %391 : vector<2x32xf32>
    %393 = arith.negf %392 : vector<2x32xf32>
    %394 = math.exp %393 : vector<2x32xf32>
    %cst_171 = arith.constant 1.000000e+00 : f32
    %395 = vector.broadcast %cst_171 : f32 to vector<2x32xf32>
    %396 = arith.addf %395, %394 : vector<2x32xf32>
    %397 = arith.divf %395, %396 : vector<2x32xf32>
    %398 = vector.extract_strided_slice %388 {offsets = [0, 32], sizes = [2, 32], strides = [1, 1]} : vector<2x96xf32> to vector<2x32xf32>
    %399 = vector.extract_strided_slice %389 {offsets = [0, 32], sizes = [2, 32], strides = [1, 1]} : vector<2x96xf32> to vector<2x32xf32>
    %400 = arith.addf %398, %399 : vector<2x32xf32>
    %401 = arith.negf %400 : vector<2x32xf32>
    %402 = math.exp %401 : vector<2x32xf32>
    %cst_172 = arith.constant 1.000000e+00 : f32
    %403 = vector.broadcast %cst_172 : f32 to vector<2x32xf32>
    %404 = arith.addf %403, %402 : vector<2x32xf32>
    %405 = arith.divf %403, %404 : vector<2x32xf32>
    %406 = vector.extract_strided_slice %388 {offsets = [0, 64], sizes = [2, 32], strides = [1, 1]} : vector<2x96xf32> to vector<2x32xf32>
    %407 = vector.extract_strided_slice %389 {offsets = [0, 64], sizes = [2, 32], strides = [1, 1]} : vector<2x96xf32> to vector<2x32xf32>
    %408 = vector.broadcast %146 : vector<1x32xf32> to vector<2x32xf32>
    %409 = arith.addf %407, %408 : vector<2x32xf32>
    %410 = arith.mulf %397, %409 : vector<2x32xf32>
    %411 = arith.addf %406, %410 : vector<2x32xf32>
    %412 = math.tanh %411 : vector<2x32xf32>
    %cst_173 = arith.constant 1.000000e+00 : f32
    %413 = vector.broadcast %cst_173 : f32 to vector<2x32xf32>
    %414 = arith.subf %413, %405 : vector<2x32xf32>
    %415 = arith.mulf %414, %412 : vector<2x32xf32>
    %416 = arith.mulf %405, %387 : vector<2x32xf32>
    %417 = arith.addf %415, %416 : vector<2x32xf32>
    %418 = vector.extract_strided_slice %143 {offsets = [18, 0], sizes = [2, 96], strides = [1, 1]} : vector<32x96xf32> to vector<2x96xf32>
    %cst_174 = arith.constant dense<0.000000e+00> : vector<2x96xf32>
    %419 = tpu.matmul %417, %145, %cst_174 {dimension_numbers = #tpu.dot_dimension_numbers<[1], [0], [0], [1], [0, 0, 1, 1], [], []>} : vector<2x32xf32>, vector<32x96xf32>, vector<2x96xf32> -> vector<2x96xf32>
    %420 = vector.extract_strided_slice %418 {offsets = [0, 0], sizes = [2, 32], strides = [1, 1]} : vector<2x96xf32> to vector<2x32xf32>
    %421 = vector.extract_strided_slice %419 {offsets = [0, 0], sizes = [2, 32], strides = [1, 1]} : vector<2x96xf32> to vector<2x32xf32>
    %422 = arith.addf %420, %421 : vector<2x32xf32>
    %423 = arith.negf %422 : vector<2x32xf32>
    %424 = math.exp %423 : vector<2x32xf32>
    %cst_175 = arith.constant 1.000000e+00 : f32
    %425 = vector.broadcast %cst_175 : f32 to vector<2x32xf32>
    %426 = arith.addf %425, %424 : vector<2x32xf32>
    %427 = arith.divf %425, %426 : vector<2x32xf32>
    %428 = vector.extract_strided_slice %418 {offsets = [0, 32], sizes = [2, 32], strides = [1, 1]} : vector<2x96xf32> to vector<2x32xf32>
    %429 = vector.extract_strided_slice %419 {offsets = [0, 32], sizes = [2, 32], strides = [1, 1]} : vector<2x96xf32> to vector<2x32xf32>
    %430 = arith.addf %428, %429 : vector<2x32xf32>
    %431 = arith.negf %430 : vector<2x32xf32>
    %432 = math.exp %431 : vector<2x32xf32>
    %cst_176 = arith.constant 1.000000e+00 : f32
    %433 = vector.broadcast %cst_176 : f32 to vector<2x32xf32>
    %434 = arith.addf %433, %432 : vector<2x32xf32>
    %435 = arith.divf %433, %434 : vector<2x32xf32>
    %436 = vector.extract_strided_slice %418 {offsets = [0, 64], sizes = [2, 32], strides = [1, 1]} : vector<2x96xf32> to vector<2x32xf32>
    %437 = vector.extract_strided_slice %419 {offsets = [0, 64], sizes = [2, 32], strides = [1, 1]} : vector<2x96xf32> to vector<2x32xf32>
    %438 = vector.broadcast %146 : vector<1x32xf32> to vector<2x32xf32>
    %439 = arith.addf %437, %438 : vector<2x32xf32>
    %440 = arith.mulf %427, %439 : vector<2x32xf32>
    %441 = arith.addf %436, %440 : vector<2x32xf32>
    %442 = math.tanh %441 : vector<2x32xf32>
    %cst_177 = arith.constant 1.000000e+00 : f32
    %443 = vector.broadcast %cst_177 : f32 to vector<2x32xf32>
    %444 = arith.subf %443, %435 : vector<2x32xf32>
    %445 = arith.mulf %444, %442 : vector<2x32xf32>
    %446 = arith.mulf %435, %417 : vector<2x32xf32>
    %447 = arith.addf %445, %446 : vector<2x32xf32>
    %448 = vector.extract_strided_slice %143 {offsets = [20, 0], sizes = [2, 96], strides = [1, 1]} : vector<32x96xf32> to vector<2x96xf32>
    %cst_178 = arith.constant dense<0.000000e+00> : vector<2x96xf32>
    %449 = tpu.matmul %447, %145, %cst_178 {dimension_numbers = #tpu.dot_dimension_numbers<[1], [0], [0], [1], [0, 0, 1, 1], [], []>} : vector<2x32xf32>, vector<32x96xf32>, vector<2x96xf32> -> vector<2x96xf32>
    %450 = vector.extract_strided_slice %448 {offsets = [0, 0], sizes = [2, 32], strides = [1, 1]} : vector<2x96xf32> to vector<2x32xf32>
    %451 = vector.extract_strided_slice %449 {offsets = [0, 0], sizes = [2, 32], strides = [1, 1]} : vector<2x96xf32> to vector<2x32xf32>
    %452 = arith.addf %450, %451 : vector<2x32xf32>
    %453 = arith.negf %452 : vector<2x32xf32>
    %454 = math.exp %453 : vector<2x32xf32>
    %cst_179 = arith.constant 1.000000e+00 : f32
    %455 = vector.broadcast %cst_179 : f32 to vector<2x32xf32>
    %456 = arith.addf %455, %454 : vector<2x32xf32>
    %457 = arith.divf %455, %456 : vector<2x32xf32>
    %458 = vector.extract_strided_slice %448 {offsets = [0, 32], sizes = [2, 32], strides = [1, 1]} : vector<2x96xf32> to vector<2x32xf32>
    %459 = vector.extract_strided_slice %449 {offsets = [0, 32], sizes = [2, 32], strides = [1, 1]} : vector<2x96xf32> to vector<2x32xf32>
    %460 = arith.addf %458, %459 : vector<2x32xf32>
    %461 = arith.negf %460 : vector<2x32xf32>
    %462 = math.exp %461 : vector<2x32xf32>
    %cst_180 = arith.constant 1.000000e+00 : f32
    %463 = vector.broadcast %cst_180 : f32 to vector<2x32xf32>
    %464 = arith.addf %463, %462 : vector<2x32xf32>
    %465 = arith.divf %463, %464 : vector<2x32xf32>
    %466 = vector.extract_strided_slice %448 {offsets = [0, 64], sizes = [2, 32], strides = [1, 1]} : vector<2x96xf32> to vector<2x32xf32>
    %467 = vector.extract_strided_slice %449 {offsets = [0, 64], sizes = [2, 32], strides = [1, 1]} : vector<2x96xf32> to vector<2x32xf32>
    %468 = vector.broadcast %146 : vector<1x32xf32> to vector<2x32xf32>
    %469 = arith.addf %467, %468 : vector<2x32xf32>
    %470 = arith.mulf %457, %469 : vector<2x32xf32>
    %471 = arith.addf %466, %470 : vector<2x32xf32>
    %472 = math.tanh %471 : vector<2x32xf32>
    %cst_181 = arith.constant 1.000000e+00 : f32
    %473 = vector.broadcast %cst_181 : f32 to vector<2x32xf32>
    %474 = arith.subf %473, %465 : vector<2x32xf32>
    %475 = arith.mulf %474, %472 : vector<2x32xf32>
    %476 = arith.mulf %465, %447 : vector<2x32xf32>
    %477 = arith.addf %475, %476 : vector<2x32xf32>
    %478 = vector.extract_strided_slice %143 {offsets = [22, 0], sizes = [2, 96], strides = [1, 1]} : vector<32x96xf32> to vector<2x96xf32>
    %cst_182 = arith.constant dense<0.000000e+00> : vector<2x96xf32>
    %479 = tpu.matmul %477, %145, %cst_182 {dimension_numbers = #tpu.dot_dimension_numbers<[1], [0], [0], [1], [0, 0, 1, 1], [], []>} : vector<2x32xf32>, vector<32x96xf32>, vector<2x96xf32> -> vector<2x96xf32>
    %480 = vector.extract_strided_slice %478 {offsets = [0, 0], sizes = [2, 32], strides = [1, 1]} : vector<2x96xf32> to vector<2x32xf32>
    %481 = vector.extract_strided_slice %479 {offsets = [0, 0], sizes = [2, 32], strides = [1, 1]} : vector<2x96xf32> to vector<2x32xf32>
    %482 = arith.addf %480, %481 : vector<2x32xf32>
    %483 = arith.negf %482 : vector<2x32xf32>
    %484 = math.exp %483 : vector<2x32xf32>
    %cst_183 = arith.constant 1.000000e+00 : f32
    %485 = vector.broadcast %cst_183 : f32 to vector<2x32xf32>
    %486 = arith.addf %485, %484 : vector<2x32xf32>
    %487 = arith.divf %485, %486 : vector<2x32xf32>
    %488 = vector.extract_strided_slice %478 {offsets = [0, 32], sizes = [2, 32], strides = [1, 1]} : vector<2x96xf32> to vector<2x32xf32>
    %489 = vector.extract_strided_slice %479 {offsets = [0, 32], sizes = [2, 32], strides = [1, 1]} : vector<2x96xf32> to vector<2x32xf32>
    %490 = arith.addf %488, %489 : vector<2x32xf32>
    %491 = arith.negf %490 : vector<2x32xf32>
    %492 = math.exp %491 : vector<2x32xf32>
    %cst_184 = arith.constant 1.000000e+00 : f32
    %493 = vector.broadcast %cst_184 : f32 to vector<2x32xf32>
    %494 = arith.addf %493, %492 : vector<2x32xf32>
    %495 = arith.divf %493, %494 : vector<2x32xf32>
    %496 = vector.extract_strided_slice %478 {offsets = [0, 64], sizes = [2, 32], strides = [1, 1]} : vector<2x96xf32> to vector<2x32xf32>
    %497 = vector.extract_strided_slice %479 {offsets = [0, 64], sizes = [2, 32], strides = [1, 1]} : vector<2x96xf32> to vector<2x32xf32>
    %498 = vector.broadcast %146 : vector<1x32xf32> to vector<2x32xf32>
    %499 = arith.addf %497, %498 : vector<2x32xf32>
    %500 = arith.mulf %487, %499 : vector<2x32xf32>
    %501 = arith.addf %496, %500 : vector<2x32xf32>
    %502 = math.tanh %501 : vector<2x32xf32>
    %cst_185 = arith.constant 1.000000e+00 : f32
    %503 = vector.broadcast %cst_185 : f32 to vector<2x32xf32>
    %504 = arith.subf %503, %495 : vector<2x32xf32>
    %505 = arith.mulf %504, %502 : vector<2x32xf32>
    %506 = arith.mulf %495, %477 : vector<2x32xf32>
    %507 = arith.addf %505, %506 : vector<2x32xf32>
    %508 = vector.extract_strided_slice %143 {offsets = [24, 0], sizes = [2, 96], strides = [1, 1]} : vector<32x96xf32> to vector<2x96xf32>
    %cst_186 = arith.constant dense<0.000000e+00> : vector<2x96xf32>
    %509 = tpu.matmul %507, %145, %cst_186 {dimension_numbers = #tpu.dot_dimension_numbers<[1], [0], [0], [1], [0, 0, 1, 1], [], []>} : vector<2x32xf32>, vector<32x96xf32>, vector<2x96xf32> -> vector<2x96xf32>
    %510 = vector.extract_strided_slice %508 {offsets = [0, 0], sizes = [2, 32], strides = [1, 1]} : vector<2x96xf32> to vector<2x32xf32>
    %511 = vector.extract_strided_slice %509 {offsets = [0, 0], sizes = [2, 32], strides = [1, 1]} : vector<2x96xf32> to vector<2x32xf32>
    %512 = arith.addf %510, %511 : vector<2x32xf32>
    %513 = arith.negf %512 : vector<2x32xf32>
    %514 = math.exp %513 : vector<2x32xf32>
    %cst_187 = arith.constant 1.000000e+00 : f32
    %515 = vector.broadcast %cst_187 : f32 to vector<2x32xf32>
    %516 = arith.addf %515, %514 : vector<2x32xf32>
    %517 = arith.divf %515, %516 : vector<2x32xf32>
    %518 = vector.extract_strided_slice %508 {offsets = [0, 32], sizes = [2, 32], strides = [1, 1]} : vector<2x96xf32> to vector<2x32xf32>
    %519 = vector.extract_strided_slice %509 {offsets = [0, 32], sizes = [2, 32], strides = [1, 1]} : vector<2x96xf32> to vector<2x32xf32>
    %520 = arith.addf %518, %519 : vector<2x32xf32>
    %521 = arith.negf %520 : vector<2x32xf32>
    %522 = math.exp %521 : vector<2x32xf32>
    %cst_188 = arith.constant 1.000000e+00 : f32
    %523 = vector.broadcast %cst_188 : f32 to vector<2x32xf32>
    %524 = arith.addf %523, %522 : vector<2x32xf32>
    %525 = arith.divf %523, %524 : vector<2x32xf32>
    %526 = vector.extract_strided_slice %508 {offsets = [0, 64], sizes = [2, 32], strides = [1, 1]} : vector<2x96xf32> to vector<2x32xf32>
    %527 = vector.extract_strided_slice %509 {offsets = [0, 64], sizes = [2, 32], strides = [1, 1]} : vector<2x96xf32> to vector<2x32xf32>
    %528 = vector.broadcast %146 : vector<1x32xf32> to vector<2x32xf32>
    %529 = arith.addf %527, %528 : vector<2x32xf32>
    %530 = arith.mulf %517, %529 : vector<2x32xf32>
    %531 = arith.addf %526, %530 : vector<2x32xf32>
    %532 = math.tanh %531 : vector<2x32xf32>
    %cst_189 = arith.constant 1.000000e+00 : f32
    %533 = vector.broadcast %cst_189 : f32 to vector<2x32xf32>
    %534 = arith.subf %533, %525 : vector<2x32xf32>
    %535 = arith.mulf %534, %532 : vector<2x32xf32>
    %536 = arith.mulf %525, %507 : vector<2x32xf32>
    %537 = arith.addf %535, %536 : vector<2x32xf32>
    %538 = vector.extract_strided_slice %143 {offsets = [26, 0], sizes = [2, 96], strides = [1, 1]} : vector<32x96xf32> to vector<2x96xf32>
    %cst_190 = arith.constant dense<0.000000e+00> : vector<2x96xf32>
    %539 = tpu.matmul %537, %145, %cst_190 {dimension_numbers = #tpu.dot_dimension_numbers<[1], [0], [0], [1], [0, 0, 1, 1], [], []>} : vector<2x32xf32>, vector<32x96xf32>, vector<2x96xf32> -> vector<2x96xf32>
    %540 = vector.extract_strided_slice %538 {offsets = [0, 0], sizes = [2, 32], strides = [1, 1]} : vector<2x96xf32> to vector<2x32xf32>
    %541 = vector.extract_strided_slice %539 {offsets = [0, 0], sizes = [2, 32], strides = [1, 1]} : vector<2x96xf32> to vector<2x32xf32>
    %542 = arith.addf %540, %541 : vector<2x32xf32>
    %543 = arith.negf %542 : vector<2x32xf32>
    %544 = math.exp %543 : vector<2x32xf32>
    %cst_191 = arith.constant 1.000000e+00 : f32
    %545 = vector.broadcast %cst_191 : f32 to vector<2x32xf32>
    %546 = arith.addf %545, %544 : vector<2x32xf32>
    %547 = arith.divf %545, %546 : vector<2x32xf32>
    %548 = vector.extract_strided_slice %538 {offsets = [0, 32], sizes = [2, 32], strides = [1, 1]} : vector<2x96xf32> to vector<2x32xf32>
    %549 = vector.extract_strided_slice %539 {offsets = [0, 32], sizes = [2, 32], strides = [1, 1]} : vector<2x96xf32> to vector<2x32xf32>
    %550 = arith.addf %548, %549 : vector<2x32xf32>
    %551 = arith.negf %550 : vector<2x32xf32>
    %552 = math.exp %551 : vector<2x32xf32>
    %cst_192 = arith.constant 1.000000e+00 : f32
    %553 = vector.broadcast %cst_192 : f32 to vector<2x32xf32>
    %554 = arith.addf %553, %552 : vector<2x32xf32>
    %555 = arith.divf %553, %554 : vector<2x32xf32>
    %556 = vector.extract_strided_slice %538 {offsets = [0, 64], sizes = [2, 32], strides = [1, 1]} : vector<2x96xf32> to vector<2x32xf32>
    %557 = vector.extract_strided_slice %539 {offsets = [0, 64], sizes = [2, 32], strides = [1, 1]} : vector<2x96xf32> to vector<2x32xf32>
    %558 = vector.broadcast %146 : vector<1x32xf32> to vector<2x32xf32>
    %559 = arith.addf %557, %558 : vector<2x32xf32>
    %560 = arith.mulf %547, %559 : vector<2x32xf32>
    %561 = arith.addf %556, %560 : vector<2x32xf32>
    %562 = math.tanh %561 : vector<2x32xf32>
    %cst_193 = arith.constant 1.000000e+00 : f32
    %563 = vector.broadcast %cst_193 : f32 to vector<2x32xf32>
    %564 = arith.subf %563, %555 : vector<2x32xf32>
    %565 = arith.mulf %564, %562 : vector<2x32xf32>
    %566 = arith.mulf %555, %537 : vector<2x32xf32>
    %567 = arith.addf %565, %566 : vector<2x32xf32>
    %568 = vector.extract_strided_slice %143 {offsets = [28, 0], sizes = [2, 96], strides = [1, 1]} : vector<32x96xf32> to vector<2x96xf32>
    %cst_194 = arith.constant dense<0.000000e+00> : vector<2x96xf32>
    %569 = tpu.matmul %567, %145, %cst_194 {dimension_numbers = #tpu.dot_dimension_numbers<[1], [0], [0], [1], [0, 0, 1, 1], [], []>} : vector<2x32xf32>, vector<32x96xf32>, vector<2x96xf32> -> vector<2x96xf32>
    %570 = vector.extract_strided_slice %568 {offsets = [0, 0], sizes = [2, 32], strides = [1, 1]} : vector<2x96xf32> to vector<2x32xf32>
    %571 = vector.extract_strided_slice %569 {offsets = [0, 0], sizes = [2, 32], strides = [1, 1]} : vector<2x96xf32> to vector<2x32xf32>
    %572 = arith.addf %570, %571 : vector<2x32xf32>
    %573 = arith.negf %572 : vector<2x32xf32>
    %574 = math.exp %573 : vector<2x32xf32>
    %cst_195 = arith.constant 1.000000e+00 : f32
    %575 = vector.broadcast %cst_195 : f32 to vector<2x32xf32>
    %576 = arith.addf %575, %574 : vector<2x32xf32>
    %577 = arith.divf %575, %576 : vector<2x32xf32>
    %578 = vector.extract_strided_slice %568 {offsets = [0, 32], sizes = [2, 32], strides = [1, 1]} : vector<2x96xf32> to vector<2x32xf32>
    %579 = vector.extract_strided_slice %569 {offsets = [0, 32], sizes = [2, 32], strides = [1, 1]} : vector<2x96xf32> to vector<2x32xf32>
    %580 = arith.addf %578, %579 : vector<2x32xf32>
    %581 = arith.negf %580 : vector<2x32xf32>
    %582 = math.exp %581 : vector<2x32xf32>
    %cst_196 = arith.constant 1.000000e+00 : f32
    %583 = vector.broadcast %cst_196 : f32 to vector<2x32xf32>
    %584 = arith.addf %583, %582 : vector<2x32xf32>
    %585 = arith.divf %583, %584 : vector<2x32xf32>
    %586 = vector.extract_strided_slice %568 {offsets = [0, 64], sizes = [2, 32], strides = [1, 1]} : vector<2x96xf32> to vector<2x32xf32>
    %587 = vector.extract_strided_slice %569 {offsets = [0, 64], sizes = [2, 32], strides = [1, 1]} : vector<2x96xf32> to vector<2x32xf32>
    %588 = vector.broadcast %146 : vector<1x32xf32> to vector<2x32xf32>
    %589 = arith.addf %587, %588 : vector<2x32xf32>
    %590 = arith.mulf %577, %589 : vector<2x32xf32>
    %591 = arith.addf %586, %590 : vector<2x32xf32>
    %592 = math.tanh %591 : vector<2x32xf32>
    %cst_197 = arith.constant 1.000000e+00 : f32
    %593 = vector.broadcast %cst_197 : f32 to vector<2x32xf32>
    %594 = arith.subf %593, %585 : vector<2x32xf32>
    %595 = arith.mulf %594, %592 : vector<2x32xf32>
    %596 = arith.mulf %585, %567 : vector<2x32xf32>
    %597 = arith.addf %595, %596 : vector<2x32xf32>
    %598 = vector.extract_strided_slice %143 {offsets = [30, 0], sizes = [2, 96], strides = [1, 1]} : vector<32x96xf32> to vector<2x96xf32>
    %cst_198 = arith.constant dense<0.000000e+00> : vector<2x96xf32>
    %599 = tpu.matmul %597, %145, %cst_198 {dimension_numbers = #tpu.dot_dimension_numbers<[1], [0], [0], [1], [0, 0, 1, 1], [], []>} : vector<2x32xf32>, vector<32x96xf32>, vector<2x96xf32> -> vector<2x96xf32>
    %600 = vector.extract_strided_slice %598 {offsets = [0, 0], sizes = [2, 32], strides = [1, 1]} : vector<2x96xf32> to vector<2x32xf32>
    %601 = vector.extract_strided_slice %599 {offsets = [0, 0], sizes = [2, 32], strides = [1, 1]} : vector<2x96xf32> to vector<2x32xf32>
    %602 = arith.addf %600, %601 : vector<2x32xf32>
    %603 = arith.negf %602 : vector<2x32xf32>
    %604 = math.exp %603 : vector<2x32xf32>
    %cst_199 = arith.constant 1.000000e+00 : f32
    %605 = vector.broadcast %cst_199 : f32 to vector<2x32xf32>
    %606 = arith.addf %605, %604 : vector<2x32xf32>
    %607 = arith.divf %605, %606 : vector<2x32xf32>
    %608 = vector.extract_strided_slice %598 {offsets = [0, 32], sizes = [2, 32], strides = [1, 1]} : vector<2x96xf32> to vector<2x32xf32>
    %609 = vector.extract_strided_slice %599 {offsets = [0, 32], sizes = [2, 32], strides = [1, 1]} : vector<2x96xf32> to vector<2x32xf32>
    %610 = arith.addf %608, %609 : vector<2x32xf32>
    %611 = arith.negf %610 : vector<2x32xf32>
    %612 = math.exp %611 : vector<2x32xf32>
    %cst_200 = arith.constant 1.000000e+00 : f32
    %613 = vector.broadcast %cst_200 : f32 to vector<2x32xf32>
    %614 = arith.addf %613, %612 : vector<2x32xf32>
    %615 = arith.divf %613, %614 : vector<2x32xf32>
    %616 = vector.extract_strided_slice %598 {offsets = [0, 64], sizes = [2, 32], strides = [1, 1]} : vector<2x96xf32> to vector<2x32xf32>
    %617 = vector.extract_strided_slice %599 {offsets = [0, 64], sizes = [2, 32], strides = [1, 1]} : vector<2x96xf32> to vector<2x32xf32>
    %618 = vector.broadcast %146 : vector<1x32xf32> to vector<2x32xf32>
    %619 = arith.addf %617, %618 : vector<2x32xf32>
    %620 = arith.mulf %607, %619 : vector<2x32xf32>
    %621 = arith.addf %616, %620 : vector<2x32xf32>
    %622 = math.tanh %621 : vector<2x32xf32>
    %cst_201 = arith.constant 1.000000e+00 : f32
    %623 = vector.broadcast %cst_201 : f32 to vector<2x32xf32>
    %624 = arith.subf %623, %615 : vector<2x32xf32>
    %625 = arith.mulf %624, %622 : vector<2x32xf32>
    %626 = arith.mulf %615, %597 : vector<2x32xf32>
    %627 = arith.addf %625, %626 : vector<2x32xf32>
    %c0_202 = arith.constant 0 : index
    %c0_203 = arith.constant 0 : index
    %628 = vector.load %arg12[%c0_202, %c0_203] : memref<8x24xf32, #tpu.memory_space<vmem>>, vector<8x24xf32>
    %c0_204 = arith.constant 0 : index
    %c0_205 = arith.constant 0 : index
    %629 = vector.load %arg13[%c0_204, %c0_205] : memref<1x8xf32, #tpu.memory_space<vmem>>, vector<1x8xf32>
    %cst_206 = arith.constant 0.000000e+00 : f32
    %630 = vector.broadcast %cst_206 : f32 to vector<4x8xf32>
    %631 = vector.extract_strided_slice %144 {offsets = [8, 0], sizes = [4, 24], strides = [1, 1]} : vector<32x24xf32> to vector<4x24xf32>
    %cst_207 = arith.constant dense<0.000000e+00> : vector<4x24xf32>
    %632 = tpu.matmul %630, %628, %cst_207 {dimension_numbers = #tpu.dot_dimension_numbers<[1], [0], [0], [1], [0, 0, 1, 1], [], []>} : vector<4x8xf32>, vector<8x24xf32>, vector<4x24xf32> -> vector<4x24xf32>
    %633 = vector.extract_strided_slice %631 {offsets = [0, 0], sizes = [4, 8], strides = [1, 1]} : vector<4x24xf32> to vector<4x8xf32>
    %634 = vector.extract_strided_slice %632 {offsets = [0, 0], sizes = [4, 8], strides = [1, 1]} : vector<4x24xf32> to vector<4x8xf32>
    %635 = arith.addf %633, %634 : vector<4x8xf32>
    %636 = arith.negf %635 : vector<4x8xf32>
    %637 = math.exp %636 : vector<4x8xf32>
    %cst_208 = arith.constant 1.000000e+00 : f32
    %638 = vector.broadcast %cst_208 : f32 to vector<4x8xf32>
    %639 = arith.addf %638, %637 : vector<4x8xf32>
    %640 = arith.divf %638, %639 : vector<4x8xf32>
    %641 = vector.extract_strided_slice %631 {offsets = [0, 8], sizes = [4, 8], strides = [1, 1]} : vector<4x24xf32> to vector<4x8xf32>
    %642 = vector.extract_strided_slice %632 {offsets = [0, 8], sizes = [4, 8], strides = [1, 1]} : vector<4x24xf32> to vector<4x8xf32>
    %643 = arith.addf %641, %642 : vector<4x8xf32>
    %644 = arith.negf %643 : vector<4x8xf32>
    %645 = math.exp %644 : vector<4x8xf32>
    %cst_209 = arith.constant 1.000000e+00 : f32
    %646 = vector.broadcast %cst_209 : f32 to vector<4x8xf32>
    %647 = arith.addf %646, %645 : vector<4x8xf32>
    %648 = arith.divf %646, %647 : vector<4x8xf32>
    %649 = vector.extract_strided_slice %631 {offsets = [0, 16], sizes = [4, 8], strides = [1, 1]} : vector<4x24xf32> to vector<4x8xf32>
    %650 = vector.extract_strided_slice %632 {offsets = [0, 16], sizes = [4, 8], strides = [1, 1]} : vector<4x24xf32> to vector<4x8xf32>
    %651 = vector.broadcast %629 : vector<1x8xf32> to vector<4x8xf32>
    %652 = arith.addf %650, %651 : vector<4x8xf32>
    %653 = arith.mulf %640, %652 : vector<4x8xf32>
    %654 = arith.addf %649, %653 : vector<4x8xf32>
    %655 = math.tanh %654 : vector<4x8xf32>
    %cst_210 = arith.constant 1.000000e+00 : f32
    %656 = vector.broadcast %cst_210 : f32 to vector<4x8xf32>
    %657 = arith.subf %656, %648 : vector<4x8xf32>
    %658 = arith.mulf %657, %655 : vector<4x8xf32>
    %659 = arith.mulf %648, %630 : vector<4x8xf32>
    %660 = arith.addf %658, %659 : vector<4x8xf32>
    %661 = vector.extract_strided_slice %144 {offsets = [12, 0], sizes = [4, 24], strides = [1, 1]} : vector<32x24xf32> to vector<4x24xf32>
    %cst_211 = arith.constant dense<0.000000e+00> : vector<4x24xf32>
    %662 = tpu.matmul %660, %628, %cst_211 {dimension_numbers = #tpu.dot_dimension_numbers<[1], [0], [0], [1], [0, 0, 1, 1], [], []>} : vector<4x8xf32>, vector<8x24xf32>, vector<4x24xf32> -> vector<4x24xf32>
    %663 = vector.extract_strided_slice %661 {offsets = [0, 0], sizes = [4, 8], strides = [1, 1]} : vector<4x24xf32> to vector<4x8xf32>
    %664 = vector.extract_strided_slice %662 {offsets = [0, 0], sizes = [4, 8], strides = [1, 1]} : vector<4x24xf32> to vector<4x8xf32>
    %665 = arith.addf %663, %664 : vector<4x8xf32>
    %666 = arith.negf %665 : vector<4x8xf32>
    %667 = math.exp %666 : vector<4x8xf32>
    %cst_212 = arith.constant 1.000000e+00 : f32
    %668 = vector.broadcast %cst_212 : f32 to vector<4x8xf32>
    %669 = arith.addf %668, %667 : vector<4x8xf32>
    %670 = arith.divf %668, %669 : vector<4x8xf32>
    %671 = vector.extract_strided_slice %661 {offsets = [0, 8], sizes = [4, 8], strides = [1, 1]} : vector<4x24xf32> to vector<4x8xf32>
    %672 = vector.extract_strided_slice %662 {offsets = [0, 8], sizes = [4, 8], strides = [1, 1]} : vector<4x24xf32> to vector<4x8xf32>
    %673 = arith.addf %671, %672 : vector<4x8xf32>
    %674 = arith.negf %673 : vector<4x8xf32>
    %675 = math.exp %674 : vector<4x8xf32>
    %cst_213 = arith.constant 1.000000e+00 : f32
    %676 = vector.broadcast %cst_213 : f32 to vector<4x8xf32>
    %677 = arith.addf %676, %675 : vector<4x8xf32>
    %678 = arith.divf %676, %677 : vector<4x8xf32>
    %679 = vector.extract_strided_slice %661 {offsets = [0, 16], sizes = [4, 8], strides = [1, 1]} : vector<4x24xf32> to vector<4x8xf32>
    %680 = vector.extract_strided_slice %662 {offsets = [0, 16], sizes = [4, 8], strides = [1, 1]} : vector<4x24xf32> to vector<4x8xf32>
    %681 = vector.broadcast %629 : vector<1x8xf32> to vector<4x8xf32>
    %682 = arith.addf %680, %681 : vector<4x8xf32>
    %683 = arith.mulf %670, %682 : vector<4x8xf32>
    %684 = arith.addf %679, %683 : vector<4x8xf32>
    %685 = math.tanh %684 : vector<4x8xf32>
    %cst_214 = arith.constant 1.000000e+00 : f32
    %686 = vector.broadcast %cst_214 : f32 to vector<4x8xf32>
    %687 = arith.subf %686, %678 : vector<4x8xf32>
    %688 = arith.mulf %687, %685 : vector<4x8xf32>
    %689 = arith.mulf %678, %660 : vector<4x8xf32>
    %690 = arith.addf %688, %689 : vector<4x8xf32>
    %691 = vector.extract_strided_slice %144 {offsets = [16, 0], sizes = [4, 24], strides = [1, 1]} : vector<32x24xf32> to vector<4x24xf32>
    %cst_215 = arith.constant dense<0.000000e+00> : vector<4x24xf32>
    %692 = tpu.matmul %690, %628, %cst_215 {dimension_numbers = #tpu.dot_dimension_numbers<[1], [0], [0], [1], [0, 0, 1, 1], [], []>} : vector<4x8xf32>, vector<8x24xf32>, vector<4x24xf32> -> vector<4x24xf32>
    %693 = vector.extract_strided_slice %691 {offsets = [0, 0], sizes = [4, 8], strides = [1, 1]} : vector<4x24xf32> to vector<4x8xf32>
    %694 = vector.extract_strided_slice %692 {offsets = [0, 0], sizes = [4, 8], strides = [1, 1]} : vector<4x24xf32> to vector<4x8xf32>
    %695 = arith.addf %693, %694 : vector<4x8xf32>
    %696 = arith.negf %695 : vector<4x8xf32>
    %697 = math.exp %696 : vector<4x8xf32>
    %cst_216 = arith.constant 1.000000e+00 : f32
    %698 = vector.broadcast %cst_216 : f32 to vector<4x8xf32>
    %699 = arith.addf %698, %697 : vector<4x8xf32>
    %700 = arith.divf %698, %699 : vector<4x8xf32>
    %701 = vector.extract_strided_slice %691 {offsets = [0, 8], sizes = [4, 8], strides = [1, 1]} : vector<4x24xf32> to vector<4x8xf32>
    %702 = vector.extract_strided_slice %692 {offsets = [0, 8], sizes = [4, 8], strides = [1, 1]} : vector<4x24xf32> to vector<4x8xf32>
    %703 = arith.addf %701, %702 : vector<4x8xf32>
    %704 = arith.negf %703 : vector<4x8xf32>
    %705 = math.exp %704 : vector<4x8xf32>
    %cst_217 = arith.constant 1.000000e+00 : f32
    %706 = vector.broadcast %cst_217 : f32 to vector<4x8xf32>
    %707 = arith.addf %706, %705 : vector<4x8xf32>
    %708 = arith.divf %706, %707 : vector<4x8xf32>
    %709 = vector.extract_strided_slice %691 {offsets = [0, 16], sizes = [4, 8], strides = [1, 1]} : vector<4x24xf32> to vector<4x8xf32>
    %710 = vector.extract_strided_slice %692 {offsets = [0, 16], sizes = [4, 8], strides = [1, 1]} : vector<4x24xf32> to vector<4x8xf32>
    %711 = vector.broadcast %629 : vector<1x8xf32> to vector<4x8xf32>
    %712 = arith.addf %710, %711 : vector<4x8xf32>
    %713 = arith.mulf %700, %712 : vector<4x8xf32>
    %714 = arith.addf %709, %713 : vector<4x8xf32>
    %715 = math.tanh %714 : vector<4x8xf32>
    %cst_218 = arith.constant 1.000000e+00 : f32
    %716 = vector.broadcast %cst_218 : f32 to vector<4x8xf32>
    %717 = arith.subf %716, %708 : vector<4x8xf32>
    %718 = arith.mulf %717, %715 : vector<4x8xf32>
    %719 = arith.mulf %708, %690 : vector<4x8xf32>
    %720 = arith.addf %718, %719 : vector<4x8xf32>
    %721 = vector.extract_strided_slice %144 {offsets = [20, 0], sizes = [4, 24], strides = [1, 1]} : vector<32x24xf32> to vector<4x24xf32>
    %cst_219 = arith.constant dense<0.000000e+00> : vector<4x24xf32>
    %722 = tpu.matmul %720, %628, %cst_219 {dimension_numbers = #tpu.dot_dimension_numbers<[1], [0], [0], [1], [0, 0, 1, 1], [], []>} : vector<4x8xf32>, vector<8x24xf32>, vector<4x24xf32> -> vector<4x24xf32>
    %723 = vector.extract_strided_slice %721 {offsets = [0, 0], sizes = [4, 8], strides = [1, 1]} : vector<4x24xf32> to vector<4x8xf32>
    %724 = vector.extract_strided_slice %722 {offsets = [0, 0], sizes = [4, 8], strides = [1, 1]} : vector<4x24xf32> to vector<4x8xf32>
    %725 = arith.addf %723, %724 : vector<4x8xf32>
    %726 = arith.negf %725 : vector<4x8xf32>
    %727 = math.exp %726 : vector<4x8xf32>
    %cst_220 = arith.constant 1.000000e+00 : f32
    %728 = vector.broadcast %cst_220 : f32 to vector<4x8xf32>
    %729 = arith.addf %728, %727 : vector<4x8xf32>
    %730 = arith.divf %728, %729 : vector<4x8xf32>
    %731 = vector.extract_strided_slice %721 {offsets = [0, 8], sizes = [4, 8], strides = [1, 1]} : vector<4x24xf32> to vector<4x8xf32>
    %732 = vector.extract_strided_slice %722 {offsets = [0, 8], sizes = [4, 8], strides = [1, 1]} : vector<4x24xf32> to vector<4x8xf32>
    %733 = arith.addf %731, %732 : vector<4x8xf32>
    %734 = arith.negf %733 : vector<4x8xf32>
    %735 = math.exp %734 : vector<4x8xf32>
    %cst_221 = arith.constant 1.000000e+00 : f32
    %736 = vector.broadcast %cst_221 : f32 to vector<4x8xf32>
    %737 = arith.addf %736, %735 : vector<4x8xf32>
    %738 = arith.divf %736, %737 : vector<4x8xf32>
    %739 = vector.extract_strided_slice %721 {offsets = [0, 16], sizes = [4, 8], strides = [1, 1]} : vector<4x24xf32> to vector<4x8xf32>
    %740 = vector.extract_strided_slice %722 {offsets = [0, 16], sizes = [4, 8], strides = [1, 1]} : vector<4x24xf32> to vector<4x8xf32>
    %741 = vector.broadcast %629 : vector<1x8xf32> to vector<4x8xf32>
    %742 = arith.addf %740, %741 : vector<4x8xf32>
    %743 = arith.mulf %730, %742 : vector<4x8xf32>
    %744 = arith.addf %739, %743 : vector<4x8xf32>
    %745 = math.tanh %744 : vector<4x8xf32>
    %cst_222 = arith.constant 1.000000e+00 : f32
    %746 = vector.broadcast %cst_222 : f32 to vector<4x8xf32>
    %747 = arith.subf %746, %738 : vector<4x8xf32>
    %748 = arith.mulf %747, %745 : vector<4x8xf32>
    %749 = arith.mulf %738, %720 : vector<4x8xf32>
    %750 = arith.addf %748, %749 : vector<4x8xf32>
    %751 = vector.extract_strided_slice %144 {offsets = [24, 0], sizes = [4, 24], strides = [1, 1]} : vector<32x24xf32> to vector<4x24xf32>
    %cst_223 = arith.constant dense<0.000000e+00> : vector<4x24xf32>
    %752 = tpu.matmul %750, %628, %cst_223 {dimension_numbers = #tpu.dot_dimension_numbers<[1], [0], [0], [1], [0, 0, 1, 1], [], []>} : vector<4x8xf32>, vector<8x24xf32>, vector<4x24xf32> -> vector<4x24xf32>
    %753 = vector.extract_strided_slice %751 {offsets = [0, 0], sizes = [4, 8], strides = [1, 1]} : vector<4x24xf32> to vector<4x8xf32>
    %754 = vector.extract_strided_slice %752 {offsets = [0, 0], sizes = [4, 8], strides = [1, 1]} : vector<4x24xf32> to vector<4x8xf32>
    %755 = arith.addf %753, %754 : vector<4x8xf32>
    %756 = arith.negf %755 : vector<4x8xf32>
    %757 = math.exp %756 : vector<4x8xf32>
    %cst_224 = arith.constant 1.000000e+00 : f32
    %758 = vector.broadcast %cst_224 : f32 to vector<4x8xf32>
    %759 = arith.addf %758, %757 : vector<4x8xf32>
    %760 = arith.divf %758, %759 : vector<4x8xf32>
    %761 = vector.extract_strided_slice %751 {offsets = [0, 8], sizes = [4, 8], strides = [1, 1]} : vector<4x24xf32> to vector<4x8xf32>
    %762 = vector.extract_strided_slice %752 {offsets = [0, 8], sizes = [4, 8], strides = [1, 1]} : vector<4x24xf32> to vector<4x8xf32>
    %763 = arith.addf %761, %762 : vector<4x8xf32>
    %764 = arith.negf %763 : vector<4x8xf32>
    %765 = math.exp %764 : vector<4x8xf32>
    %cst_225 = arith.constant 1.000000e+00 : f32
    %766 = vector.broadcast %cst_225 : f32 to vector<4x8xf32>
    %767 = arith.addf %766, %765 : vector<4x8xf32>
    %768 = arith.divf %766, %767 : vector<4x8xf32>
    %769 = vector.extract_strided_slice %751 {offsets = [0, 16], sizes = [4, 8], strides = [1, 1]} : vector<4x24xf32> to vector<4x8xf32>
    %770 = vector.extract_strided_slice %752 {offsets = [0, 16], sizes = [4, 8], strides = [1, 1]} : vector<4x24xf32> to vector<4x8xf32>
    %771 = vector.broadcast %629 : vector<1x8xf32> to vector<4x8xf32>
    %772 = arith.addf %770, %771 : vector<4x8xf32>
    %773 = arith.mulf %760, %772 : vector<4x8xf32>
    %774 = arith.addf %769, %773 : vector<4x8xf32>
    %775 = math.tanh %774 : vector<4x8xf32>
    %cst_226 = arith.constant 1.000000e+00 : f32
    %776 = vector.broadcast %cst_226 : f32 to vector<4x8xf32>
    %777 = arith.subf %776, %768 : vector<4x8xf32>
    %778 = arith.mulf %777, %775 : vector<4x8xf32>
    %779 = arith.mulf %768, %750 : vector<4x8xf32>
    %780 = arith.addf %778, %779 : vector<4x8xf32>
    %781 = vector.extract_strided_slice %144 {offsets = [28, 0], sizes = [4, 24], strides = [1, 1]} : vector<32x24xf32> to vector<4x24xf32>
    %cst_227 = arith.constant dense<0.000000e+00> : vector<4x24xf32>
    %782 = tpu.matmul %780, %628, %cst_227 {dimension_numbers = #tpu.dot_dimension_numbers<[1], [0], [0], [1], [0, 0, 1, 1], [], []>} : vector<4x8xf32>, vector<8x24xf32>, vector<4x24xf32> -> vector<4x24xf32>
    %783 = vector.extract_strided_slice %781 {offsets = [0, 0], sizes = [4, 8], strides = [1, 1]} : vector<4x24xf32> to vector<4x8xf32>
    %784 = vector.extract_strided_slice %782 {offsets = [0, 0], sizes = [4, 8], strides = [1, 1]} : vector<4x24xf32> to vector<4x8xf32>
    %785 = arith.addf %783, %784 : vector<4x8xf32>
    %786 = arith.negf %785 : vector<4x8xf32>
    %787 = math.exp %786 : vector<4x8xf32>
    %cst_228 = arith.constant 1.000000e+00 : f32
    %788 = vector.broadcast %cst_228 : f32 to vector<4x8xf32>
    %789 = arith.addf %788, %787 : vector<4x8xf32>
    %790 = arith.divf %788, %789 : vector<4x8xf32>
    %791 = vector.extract_strided_slice %781 {offsets = [0, 8], sizes = [4, 8], strides = [1, 1]} : vector<4x24xf32> to vector<4x8xf32>
    %792 = vector.extract_strided_slice %782 {offsets = [0, 8], sizes = [4, 8], strides = [1, 1]} : vector<4x24xf32> to vector<4x8xf32>
    %793 = arith.addf %791, %792 : vector<4x8xf32>
    %794 = arith.negf %793 : vector<4x8xf32>
    %795 = math.exp %794 : vector<4x8xf32>
    %cst_229 = arith.constant 1.000000e+00 : f32
    %796 = vector.broadcast %cst_229 : f32 to vector<4x8xf32>
    %797 = arith.addf %796, %795 : vector<4x8xf32>
    %798 = arith.divf %796, %797 : vector<4x8xf32>
    %799 = vector.extract_strided_slice %781 {offsets = [0, 16], sizes = [4, 8], strides = [1, 1]} : vector<4x24xf32> to vector<4x8xf32>
    %800 = vector.extract_strided_slice %782 {offsets = [0, 16], sizes = [4, 8], strides = [1, 1]} : vector<4x24xf32> to vector<4x8xf32>
    %801 = vector.broadcast %629 : vector<1x8xf32> to vector<4x8xf32>
    %802 = arith.addf %800, %801 : vector<4x8xf32>
    %803 = arith.mulf %790, %802 : vector<4x8xf32>
    %804 = arith.addf %799, %803 : vector<4x8xf32>
    %805 = math.tanh %804 : vector<4x8xf32>
    %cst_230 = arith.constant 1.000000e+00 : f32
    %806 = vector.broadcast %cst_230 : f32 to vector<4x8xf32>
    %807 = arith.subf %806, %798 : vector<4x8xf32>
    %808 = arith.mulf %807, %805 : vector<4x8xf32>
    %809 = arith.mulf %798, %780 : vector<4x8xf32>
    %810 = arith.addf %808, %809 : vector<4x8xf32>
    %c0_231 = arith.constant 0 : index
    %c0_232 = arith.constant 0 : index
    %811 = vector.load %arg14[%c0_231, %c0_232] : memref<32x8xf32, #tpu.memory_space<vmem>>, vector<32x8xf32>
    %cst_233 = arith.constant dense<0.000000e+00> : vector<2x8xf32>
    %812 = tpu.matmul %627, %811, %cst_233 {dimension_numbers = #tpu.dot_dimension_numbers<[1], [0], [0], [1], [0, 0, 1, 1], [], []>} : vector<2x32xf32>, vector<32x8xf32>, vector<2x8xf32> -> vector<2x8xf32>
    %c0_234 = arith.constant 0 : index
    %c0_235 = arith.constant 0 : index
    %813 = vector.load %arg16[%c0_234, %c0_235] : memref<1x8xf32, #tpu.memory_space<vmem>>, vector<1x8xf32>
    %814 = vector.broadcast %813 : vector<1x8xf32> to vector<2x8xf32>
    %815 = arith.addf %812, %814 : vector<2x8xf32>
    %816 = vector.extract_strided_slice %810 {offsets = [0, 0], sizes = [2, 8], strides = [1, 1]} : vector<4x8xf32> to vector<2x8xf32>
    %c0_236 = arith.constant 0 : index
    %c0_237 = arith.constant 0 : index
    %c0_238 = arith.constant 0 : index
    %817 = vector.load %arg15[%c0_236, %c0_237, %c0_238] : memref<2x8x8xf32, #tpu.memory_space<vmem>>, vector<1x8x8xf32>
    %818 = vector.shape_cast %817 : vector<1x8x8xf32> to vector<8x8xf32>
    %cst_239 = arith.constant dense<0.000000e+00> : vector<2x8xf32>
    %819 = tpu.matmul %816, %818, %cst_239 {dimension_numbers = #tpu.dot_dimension_numbers<[1], [0], [0], [1], [0, 0, 1, 1], [], []>} : vector<2x8xf32>, vector<8x8xf32>, vector<2x8xf32> -> vector<2x8xf32>
    %820 = arith.addf %815, %819 : vector<2x8xf32>
    %821 = vector.extract_strided_slice %810 {offsets = [2, 0], sizes = [2, 8], strides = [1, 1]} : vector<4x8xf32> to vector<2x8xf32>
    %c1_240 = arith.constant 1 : index
    %c0_241 = arith.constant 0 : index
    %c0_242 = arith.constant 0 : index
    %822 = vector.load %arg15[%c1_240, %c0_241, %c0_242] : memref<2x8x8xf32, #tpu.memory_space<vmem>>, vector<1x8x8xf32>
    %823 = vector.shape_cast %822 : vector<1x8x8xf32> to vector<8x8xf32>
    %cst_243 = arith.constant dense<0.000000e+00> : vector<2x8xf32>
    %824 = tpu.matmul %821, %823, %cst_243 {dimension_numbers = #tpu.dot_dimension_numbers<[1], [0], [0], [1], [0, 0, 1, 1], [], []>} : vector<2x8xf32>, vector<8x8xf32>, vector<2x8xf32> -> vector<2x8xf32>
    %825 = arith.addf %820, %824 : vector<2x8xf32>
    %c0_244 = arith.constant 0 : index
    %c0_245 = arith.constant 0 : index
    %826 = vector.load %arg17[%c0_244, %c0_245] : memref<4x8xf32, #tpu.memory_space<vmem>>, vector<4x8xf32>
    %827 = vector.extract_strided_slice %97 {offsets = [0, 96], sizes = [2, 8], strides = [1, 1]} : vector<2x128xf32> to vector<2x8xf32>
    %828 = vector.extract_strided_slice %826 {offsets = [0, 0], sizes = [1, 8], strides = [1, 1]} : vector<4x8xf32> to vector<1x8xf32>
    %829 = vector.broadcast %828 : vector<1x8xf32> to vector<2x8xf32>
    %830 = arith.mulf %827, %829 : vector<2x8xf32>
    %831 = arith.addf %825, %830 : vector<2x8xf32>
    %832 = vector.extract_strided_slice %97 {offsets = [0, 104], sizes = [2, 8], strides = [1, 1]} : vector<2x128xf32> to vector<2x8xf32>
    %833 = vector.extract_strided_slice %826 {offsets = [1, 0], sizes = [1, 8], strides = [1, 1]} : vector<4x8xf32> to vector<1x8xf32>
    %834 = vector.broadcast %833 : vector<1x8xf32> to vector<2x8xf32>
    %835 = arith.mulf %832, %834 : vector<2x8xf32>
    %836 = arith.addf %831, %835 : vector<2x8xf32>
    %837 = vector.extract_strided_slice %97 {offsets = [0, 112], sizes = [2, 8], strides = [1, 1]} : vector<2x128xf32> to vector<2x8xf32>
    %838 = vector.extract_strided_slice %826 {offsets = [2, 0], sizes = [1, 8], strides = [1, 1]} : vector<4x8xf32> to vector<1x8xf32>
    %839 = vector.broadcast %838 : vector<1x8xf32> to vector<2x8xf32>
    %840 = arith.mulf %837, %839 : vector<2x8xf32>
    %841 = arith.addf %836, %840 : vector<2x8xf32>
    %842 = vector.extract_strided_slice %97 {offsets = [0, 120], sizes = [2, 8], strides = [1, 1]} : vector<2x128xf32> to vector<2x8xf32>
    %843 = vector.extract_strided_slice %826 {offsets = [3, 0], sizes = [1, 8], strides = [1, 1]} : vector<4x8xf32> to vector<1x8xf32>
    %844 = vector.broadcast %843 : vector<1x8xf32> to vector<2x8xf32>
    %845 = arith.mulf %842, %844 : vector<2x8xf32>
    %846 = arith.addf %841, %845 : vector<2x8xf32>
    %847 = arith.negf %846 : vector<2x8xf32>
    %848 = math.exp %847 : vector<2x8xf32>
    %cst_246 = arith.constant 1.000000e+00 : f32
    %849 = vector.broadcast %cst_246 : f32 to vector<2x8xf32>
    %850 = arith.addf %849, %848 : vector<2x8xf32>
    %851 = arith.divf %849, %850 : vector<2x8xf32>
    %c0_247 = arith.constant 0 : index
    %c0_248 = arith.constant 0 : index
    %852 = vector.load %arg18[%c0_247, %c0_248] : memref<2x8xf32, #tpu.memory_space<vmem>>, vector<2x8xf32>
    tpu.vector_store %arg18[%c0_247, %c0_248], %851 {strides = array<i32>} : memref<2x8xf32, #tpu.memory_space<vmem>>, vector<2x8xf32>,
    return
  }
  func.func @transform_0(%arg0: i32) -> (i32, i32, i32) {
    %c0_i32 = arith.constant 0 : i32
    %c0_i32_0 = arith.constant 0 : i32
    %c0_i32_1 = arith.constant 0 : i32
    %c0_i32_2 = arith.constant 0 : i32
    return %c0_i32, %c0_i32_0, %c0_i32_1 : i32, i32, i32
  }
  func.func @transform_1(%arg0: i32) -> (i32, i32, i32) {
    %c0_i32 = arith.constant 0 : i32
    %c0_i32_0 = arith.constant 0 : i32
    %c0_i32_1 = arith.constant 0 : i32
    %c0_i32_2 = arith.constant 0 : i32
    return %c0_i32, %c0_i32_0, %c0_i32_1 : i32, i32, i32
  }
  func.func @transform_2(%arg0: i32) -> (i32, i32) {
    %c0_i32 = arith.constant 0 : i32
    %c0_i32_0 = arith.constant 0 : i32
    %c0_i32_1 = arith.constant 0 : i32
    return %c0_i32, %c0_i32_0 : i32, i32
  }
  func.func @transform_3(%arg0: i32) -> (i32, i32, i32) {
    %c0_i32 = arith.constant 0 : i32
    %c0_i32_0 = arith.constant 0 : i32
    %c0_i32_1 = arith.constant 0 : i32
    %c0_i32_2 = arith.constant 0 : i32
    return %c0_i32, %c0_i32_0, %c0_i32_1 : i32, i32, i32
  }
  func.func @transform_4(%arg0: i32) -> (i32, i32) {
    %c0_i32 = arith.constant 0 : i32
    %c0_i32_0 = arith.constant 0 : i32
    %c0_i32_1 = arith.constant 0 : i32
    return %c0_i32, %c0_i32_0 : i32, i32
  }
  func.func @transform_5(%arg0: i32) -> (i32, i32) {
    %c0_i32 = arith.constant 0 : i32
    %c0_i32_0 = arith.constant 0 : i32
    %c0_i32_1 = arith.constant 0 : i32
    return %c0_i32, %c0_i32_0 : i32, i32
  }
  func.func @transform_6(%arg0: i32) -> (i32, i32) {
    %c0_i32 = arith.constant 0 : i32
    %c0_i32_0 = arith.constant 0 : i32
    %c0_i32_1 = arith.constant 0 : i32
    return %c0_i32, %c0_i32_0 : i32, i32
  }
  func.func @transform_7(%arg0: i32) -> (i32, i32) {
    %c0_i32 = arith.constant 0 : i32
    %c0_i32_0 = arith.constant 0 : i32
    %c0_i32_1 = arith.constant 0 : i32
    return %c0_i32, %c0_i32_0 : i32, i32
  }
  func.func @transform_8(%arg0: i32) -> (i32, i32) {
    %c0_i32 = arith.constant 0 : i32
    %c0_i32_0 = arith.constant 0 : i32
    %c0_i32_1 = arith.constant 0 : i32
    return %c0_i32, %c0_i32_0 : i32, i32
  }
  func.func @transform_9(%arg0: i32) -> (i32, i32) {
    %c0_i32 = arith.constant 0 : i32
    %c0_i32_0 = arith.constant 0 : i32
    %c0_i32_1 = arith.constant 0 : i32
    return %c0_i32, %c0_i32_0 : i32, i32
  }
  func.func @transform_10(%arg0: i32) -> (i32, i32) {
    %c0_i32 = arith.constant 0 : i32
    %c0_i32_0 = arith.constant 0 : i32
    %c0_i32_1 = arith.constant 0 : i32
    return %c0_i32, %c0_i32_0 : i32, i32
  }
  func.func @transform_11(%arg0: i32) -> (i32, i32) {
    %c0_i32 = arith.constant 0 : i32
    %c0_i32_0 = arith.constant 0 : i32
    %c0_i32_1 = arith.constant 0 : i32
    return %c0_i32, %c0_i32_0 : i32, i32
  }
  func.func @transform_12(%arg0: i32) -> (i32, i32) {
    %c0_i32 = arith.constant 0 : i32
    %c0_i32_0 = arith.constant 0 : i32
    %c0_i32_1 = arith.constant 0 : i32
    return %c0_i32, %c0_i32_0 : i32, i32
  }
  func.func @transform_13(%arg0: i32) -> (i32, i32) {
    %c0_i32 = arith.constant 0 : i32
    %c0_i32_0 = arith.constant 0 : i32
    %c0_i32_1 = arith.constant 0 : i32
    return %c0_i32, %c0_i32_0 : i32, i32
  }
  func.func @transform_14(%arg0: i32) -> (i32, i32, i32) {
    %c0_i32 = arith.constant 0 : i32
    %c0_i32_0 = arith.constant 0 : i32
    %c0_i32_1 = arith.constant 0 : i32
    %c0_i32_2 = arith.constant 0 : i32
    return %c0_i32, %c0_i32_0, %c0_i32_1 : i32, i32, i32
  }
  func.func @transform_15(%arg0: i32) -> (i32, i32) {
    %c0_i32 = arith.constant 0 : i32
    %c0_i32_0 = arith.constant 0 : i32
    %c0_i32_1 = arith.constant 0 : i32
    return %c0_i32, %c0_i32_0 : i32, i32
  }
  func.func @transform_16(%arg0: i32) -> (i32, i32) {
    %c0_i32 = arith.constant 0 : i32
    %c0_i32_0 = arith.constant 0 : i32
    %c0_i32_1 = arith.constant 0 : i32
    return %c0_i32, %c0_i32_0 : i32, i32
  }
  func.func @transform_17(%arg0: i32) -> (i32, i32) {
    %c0_i32 = arith.constant 0 : i32
    %c0_i32_0 = arith.constant 0 : i32
    %c0_i32_1 = arith.constant 0 : i32
    return %c0_i32, %c0_i32_0 : i32, i32
  }
}

</mosaic_0001>

<llo_original>
// kernel: forward.1
$region0: #{forward.1}
  #allocation0 [shape = 'u32[]', space=smem, size = 0x4, offset = 0x4, fixed_abs, tag = 'smem constant byte address 0x4 - core index']
  #allocation1 [shape = 'u32[72,128]{1,0:T(1,128)}', space=vmem, size = 0x9000, scoped, tag = 'internal scratch']
  #allocation2 [shape = 'f32[32,8]{1,0:T(8,128)}', space=vmem, size = 0x4000, scoped, tag = 'scratch operand']
  %s0 = inlined_call_operand.vmem [shape: f32[2,16,8], index: 0, kind: input, shape index: {}]
  %s1 = inlined_call_operand.hbm [shape: f32[3,8,16], index: 1, kind: input, shape index: {}]
  %s2 = inlined_call_operand.vmem [shape: f32[1,16], index: 2, kind: input, shape index: {}]
  %s3 = inlined_call_operand.vmem [shape: f32[4,16,128], index: 3, kind: input, shape index: {}]
  %s4 = inlined_call_operand.vmem [shape: f32[1,128], index: 4, kind: input, shape index: {}]
  %s5 = inlined_call_operand.vmem [shape: f32[8,16], index: 5, kind: input, shape index: {}]
  %s6 = inlined_call_operand.hbm [shape: f32[1,16], index: 6, kind: input, shape index: {}]
  %s7 = inlined_call_operand.hbm [shape: f32[16,120], index: 7, kind: input, shape index: {}]
  %s8 = inlined_call_operand.hbm [shape: f32[1,120], index: 8, kind: input, shape index: {}]
  %s9 = inlined_call_operand.hbm [shape: f32[32,96], index: 9, kind: input, shape index: {}]
  %s10 = inlined_call_operand.hbm [shape: f32[1,32], index: 10, kind: input, shape index: {}]
  %s11 = inlined_call_operand.hbm [shape: f32[8,24], index: 11, kind: input, shape index: {}]
  %s12 = inlined_call_operand.hbm [shape: f32[1,8], index: 12, kind: input, shape index: {}]
  %s13 = inlined_call_operand.vmem [shape: f32[32,8], index: 13, kind: input, shape index: {}]
  %s14 = inlined_call_operand.hbm [shape: f32[2,8,8], index: 14, kind: input, shape index: {}]
  %s15 = inlined_call_operand.hbm [shape: f32[1,8], index: 15, kind: input, shape index: {}]
  %s16 = inlined_call_operand.hbm [shape: f32[4,8], index: 16, kind: input, shape index: {}]
  %s17 = inlined_call_operand.hbm [shape: f32[2,8], index: 17, kind: output, shape index: {}]
  %s18 = sld [smem:[#allocation0]]
  $region122: #{forward.1} parent=0
    _
  %s20 = ssub.s32 1, %s18
  %s21 = scalar_select 0, %s20, %s18
  $region1: #{forward.1} parent=0
    #allocation3 [shape = 'u8[12288]{0}', space=vmem, size = 0x3000, scoped, tag = 'input window, operand 1, single buffered']
    #allocation4 [shape = 's32[1]{0}', space=sflag, size = 0x4, scoped, tag = 'scoped memory for forward.1']
    #allocation5 [shape = 's32[1]{0}', space=sflag, size = 0x4, scoped, tag = 'scoped memory for forward.1']
    #allocation6 [shape = 'u8[512]{0}', space=vmem, size = 0x400, scoped, tag = 'input window, operand 6, single buffered']
    #allocation7 [shape = 's32[1]{0}', space=sflag, size = 0x4, scoped, tag = 'scoped memory for forward.1']
    #allocation8 [shape = 'u8[8192]{0}', space=vmem, size = 0x2000, scoped, tag = 'input window, operand 7, single buffered']
    #allocation9 [shape = 'u8[512]{0}', space=vmem, size = 0x400, scoped, tag = 'input window, operand 8, single buffered']
    #allocation10 [shape = 's32[1]{0}', space=sflag, size = 0x4, scoped, tag = 'scoped memory for forward.1']
    #allocation11 [shape = 'u8[16384]{0}', space=vmem, size = 0x4000, scoped, tag = 'input window, operand 9, single buffered']
    #allocation12 [shape = 'u8[512]{0}', space=vmem, size = 0x400, scoped, tag = 'input window, operand 10, single buffered']
    #allocation13 [shape = 's32[1]{0}', space=sflag, size = 0x4, scoped, tag = 'scoped memory for forward.1']
    #allocation14 [shape = 'u8[4096]{0}', space=vmem, size = 0x1000, scoped, tag = 'input window, operand 11, single buffered']
    #allocation15 [shape = 'u8[512]{0}', space=vmem, size = 0x400, scoped, tag = 'input window, operand 12, single buffered']
    #allocation16 [shape = 's32[1]{0}', space=sflag, size = 0x4, scoped, tag = 'scoped memory for forward.1']
    #allocation17 [shape = 'u8[8192]{0}', space=vmem, size = 0x2000, scoped, tag = 'input window, operand 14, single buffered']
    #allocation18 [shape = 'u8[512]{0}', space=vmem, size = 0x400, scoped, tag = 'input window, operand 15, single buffered']
    #allocation19 [shape = 's32[1]{0}', space=sflag, size = 0x4, scoped, tag = 'scoped memory for forward.1']
    #allocation20 [shape = 'u8[2048]{0}', space=vmem, size = 0x800, scoped, tag = 'input window, operand 16, single buffered']
    #allocation21 [shape = 'u8[1024]{0}', space=vmem, size = 0x400, scoped, tag = 'output window, operand 0, single buffered']
    %22 = vsyncpa [#allocation4], 0
    %23 = vsyncpa [#allocation7], 0
    %24 = vsyncpa [#allocation10], 0
    %25 = vsyncpa [#allocation13], 0
    %26 = vsyncpa [#allocation16], 0
    %27 = vsyncpa [#allocation19], 0
    %28 = vsyncpa [#allocation5], 0
    // Predicated region
    $region2: #{forward.1} parent=1 // pred_check
      _
    $region3: #{forward.1} parent=1 // pred_check_branch
      %30 = sbr.rel (0) target = $region5
    $region4: #{forward.1} parent=1 // pred_region
      _
    $region5: #{forward.1} parent=1 // pred_fallthru
      _
    // Predicated region
    $region6: #{forward.1} parent=1 // pred_check
      _
    $region7: #{forward.1} parent=1 // pred_check_branch
      %32 = sbr.rel (0) target = $region9
    $region8: #{forward.1} parent=1 // pred_region
      %34 = vsyncadd [#allocation4], 0
      %s35 = sshll.u32 %s1, 4
      %s36 = int_to_ptr.hbm [resolvable:$true] %s35
      %s37 = sshll.u32 [#allocation3], 4
      %s38 = int_to_ptr.vmem [resolvable:$true] %s37
      %43 = dma.hbm_to_vmem [thread:$0]  %s36, 384, %s38, [#allocation4], 128, 128, 8
    $region9: #{forward.1} parent=1 // pred_fallthru
      _
    // Predicated region
    $region10: #{forward.1} parent=1 // pred_check
      _
    $region11: #{forward.1} parent=1 // pred_check_branch
      %45 = sbr.rel (0) target = $region13
    $region12: #{forward.1} parent=1 // pred_region
      _
    $region13: #{forward.1} parent=1 // pred_fallthru
      _
    // Predicated region
    $region14: #{forward.1} parent=1 // pred_check
      _
    $region15: #{forward.1} parent=1 // pred_check_branch
      %47 = sbr.rel (0) target = $region17
    $region16: #{forward.1} parent=1 // pred_region
      _
    $region17: #{forward.1} parent=1 // pred_fallthru
      _
    // Predicated region
    $region18: #{forward.1} parent=1 // pred_check
      _
    $region19: #{forward.1} parent=1 // pred_check_branch
      %49 = sbr.rel (0) target = $region21
    $region20: #{forward.1} parent=1 // pred_region
      _
    $region21: #{forward.1} parent=1 // pred_fallthru
      _
    // Predicated region
    $region22: #{forward.1} parent=1 // pred_check
      _
    $region23: #{forward.1} parent=1 // pred_check_branch
      %51 = sbr.rel (0) target = $region25
    $region24: #{forward.1} parent=1 // pred_region
      _
    $region25: #{forward.1} parent=1 // pred_fallthru
      _
    // Predicated region
    $region26: #{forward.1} parent=1 // pred_check
      _
    $region27: #{forward.1} parent=1 // pred_check_branch
      %53 = sbr.rel (0) target = $region29
    $region28: #{forward.1} parent=1 // pred_region
      %55 = vsyncadd [#allocation7], 0
      %s57 = sshll.u32 %s6, 4
      %s58 = int_to_ptr.hbm [resolvable:$true] %s57
      %s59 = sshll.u32 [#allocation6], 4
      %s60 = int_to_ptr.vmem [resolvable:$true] %s59
      %62 = dma.hbm_to_vmem [thread:$0]  %s58, 16, %s60, [#allocation7]
    $region29: #{forward.1} parent=1 // pred_fallthru
      _
    // Predicated region
    $region30: #{forward.1} parent=1 // pred_check
      _
    $region31: #{forward.1} parent=1 // pred_check_branch
      %64 = sbr.rel (0) target = $region33
    $region32: #{forward.1} parent=1 // pred_region
      %66 = vsyncadd [#allocation7], 0
      %s67 = sshll.u32 %s7, 4
      %s68 = int_to_ptr.hbm [resolvable:$true] %s67
      %s69 = sshll.u32 [#allocation8], 4
      %s70 = int_to_ptr.vmem [resolvable:$true] %s69
      %75 = dma.hbm_to_vmem [thread:$0]  %s68, 256, %s70, [#allocation7], 128, 128, 8
    $region33: #{forward.1} parent=1 // pred_fallthru
      _
    // Predicated region
    $region34: #{forward.1} parent=1 // pred_check
      _
    $region35: #{forward.1} parent=1 // pred_check_branch
      %77 = sbr.rel (0) target = $region37
    $region36: #{forward.1} parent=1 // pred_region
      %79 = vsyncadd [#allocation10], 0
      %s81 = sshll.u32 %s8, 4
      %s82 = int_to_ptr.hbm [resolvable:$true] %s81
      %s83 = sshll.u32 [#allocation9], 4
      %s84 = int_to_ptr.vmem [resolvable:$true] %s83
      %86 = dma.hbm_to_vmem [thread:$0]  %s82, 16, %s84, [#allocation10]
    $region37: #{forward.1} parent=1 // pred_fallthru
      _
    // Predicated region
    $region38: #{forward.1} parent=1 // pred_check
      _
    $region39: #{forward.1} parent=1 // pred_check_branch
      %88 = sbr.rel (0) target = $region41
    $region40: #{forward.1} parent=1 // pred_region
      %90 = vsyncadd [#allocation10], 0
      %s91 = sshll.u32 %s9, 4
      %s92 = int_to_ptr.hbm [resolvable:$true] %s91
      %s93 = sshll.u32 [#allocation11], 4
      %s94 = int_to_ptr.vmem [resolvable:$true] %s93
      %99 = dma.hbm_to_vmem [thread:$0]  %s92, 512, %s94, [#allocation10], 128, 128, 8
    $region41: #{forward.1} parent=1 // pred_fallthru
      _
    // Predicated region
    $region42: #{forward.1} parent=1 // pred_check
      _
    $region43: #{forward.1} parent=1 // pred_check_branch
      %101 = sbr.rel (0) target = $region45
    $region44: #{forward.1} parent=1 // pred_region
      %103 = vsyncadd [#allocation13], 0
      %s105 = sshll.u32 %s10, 4
      %s106 = int_to_ptr.hbm [resolvable:$true] %s105
      %s107 = sshll.u32 [#allocation12], 4
      %s108 = int_to_ptr.vmem [resolvable:$true] %s107
      %110 = dma.hbm_to_vmem [thread:$0]  %s106, 16, %s108, [#allocation13]
    $region45: #{forward.1} parent=1 // pred_fallthru
      _
    // Predicated region
    $region46: #{forward.1} parent=1 // pred_check
      _
    $region47: #{forward.1} parent=1 // pred_check_branch
      %112 = sbr.rel (0) target = $region49
    $region48: #{forward.1} parent=1 // pred_region
      %114 = vsyncadd [#allocation13], 0
      %s116 = sshll.u32 %s11, 4
      %s117 = int_to_ptr.hbm [resolvable:$true] %s116
      %s118 = sshll.u32 [#allocation14], 4
      %s119 = int_to_ptr.vmem [resolvable:$true] %s118
      %121 = dma.hbm_to_vmem [thread:$0]  %s117, 128, %s119, [#allocation13]
    $region49: #{forward.1} parent=1 // pred_fallthru
      _
    // Predicated region
    $region50: #{forward.1} parent=1 // pred_check
      _
    $region51: #{forward.1} parent=1 // pred_check_branch
      %123 = sbr.rel (0) target = $region53
    $region52: #{forward.1} parent=1 // pred_region
      %125 = vsyncadd [#allocation16], 0
      %s127 = sshll.u32 %s12, 4
      %s128 = int_to_ptr.hbm [resolvable:$true] %s127
      %s129 = sshll.u32 [#allocation15], 4
      %s130 = int_to_ptr.vmem [resolvable:$true] %s129
      %132 = dma.hbm_to_vmem [thread:$0]  %s128, 16, %s130, [#allocation16]
    $region53: #{forward.1} parent=1 // pred_fallthru
      _
    // Predicated region
    $region54: #{forward.1} parent=1 // pred_check
      _
    $region55: #{forward.1} parent=1 // pred_check_branch
      %134 = sbr.rel (0) target = $region57
    $region56: #{forward.1} parent=1 // pred_region
      _
    $region57: #{forward.1} parent=1 // pred_fallthru
      _
    // Predicated region
    $region58: #{forward.1} parent=1 // pred_check
      _
    $region59: #{forward.1} parent=1 // pred_check_branch
      %136 = sbr.rel (0) target = $region61
    $region60: #{forward.1} parent=1 // pred_region
      %138 = vsyncadd [#allocation16], 0
      %s139 = sshll.u32 %s14, 4
      %s140 = int_to_ptr.hbm [resolvable:$true] %s139
      %s141 = sshll.u32 [#allocation17], 4
      %s142 = int_to_ptr.vmem [resolvable:$true] %s141
      %147 = dma.hbm_to_vmem [thread:$0]  %s140, 256, %s142, [#allocation16], 128, 128, 8
    $region61: #{forward.1} parent=1 // pred_fallthru
      _
    // Predicated region
    $region62: #{forward.1} parent=1 // pred_check
      _
    $region63: #{forward.1} parent=1 // pred_check_branch
      %149 = sbr.rel (0) target = $region65
    $region64: #{forward.1} parent=1 // pred_region
      %151 = vsyncadd [#allocation19], 0
      %s153 = sshll.u32 %s15, 4
      %s154 = int_to_ptr.hbm [resolvable:$true] %s153
      %s155 = sshll.u32 [#allocation18], 4
      %s156 = int_to_ptr.vmem [resolvable:$true] %s155
      %158 = dma.hbm_to_vmem [thread:$0]  %s154, 16, %s156, [#allocation19]
    $region65: #{forward.1} parent=1 // pred_fallthru
      _
    // Predicated region
    $region66: #{forward.1} parent=1 // pred_check
      _
    $region67: #{forward.1} parent=1 // pred_check_branch
      %160 = sbr.rel (0) target = $region69
    $region68: #{forward.1} parent=1 // pred_region
      %162 = vsyncadd [#allocation19], 0
      %s164 = sshll.u32 %s16, 4
      %s165 = int_to_ptr.hbm [resolvable:$true] %s164
      %s166 = sshll.u32 [#allocation20], 4
      %s167 = int_to_ptr.vmem [resolvable:$true] %s166
      %169 = dma.hbm_to_vmem [thread:$0]  %s165, 64, %s167, [#allocation19]
    $region69: #{forward.1} parent=1 // pred_fallthru
      _
    // Predicated region
    $region70: #{forward.1} parent=1 // pred_check
      _
    $region71: #{forward.1} parent=1 // pred_check_branch
      %171 = sbr.rel (0) target = $region73
    $region72: #{forward.1} parent=1 // pred_region
      %173 = dma.done [#allocation4], 384
    $region73: #{forward.1} parent=1 // pred_fallthru
      _
    // Predicated region
    $region74: #{forward.1} parent=1 // pred_check
      _
    $region75: #{forward.1} parent=1 // pred_check_branch
      %175 = sbr.rel (0) target = $region77
    $region76: #{forward.1} parent=1 // pred_region
      %177 = dma.done [#allocation7], 16
    $region77: #{forward.1} parent=1 // pred_fallthru
      _
    // Predicated region
    $region78: #{forward.1} parent=1 // pred_check
      _
    $region79: #{forward.1} parent=1 // pred_check_branch
      %179 = sbr.rel (0) target = $region81
    $region80: #{forward.1} parent=1 // pred_region
      %181 = dma.done [#allocation7], 256
    $region81: #{forward.1} parent=1 // pred_fallthru
      _
    // Predicated region
    $region82: #{forward.1} parent=1 // pred_check
      _
    $region83: #{forward.1} parent=1 // pred_check_branch
      %183 = sbr.rel (0) target = $region85
    $region84: #{forward.1} parent=1 // pred_region
      %185 = dma.done [#allocation10], 16
    $region85: #{forward.1} parent=1 // pred_fallthru
      _
    // Predicated region
    $region86: #{forward.1} parent=1 // pred_check
      _
    $region87: #{forward.1} parent=1 // pred_check_branch
      %187 = sbr.rel (0) target = $region89
    $region88: #{forward.1} parent=1 // pred_region
      %189 = dma.done [#allocation10], 512
    $region89: #{forward.1} parent=1 // pred_fallthru
      _
    // Predicated region
    $region90: #{forward.1} parent=1 // pred_check
      _
    $region91: #{forward.1} parent=1 // pred_check_branch
      %191 = sbr.rel (0) target = $region93
    $region92: #{forward.1} parent=1 // pred_region
      %193 = dma.done [#allocation13], 16
    $region93: #{forward.1} parent=1 // pred_fallthru
      _
    // Predicated region
    $region94: #{forward.1} parent=1 // pred_check
      _
    $region95: #{forward.1} parent=1 // pred_check_branch
      %195 = sbr.rel (0) target = $region97
    $region96: #{forward.1} parent=1 // pred_region
      %197 = dma.done [#allocation13], 128
    $region97: #{forward.1} parent=1 // pred_fallthru
      _
    // Predicated region
    $region98: #{forward.1} parent=1 // pred_check
      _
    $region99: #{forward.1} parent=1 // pred_check_branch
      %199 = sbr.rel (0) target = $region101
    $region100: #{forward.1} parent=1 // pred_region
      %201 = dma.done [#allocation16], 16
    $region101: #{forward.1} parent=1 // pred_fallthru
      _
    // Predicated region
    $region102: #{forward.1} parent=1 // pred_check
      _
    $region103: #{forward.1} parent=1 // pred_check_branch
      %203 = sbr.rel (0) target = $region105
    $region104: #{forward.1} parent=1 // pred_region
      %205 = dma.done [#allocation16], 256
    $region105: #{forward.1} parent=1 // pred_fallthru
      _
    // Predicated region
    $region106: #{forward.1} parent=1 // pred_check
      _
    $region107: #{forward.1} parent=1 // pred_check_branch
      %207 = sbr.rel (0) target = $region109
    $region108: #{forward.1} parent=1 // pred_region
      %209 = dma.done [#allocation19], 16
    $region109: #{forward.1} parent=1 // pred_fallthru
      _
    // Predicated region
    $region110: #{forward.1} parent=1 // pred_check
      _
    $region111: #{forward.1} parent=1 // pred_check_branch
      %211 = sbr.rel (0) target = $region113
    $region112: #{forward.1} parent=1 // pred_region
      %213 = dma.done [#allocation19], 64
    $region113: #{forward.1} parent=1 // pred_fallthru
      _
    %v214 = vld [vmem:[%s0] sm:$0x1]
    %v215 = vld [vmem:[%s0 + $0x10] sm:$0x1]
    %v216 = vld [vmem:[#allocation3] sm:$0xff]
    %v217 = vld [vmem:[%s0 + $0x1] sm:$0x1]
    %v218 = vld [vmem:[%s0 + $0x11] sm:$0x1]
    %s219 = scalar_lea.vmem [#allocation3], 8
    %v220 = vld [vmem:[%s219] sm:$0xff]
    %v223 = vrot.slane %v218, 7
    %vm224 = vcmask 1041409
    %v225 = vsel %vm224, %v223, %v217
    %vm226 = vcmask 64512
    %v227 = vsel %vm226, %v225, 0
    %229 = vmatpush.msra.mxu0 0.0
    %230 = vmatpush.msra.mxu0 0.0
    %231 = vmatpush.msra.mxu0 0.0
    %232 = vmatpush.msra.mxu0 0.0
    %233 = vmatpush.msra.mxu0 0.0
    %234 = vmatpush.msra.mxu0 0.0
    %235 = vmatpush.msra.mxu0 0.0
    %236 = vmatpush.msra.mxu0 0.0
    %237 = vmatpush.msra.mxu0 0.0
    %238 = vmatpush.msra.mxu0 0.0
    %239 = vmatpush.msra.mxu0 0.0
    %240 = vmatpush.msra.mxu0 0.0
    %241 = vmatpush.msra.mxu0 0.0
    %242 = vmatpush.msra.mxu0 0.0
    %243 = vmatpush.msra.mxu0 0.0
    %244 = vmatpush.msra.mxu0 %v220
    %245 = vmatmul.f32.gmra.mxu0 %v227
    %v246 = vpop.f32.mrf.mxu0
    %v247 = vadd.f32 0.0, %v246
    %248 = vdwg.mxu0
    %v251 = vrot.slane %v215, 7
    %v252 = vsel %vm224, %v251, %v214
    %v253 = vsel %vm226, %v252, 0
    %255 = vmatpush.msra.mxu0 0.0
    %256 = vmatpush.msra.mxu0 0.0
    %257 = vmatpush.msra.mxu0 0.0
    %258 = vmatpush.msra.mxu0 0.0
    %259 = vmatpush.msra.mxu0 0.0
    %260 = vmatpush.msra.mxu0 0.0
    %261 = vmatpush.msra.mxu0 0.0
    %262 = vmatpush.msra.mxu0 0.0
    %263 = vmatpush.msra.mxu0 0.0
    %264 = vmatpush.msra.mxu0 0.0
    %265 = vmatpush.msra.mxu0 0.0
    %266 = vmatpush.msra.mxu0 0.0
    %267 = vmatpush.msra.mxu0 0.0
    %268 = vmatpush.msra.mxu0 0.0
    %269 = vmatpush.msra.mxu0 0.0
    %270 = vmatpush.msra.mxu0 %v216
    %271 = vmatmul.f32.gmra.mxu0 %v253
    %v272 = vpop.f32.mrf.mxu0
    %v273 = vadd.f32 %v247, %v272
    %274 = vdwg.mxu0
    %v275 = vld [vmem:[%s0 + $0x2] sm:$0x1]
    %v276 = vld [vmem:[%s0 + $0x12] sm:$0x1]
    %s277 = scalar_lea.vmem [#allocation3], 16
    %v278 = vld [vmem:[%s277] sm:$0xff]
    %v281 = vrot.slane %v276, 7
    %v282 = vsel %vm224, %v281, %v275
    %v283 = vsel %vm226, %v282, 0
    %285 = vmatpush.msra.mxu0 0.0
    %286 = vmatpush.msra.mxu0 0.0
    %287 = vmatpush.msra.mxu0 0.0
    %288 = vmatpush.msra.mxu0 0.0
    %289 = vmatpush.msra.mxu0 0.0
    %290 = vmatpush.msra.mxu0 0.0
    %291 = vmatpush.msra.mxu0 0.0
    %292 = vmatpush.msra.mxu0 0.0
    %293 = vmatpush.msra.mxu0 0.0
    %294 = vmatpush.msra.mxu0 0.0
    %295 = vmatpush.msra.mxu0 0.0
    %296 = vmatpush.msra.mxu0 0.0
    %297 = vmatpush.msra.mxu0 0.0
    %298 = vmatpush.msra.mxu0 0.0
    %299 = vmatpush.msra.mxu0 0.0
    %300 = vmatpush.msra.mxu0 %v278
    %301 = vmatmul.f32.gmra.mxu0 %v283
    %v302 = vpop.f32.mrf.mxu0
    %v303 = vadd.f32 0.0, %v302
    %304 = vdwg.mxu0
    %v305 = vadd.f32 %v273, %v303
    %v306 = vld [vmem:[%s2] sm:$0x1]
    %v308 = vperm.slane %v306, 0
    %v310 = vadd.f32 %v305, %v308
    %v311 = vld [vmem:[%s3] sm:$0xff]
    %v312 = vld [vmem:[%s3 + $0x8] sm:$0xff]
    %v313 = vld [vmem:[%s0 + $0x4] sm:$0x1]
    %v314 = vld [vmem:[%s0 + $0x14] sm:$0x1]
    %v315 = vld [vmem:[%s0 + $0x5] sm:$0x1]
    %v316 = vld [vmem:[%s0 + $0x15] sm:$0x1]
    %v319 = vrot.slane %v316, 7
    %v320 = vsel %vm224, %v319, %v315
    %v321 = vsel %vm226, %v320, 0
    %323 = vmatpush.msra.mxu0 0.0
    %324 = vmatpush.msra.mxu0 0.0
    %325 = vmatpush.msra.mxu0 0.0
    %326 = vmatpush.msra.mxu0 0.0
    %327 = vmatpush.msra.mxu0 0.0
    %328 = vmatpush.msra.mxu0 0.0
    %329 = vmatpush.msra.mxu0 0.0
    %330 = vmatpush.msra.mxu0 0.0
    %331 = vmatpush.msra.mxu0 0.0
    %332 = vmatpush.msra.mxu0 0.0
    %333 = vmatpush.msra.mxu0 0.0
    %334 = vmatpush.msra.mxu0 0.0
    %335 = vmatpush.msra.mxu0 0.0
    %336 = vmatpush.msra.mxu0 0.0
    %337 = vmatpush.msra.mxu0 0.0
    %338 = vmatpush.msra.mxu0 %v220
    %339 = vmatmul.f32.gmra.mxu0 %v321
    %v340 = vpop.f32.mrf.mxu0
    %v341 = vadd.f32 0.0, %v340
    %342 = vdwg.mxu0
    %v345 = vrot.slane %v314, 7
    %v346 = vsel %vm224, %v345, %v313
    %v347 = vsel %vm226, %v346, 0
    %349 = vmatpush.msra.mxu0 0.0
    %350 = vmatpush.msra.mxu0 0.0
    %351 = vmatpush.msra.mxu0 0.0
    %352 = vmatpush.msra.mxu0 0.0
    %353 = vmatpush.msra.mxu0 0.0
    %354 = vmatpush.msra.mxu0 0.0
    %355 = vmatpush.msra.mxu0 0.0
    %356 = vmatpush.msra.mxu0 0.0
    %357 = vmatpush.msra.mxu0 0.0
    %358 = vmatpush.msra.mxu0 0.0
    %359 = vmatpush.msra.mxu0 0.0
    %360 = vmatpush.msra.mxu0 0.0
    %361 = vmatpush.msra.mxu0 0.0
    %362 = vmatpush.msra.mxu0 0.0
    %363 = vmatpush.msra.mxu0 0.0
    %364 = vmatpush.msra.mxu0 %v216
    %365 = vmatmul.f32.gmra.mxu0 %v347
    %v366 = vpop.f32.mrf.mxu0
    %v367 = vadd.f32 %v341, %v366
    %368 = vdwg.mxu0
    %v369 = vld [vmem:[%s0 + $0x6] sm:$0x1]
    %v370 = vld [vmem:[%s0 + $0x16] sm:$0x1]
    %v373 = vrot.slane %v370, 7
    %v374 = vsel %vm224, %v373, %v369
    %v375 = vsel %vm226, %v374, 0
    %377 = vmatpush.msra.mxu0 0.0
    %378 = vmatpush.msra.mxu0 0.0
    %379 = vmatpush.msra.mxu0 0.0
    %380 = vmatpush.msra.mxu0 0.0
    %381 = vmatpush.msra.mxu0 0.0
    %382 = vmatpush.msra.mxu0 0.0
    %383 = vmatpush.msra.mxu0 0.0
    %384 = vmatpush.msra.mxu0 0.0
    %385 = vmatpush.msra.mxu0 0.0
    %386 = vmatpush.msra.mxu0 0.0
    %387 = vmatpush.msra.mxu0 0.0
    %388 = vmatpush.msra.mxu0 0.0
    %389 = vmatpush.msra.mxu0 0.0
    %390 = vmatpush.msra.mxu0 0.0
    %391 = vmatpush.msra.mxu0 0.0
    %392 = vmatpush.msra.mxu0 %v278
    %393 = vmatmul.f32.gmra.mxu0 %v375
    %v394 = vpop.f32.mrf.mxu0
    %v395 = vadd.f32 0.0, %v394
    %396 = vdwg.mxu0
    %v397 = vadd.f32 %v367, %v395
    %v398 = vadd.f32 %v397, %v308
    %s399 = scalar_lea.vmem %s3, 16
    %v400 = vld [vmem:[%s399] sm:$0xff]
    %v401 = vld [vmem:[%s399 + $0x8] sm:$0xff]
    %vm402 = vcmask 130048
    %v404 = vsel %vm402, %v398, 0
    %406 = vmatpush.msra.mxu0 0.0
    %407 = vmatpush.msra.mxu0 0.0
    %408 = vmatpush.msra.mxu0 0.0
    %409 = vmatpush.msra.mxu0 0.0
    %410 = vmatpush.msra.mxu0 0.0
    %411 = vmatpush.msra.mxu0 0.0
    %412 = vmatpush.msra.mxu0 0.0
    %413 = vmatpush.msra.mxu0 0.0
    %414 = vmatpush.msra.mxu0 0.0
    %415 = vmatpush.msra.mxu0 0.0
    %416 = vmatpush.msra.mxu0 0.0
    %417 = vmatpush.msra.mxu0 0.0
    %418 = vmatpush.msra.mxu0 0.0
    %419 = vmatpush.msra.mxu0 0.0
    %420 = vmatpush.msra.mxu0 %v401
    %421 = vmatpush.msra.mxu0 %v400
    %422 = vmatmul.f32.gmra.mxu0 %v404
    %v423 = vpop.f32.mrf.mxu0
    %v424 = vadd.f32 0.0, %v423
    %425 = vdwg.mxu0
    %v427 = vsel %vm402, %v310, 0
    %429 = vmatpush.msra.mxu0 0.0
    %430 = vmatpush.msra.mxu0 0.0
    %431 = vmatpush.msra.mxu0 0.0
    %432 = vmatpush.msra.mxu0 0.0
    %433 = vmatpush.msra.mxu0 0.0
    %434 = vmatpush.msra.mxu0 0.0
    %435 = vmatpush.msra.mxu0 0.0
    %436 = vmatpush.msra.mxu0 0.0
    %437 = vmatpush.msra.mxu0 0.0
    %438 = vmatpush.msra.mxu0 0.0
    %439 = vmatpush.msra.mxu0 0.0
    %440 = vmatpush.msra.mxu0 0.0
    %441 = vmatpush.msra.mxu0 0.0
    %442 = vmatpush.msra.mxu0 0.0
    %443 = vmatpush.msra.mxu0 %v312
    %444 = vmatpush.msra.mxu0 %v311
    %445 = vmatmul.f32.gmra.mxu0 %v427
    %v446 = vpop.f32.mrf.mxu0
    %v447 = vadd.f32 %v424, %v446
    %448 = vdwg.mxu0
    %v449 = vld [vmem:[%s0 + $0x8] sm:$0x1]
    %v450 = vld [vmem:[%s0 + $0x18] sm:$0x1]
    %v451 = vld [vmem:[%s0 + $0x9] sm:$0x1]
    %v452 = vld [vmem:[%s0 + $0x19] sm:$0x1]
    %v455 = vrot.slane %v452, 7
    %v456 = vsel %vm224, %v455, %v451
    %v457 = vsel %vm226, %v456, 0
    %459 = vmatpush.msra.mxu0 0.0
    %460 = vmatpush.msra.mxu0 0.0
    %461 = vmatpush.msra.mxu0 0.0
    %462 = vmatpush.msra.mxu0 0.0
    %463 = vmatpush.msra.mxu0 0.0
    %464 = vmatpush.msra.mxu0 0.0
    %465 = vmatpush.msra.mxu0 0.0
    %466 = vmatpush.msra.mxu0 0.0
    %467 = vmatpush.msra.mxu0 0.0
    %468 = vmatpush.msra.mxu0 0.0
    %469 = vmatpush.msra.mxu0 0.0
    %470 = vmatpush.msra.mxu0 0.0
    %471 = vmatpush.msra.mxu0 0.0
    %472 = vmatpush.msra.mxu0 0.0
    %473 = vmatpush.msra.mxu0 0.0
    %474 = vmatpush.msra.mxu0 %v220
    %475 = vmatmul.f32.gmra.mxu0 %v457
    %v476 = vpop.f32.mrf.mxu0
    %v477 = vadd.f32 0.0, %v476
    %478 = vdwg.mxu0
    %v481 = vrot.slane %v450, 7
    %v482 = vsel %vm224, %v481, %v449
    %v483 = vsel %vm226, %v482, 0
    %485 = vmatpush.msra.mxu0 0.0
    %486 = vmatpush.msra.mxu0 0.0
    %487 = vmatpush.msra.mxu0 0.0
    %488 = vmatpush.msra.mxu0 0.0
    %489 = vmatpush.msra.mxu0 0.0
    %490 = vmatpush.msra.mxu0 0.0
    %491 = vmatpush.msra.mxu0 0.0
    %492 = vmatpush.msra.mxu0 0.0
    %493 = vmatpush.msra.mxu0 0.0
    %494 = vmatpush.msra.mxu0 0.0
    %495 = vmatpush.msra.mxu0 0.0
    %496 = vmatpush.msra.mxu0 0.0
    %497 = vmatpush.msra.mxu0 0.0
    %498 = vmatpush.msra.mxu0 0.0
    %499 = vmatpush.msra.mxu0 0.0
    %500 = vmatpush.msra.mxu0 %v216
    %501 = vmatmul.f32.gmra.mxu0 %v483
    %v502 = vpop.f32.mrf.mxu0
    %v503 = vadd.f32 %v477, %v502
    %504 = vdwg.mxu0
    %v505 = vld [vmem:[%s0 + $0xa] sm:$0x1]
    %v506 = vld [vmem:[%s0 + $0x1a] sm:$0x1]
    %v509 = vrot.slane %v506, 7
    %v510 = vsel %vm224, %v509, %v505
    %v511 = vsel %vm226, %v510, 0
    %513 = vmatpush.msra.mxu0 0.0
    %514 = vmatpush.msra.mxu0 0.0
    %515 = vmatpush.msra.mxu0 0.0
    %516 = vmatpush.msra.mxu0 0.0
    %517 = vmatpush.msra.mxu0 0.0
    %518 = vmatpush.msra.mxu0 0.0
    %519 = vmatpush.msra.mxu0 0.0
    %520 = vmatpush.msra.mxu0 0.0
    %521 = vmatpush.msra.mxu0 0.0
    %522 = vmatpush.msra.mxu0 0.0
    %523 = vmatpush.msra.mxu0 0.0
    %524 = vmatpush.msra.mxu0 0.0
    %525 = vmatpush.msra.mxu0 0.0
    %526 = vmatpush.msra.mxu0 0.0
    %527 = vmatpush.msra.mxu0 0.0
    %528 = vmatpush.msra.mxu0 %v278
    %529 = vmatmul.f32.gmra.mxu0 %v511
    %v530 = vpop.f32.mrf.mxu0
    %v531 = vadd.f32 0.0, %v530
    %532 = vdwg.mxu0
    %v533 = vadd.f32 %v503, %v531
    %v534 = vadd.f32 %v533, %v308
    %s535 = scalar_lea.vmem %s3, 32
    %v536 = vld [vmem:[%s535] sm:$0xff]
    %v537 = vld [vmem:[%s535 + $0x8] sm:$0xff]
    %v539 = vsel %vm402, %v534, 0
    %541 = vmatpush.msra.mxu0 0.0
    %542 = vmatpush.msra.mxu0 0.0
    %543 = vmatpush.msra.mxu0 0.0
    %544 = vmatpush.msra.mxu0 0.0
    %545 = vmatpush.msra.mxu0 0.0
    %546 = vmatpush.msra.mxu0 0.0
    %547 = vmatpush.msra.mxu0 0.0
    %548 = vmatpush.msra.mxu0 0.0
    %549 = vmatpush.msra.mxu0 0.0
    %550 = vmatpush.msra.mxu0 0.0
    %551 = vmatpush.msra.mxu0 0.0
    %552 = vmatpush.msra.mxu0 0.0
    %553 = vmatpush.msra.mxu0 0.0
    %554 = vmatpush.msra.mxu0 0.0
    %555 = vmatpush.msra.mxu0 %v537
    %556 = vmatpush.msra.mxu0 %v536
    %557 = vmatmul.f32.gmra.mxu0 %v539
    %v558 = vpop.f32.mrf.mxu0
    %v559 = vadd.f32 0.0, %v558
    %560 = vdwg.mxu0
    %v561 = vadd.f32 %v447, %v559
    %v562 = vld [vmem:[%s0 + $0xc] sm:$0x1]
    %v563 = vld [vmem:[%s0 + $0x1c] sm:$0x1]
    %v564 = vld [vmem:[%s0 + $0xd] sm:$0x1]
    %v565 = vld [vmem:[%s0 + $0x1d] sm:$0x1]
    %v568 = vrot.slane %v565, 7
    %v569 = vsel %vm224, %v568, %v564
    %v570 = vsel %vm226, %v569, 0
    %572 = vmatpush.msra.mxu0 0.0
    %573 = vmatpush.msra.mxu0 0.0
    %574 = vmatpush.msra.mxu0 0.0
    %575 = vmatpush.msra.mxu0 0.0
    %576 = vmatpush.msra.mxu0 0.0
    %577 = vmatpush.msra.mxu0 0.0
    %578 = vmatpush.msra.mxu0 0.0
    %579 = vmatpush.msra.mxu0 0.0
    %580 = vmatpush.msra.mxu0 0.0
    %581 = vmatpush.msra.mxu0 0.0
    %582 = vmatpush.msra.mxu0 0.0
    %583 = vmatpush.msra.mxu0 0.0
    %584 = vmatpush.msra.mxu0 0.0
    %585 = vmatpush.msra.mxu0 0.0
    %586 = vmatpush.msra.mxu0 0.0
    %587 = vmatpush.msra.mxu0 %v220
    %588 = vmatmul.f32.gmra.mxu0 %v570
    %v589 = vpop.f32.mrf.mxu0
    %v590 = vadd.f32 0.0, %v589
    %591 = vdwg.mxu0
    %v594 = vrot.slane %v563, 7
    %v595 = vsel %vm224, %v594, %v562
    %v596 = vsel %vm226, %v595, 0
    %598 = vmatpush.msra.mxu0 0.0
    %599 = vmatpush.msra.mxu0 0.0
    %600 = vmatpush.msra.mxu0 0.0
    %601 = vmatpush.msra.mxu0 0.0
    %602 = vmatpush.msra.mxu0 0.0
    %603 = vmatpush.msra.mxu0 0.0
    %604 = vmatpush.msra.mxu0 0.0
    %605 = vmatpush.msra.mxu0 0.0
    %606 = vmatpush.msra.mxu0 0.0
    %607 = vmatpush.msra.mxu0 0.0
    %608 = vmatpush.msra.mxu0 0.0
    %609 = vmatpush.msra.mxu0 0.0
    %610 = vmatpush.msra.mxu0 0.0
    %611 = vmatpush.msra.mxu0 0.0
    %612 = vmatpush.msra.mxu0 0.0
    %613 = vmatpush.msra.mxu0 %v216
    %614 = vmatmul.f32.gmra.mxu0 %v596
    %v615 = vpop.f32.mrf.mxu0
    %v616 = vadd.f32 %v590, %v615
    %617 = vdwg.mxu0
    %v618 = vld [vmem:[%s0 + $0xe] sm:$0x1]
    %v619 = vld [vmem:[%s0 + $0x1e] sm:$0x1]
    %v622 = vrot.slane %v619, 7
    %v623 = vsel %vm224, %v622, %v618
    %v624 = vsel %vm226, %v623, 0
    %626 = vmatpush.msra.mxu0 0.0
    %627 = vmatpush.msra.mxu0 0.0
    %628 = vmatpush.msra.mxu0 0.0
    %629 = vmatpush.msra.mxu0 0.0
    %630 = vmatpush.msra.mxu0 0.0
    %631 = vmatpush.msra.mxu0 0.0
    %632 = vmatpush.msra.mxu0 0.0
    %633 = vmatpush.msra.mxu0 0.0
    %634 = vmatpush.msra.mxu0 0.0
    %635 = vmatpush.msra.mxu0 0.0
    %636 = vmatpush.msra.mxu0 0.0
    %637 = vmatpush.msra.mxu0 0.0
    %638 = vmatpush.msra.mxu0 0.0
    %639 = vmatpush.msra.mxu0 0.0
    %640 = vmatpush.msra.mxu0 0.0
    %641 = vmatpush.msra.mxu0 %v278
    %642 = vmatmul.f32.gmra.mxu0 %v624
    %v643 = vpop.f32.mrf.mxu0
    %v644 = vadd.f32 0.0, %v643
    %645 = vdwg.mxu0
    %v646 = vadd.f32 %v616, %v644
    %v647 = vadd.f32 %v646, %v308
    %s648 = scalar_lea.vmem %s3, 48
    %v649 = vld [vmem:[%s648] sm:$0xff]
    %v650 = vld [vmem:[%s648 + $0x8] sm:$0xff]
    %v652 = vsel %vm402, %v647, 0
    %654 = vmatpush.msra.mxu0 0.0
    %655 = vmatpush.msra.mxu0 0.0
    %656 = vmatpush.msra.mxu0 0.0
    %657 = vmatpush.msra.mxu0 0.0
    %658 = vmatpush.msra.mxu0 0.0
    %659 = vmatpush.msra.mxu0 0.0
    %660 = vmatpush.msra.mxu0 0.0
    %661 = vmatpush.msra.mxu0 0.0
    %662 = vmatpush.msra.mxu0 0.0
    %663 = vmatpush.msra.mxu0 0.0
    %664 = vmatpush.msra.mxu0 0.0
    %665 = vmatpush.msra.mxu0 0.0
    %666 = vmatpush.msra.mxu0 0.0
    %667 = vmatpush.msra.mxu0 0.0
    %668 = vmatpush.msra.mxu0 %v650
    %669 = vmatpush.msra.mxu0 %v649
    %670 = vmatmul.f32.gmra.mxu0 %v652
    %v671 = vpop.f32.mrf.mxu0
    %v672 = vadd.f32 0.0, %v671
    %673 = vdwg.mxu0
    %v674 = vadd.f32 %v561, %v672
    %v675 = vld [vmem:[%s4] sm:$0x1]
    %v677 = vperm.slane %v675, 0
    %v679 = vadd.f32 %v674, %v677
    %vm680 = vcmask 58368
    %681 = vst.msk [vmem:[#allocation2] sm:$0x3] %vm680, %v679
    %683 = vrot.lane.b32.xlu0 %v679, 120
    %v684 = vpop.permute.xlu0 %683
    %686 = vst.msk [vmem:[#allocation2 + $0x2] sm:$0x3] %vm680, %v684
    %687 = vrot.lane.b32.xlu0 %v679, 112
    %v688 = vpop.permute.xlu0 %687
    %690 = vst.msk [vmem:[#allocation2 + $0x4] sm:$0x3] %vm680, %v688
    %691 = vrot.lane.b32.xlu0 %v679, 104
    %v692 = vpop.permute.xlu0 %691
    %694 = vst.msk [vmem:[#allocation2 + $0x6] sm:$0x3] %vm680, %v692
    %695 = vrot.lane.b32.xlu0 %v679, 96
    %v696 = vpop.permute.xlu0 %695
    %698 = vst.msk [vmem:[#allocation2 + $0x8] sm:$0x3] %vm680, %v696
    %699 = vrot.lane.b32.xlu0 %v679, 88
    %v700 = vpop.permute.xlu0 %699
    %702 = vst.msk [vmem:[#allocation2 + $0xa] sm:$0x3] %vm680, %v700
    %703 = vrot.lane.b32.xlu0 %v679, 80
    %v704 = vpop.permute.xlu0 %703
    %706 = vst.msk [vmem:[#allocation2 + $0xc] sm:$0x3] %vm680, %v704
    %707 = vrot.lane.b32.xlu0 %v679, 72
    %v708 = vpop.permute.xlu0 %707
    %710 = vst.msk [vmem:[#allocation2 + $0xe] sm:$0x3] %vm680, %v708
    %711 = vrot.lane.b32.xlu0 %v679, 64
    %v712 = vpop.permute.xlu0 %711
    %714 = vst.msk [vmem:[#allocation2 + $0x10] sm:$0x3] %vm680, %v712
    %715 = vrot.lane.b32.xlu0 %v679, 56
    %v716 = vpop.permute.xlu0 %715
    %718 = vst.msk [vmem:[#allocation2 + $0x12] sm:$0x3] %vm680, %v716
    %719 = vrot.lane.b32.xlu0 %v679, 48
    %v720 = vpop.permute.xlu0 %719
    %722 = vst.msk [vmem:[#allocation2 + $0x14] sm:$0x3] %vm680, %v720
    %723 = vrot.lane.b32.xlu0 %v679, 40
    %v724 = vpop.permute.xlu0 %723
    %726 = vst.msk [vmem:[#allocation2 + $0x16] sm:$0x3] %vm680, %v724
    %727 = vrot.lane.b32.xlu0 %v679, 32
    %v728 = vpop.permute.xlu0 %727
    %730 = vst.msk [vmem:[#allocation2 + $0x18] sm:$0x3] %vm680, %v728
    %731 = vrot.lane.b32.xlu0 %v679, 24
    %v732 = vpop.permute.xlu0 %731
    %734 = vst.msk [vmem:[#allocation2 + $0x1a] sm:$0x3] %vm680, %v732
    %735 = vrot.lane.b32.xlu0 %v679, 16
    %v736 = vpop.permute.xlu0 %735
    %738 = vst.msk [vmem:[#allocation2 + $0x1c] sm:$0x3] %vm680, %v736
    %739 = vrot.lane.b32.xlu0 %v679, 8
    %v740 = vpop.permute.xlu0 %739
    %742 = vst.msk [vmem:[#allocation2 + $0x1e] sm:$0x3] %vm680, %v740
    %v743 = vld [vmem:[#allocation2] sm:$0xff]
    %v744 = vld [vmem:[#allocation2 + $0x8] sm:$0xff]
    %v745 = vld [vmem:[#allocation2 + $0x10] sm:$0xff]
    %v746 = vld [vmem:[#allocation2 + $0x18] sm:$0xff]
    %v747 = vld [vmem:[%s5] sm:$0xff]
    %v748 = vld [vmem:[#allocation6] sm:$0x1]
    %v750 = vperm.slane %v748, 0
    %v753 = vsel %vm226, %v743, 0
    %v756 = vsel %vm226, %v744, 0
    %v759 = vsel %vm226, %v745, 0
    %v762 = vsel %vm226, %v746, 0
    %764 = vmatpush.msra.mxu0 0.0
    %765 = vmatpush.msra.mxu0 0.0
    %766 = vmatpush.msra.mxu0 0.0
    %767 = vmatpush.msra.mxu0 0.0
    %768 = vmatpush.msra.mxu0 0.0
    %769 = vmatpush.msra.mxu0 0.0
    %770 = vmatpush.msra.mxu0 0.0
    %771 = vmatpush.msra.mxu0 0.0
    %772 = vmatpush.msra.mxu0 0.0
    %773 = vmatpush.msra.mxu0 0.0
    %774 = vmatpush.msra.mxu0 0.0
    %775 = vmatpush.msra.mxu0 0.0
    %776 = vmatpush.msra.mxu0 0.0
    %777 = vmatpush.msra.mxu0 0.0
    %778 = vmatpush.msra.mxu0 0.0
    %779 = vmatpush.msra.mxu0 %v747
    %780 = vmatmul.f32.gmra.mxu0 %v753
    %v781 = vpop.f32.mrf.mxu0
    %v782 = vadd.f32 %v750, %v781
    %783 = vmatmul.f32.gmra.mxu0 %v756
    %v784 = vpop.f32.mrf.mxu0
    %v785 = vadd.f32 %v750, %v784
    %786 = vmatmul.f32.gmra.mxu0 %v759
    %v787 = vpop.f32.mrf.mxu0
    %v788 = vadd.f32 %v750, %v787
    %789 = vmatmul.f32.gmra.mxu0 %v762
    %v790 = vpop.f32.mrf.mxu0
    %v791 = vadd.f32 %v750, %v790
    %792 = vdwg.mxu0
    %v793 = vmax.f32 %v782, 0.0
    %v794 = vmax.f32 %v785, 0.0
    %v795 = vmax.f32 %v788, 0.0
    %v796 = vmax.f32 %v791, 0.0
    %v797 = vld [vmem:[#allocation8] sm:$0xff]
    %v798 = vld [vmem:[#allocation8 + $0x8] sm:$0xff]
    %v799 = vld [vmem:[#allocation9] sm:$0x1]
    %v801 = vperm.slane %v799, 0
    %v804 = vsel %vm402, %v793, 0
    %v807 = vsel %vm402, %v794, 0
    %v810 = vsel %vm402, %v795, 0
    %v813 = vsel %vm402, %v796, 0
    %815 = vmatpush.msra.mxu0 0.0
    %816 = vmatpush.msra.mxu0 0.0
    %817 = vmatpush.msra.mxu0 0.0
    %818 = vmatpush.msra.mxu0 0.0
    %819 = vmatpush.msra.mxu0 0.0
    %820 = vmatpush.msra.mxu0 0.0
    %821 = vmatpush.msra.mxu0 0.0
    %822 = vmatpush.msra.mxu0 0.0
    %823 = vmatpush.msra.mxu0 0.0
    %824 = vmatpush.msra.mxu0 0.0
    %825 = vmatpush.msra.mxu0 0.0
    %826 = vmatpush.msra.mxu0 0.0
    %827 = vmatpush.msra.mxu0 0.0
    %828 = vmatpush.msra.mxu0 0.0
    %829 = vmatpush.msra.mxu0 %v798
    %830 = vmatpush.msra.mxu0 %v797
    %831 = vmatmul.f32.gmra.mxu0 %v804
    %v832 = vpop.f32.mrf.mxu0
    %v833 = vadd.f32 %v801, %v832
    %834 = vmatmul.f32.gmra.mxu0 %v807
    %v835 = vpop.f32.mrf.mxu0
    %v836 = vadd.f32 %v801, %v835
    %837 = vmatmul.f32.gmra.mxu0 %v810
    %v838 = vpop.f32.mrf.mxu0
    %v839 = vadd.f32 %v801, %v838
    %840 = vmatmul.f32.gmra.mxu0 %v813
    %v841 = vpop.f32.mrf.mxu0
    %v842 = vadd.f32 %v801, %v841
    %843 = vdwg.mxu0
    %v844 = vld [vmem:[#allocation11] sm:$0xff]
    %v845 = vld [vmem:[#allocation11 + $0x8] sm:$0xff]
    %v846 = vld [vmem:[#allocation11 + $0x10] sm:$0xff]
    %v847 = vld [vmem:[#allocation11 + $0x18] sm:$0xff]
    %v848 = vld [vmem:[#allocation12] sm:$0x1]
    %vm849 = vcmask 261120
    %v851 = vsel %vm849, 0.0, 0
    %853 = vmatpush.msra.mxu0 0.0
    %854 = vmatpush.msra.mxu0 0.0
    %855 = vmatpush.msra.mxu0 0.0
    %856 = vmatpush.msra.mxu0 0.0
    %857 = vmatpush.msra.mxu0 0.0
    %858 = vmatpush.msra.mxu0 0.0
    %859 = vmatpush.msra.mxu0 0.0
    %860 = vmatpush.msra.mxu0 0.0
    %861 = vmatpush.msra.mxu0 0.0
    %862 = vmatpush.msra.mxu0 0.0
    %863 = vmatpush.msra.mxu0 0.0
    %864 = vmatpush.msra.mxu0 0.0
    %865 = vmatpush.msra.mxu0 %v847
    %866 = vmatpush.msra.mxu0 %v846
    %867 = vmatpush.msra.mxu0 %v845
    %868 = vmatpush.msra.mxu0 %v844
    %869 = vmatmul.f32.gmra.mxu0 %v851
    %v870 = vpop.f32.mrf.mxu0
    %v871 = vadd.f32 0.0, %v870
    %872 = vdwg.mxu0
    %v873 = vadd.f32 %v833, %v871
    %v874 = vxor.u32 %v873, 2147483648
    %v875 = vmul.f32 %v874, 1.442695
    %v876 = vpow.pop %v875
    %v877 = vadd.f32 %v876, 1.0
    %v878 = vrcp.pop %v877
    %v879 = vmul.f32 %v877, %v878
    %v880 = vsub.f32 1.0, %v879
    %v881 = vmul.f32 %v878, %v880
    %v882 = vadd.f32 %v878, %v881
    %vm883 = vweird.f32 %v877
    %vm884 = vweird.f32 %v878
    %vm885 = vmor %vm883, %vm884
    %v886 = vsel %vm885, %v878, %v882
    %v887 = vand.u32 2147483647, %v877
    %vm888 = vcmp.eq.f32.partialorder %v887, 8.507059e+37
    %v889 = vand.u32 %v877, 2147483648
    %v890 = vor.u32 1.1754944e-38, %v889
    %v891 = vsel %vm888, %v890, %v886
    %v892 = vmul.f32 1.0, %v891
    %v894 = vperm.slane %v848, 0
    %895 = vrot.lane.b32.xlu0 %v894, 64
    %v896 = vpop.permute.xlu0 %895
    %v898 = vadd.f32 %v871, %v896
    %900 = vrot.lane.b32.xlu0 %v898, 64
    %v901 = vpop.permute.xlu0 %900
    %v903 = vmul.f32 %v892, %v901
    %905 = vrot.lane.b32.xlu0 %v903, 64
    %v906 = vpop.permute.xlu0 %905
    %v908 = vadd.f32 %v833, %v906
    %v909 = vtanh.pop %v908
    %v910 = vsub.f32 1.0, %v892
    %912 = vrot.lane.b32.xlu0 %v909, 96
    %v913 = vpop.permute.xlu0 %912
    %v915 = vmul.f32 %v910, %v913
    %v916 = vmul.f32 %v892, 0.0
    %v917 = vadd.f32 %v915, %v916
    %919 = vrot.lane.b32.xlu0 %v917, 96
    %v920 = vpop.permute.xlu0 %919
    %v921 = vsel %vm849, %v920, 0
    %923 = vmatpush.msra.mxu0 0.0
    %924 = vmatpush.msra.mxu0 0.0
    %925 = vmatpush.msra.mxu0 0.0
    %926 = vmatpush.msra.mxu0 0.0
    %927 = vmatpush.msra.mxu0 0.0
    %928 = vmatpush.msra.mxu0 0.0
    %929 = vmatpush.msra.mxu0 0.0
    %930 = vmatpush.msra.mxu0 0.0
    %931 = vmatpush.msra.mxu0 0.0
    %932 = vmatpush.msra.mxu0 0.0
    %933 = vmatpush.msra.mxu0 0.0
    %934 = vmatpush.msra.mxu0 0.0
    %935 = vmatpush.msra.mxu0 %v847
    %936 = vmatpush.msra.mxu0 %v846
    %937 = vmatpush.msra.mxu0 %v845
    %938 = vmatpush.msra.mxu0 %v844
    %939 = vmatmul.f32.gmra.mxu0 %v921
    %v940 = vpop.f32.mrf.mxu0
    %v941 = vadd.f32 0.0, %v940
    %942 = vdwg.mxu0
    %v944 = vrot.slane %v941, 6
    %v946 = vadd.f32 %v833, %v944
    %v947 = vxor.u32 %v946, 2147483648
    %v948 = vmul.f32 %v947, 1.442695
    %v949 = vpow.pop %v948
    %v950 = vadd.f32 %v949, 1.0
    %v951 = vrcp.pop %v950
    %v952 = vmul.f32 %v950, %v951
    %v953 = vsub.f32 1.0, %v952
    %v954 = vmul.f32 %v951, %v953
    %v955 = vadd.f32 %v951, %v954
    %vm956 = vweird.f32 %v950
    %vm957 = vweird.f32 %v951
    %vm958 = vmor %vm956, %vm957
    %v959 = vsel %vm958, %v951, %v955
    %v960 = vand.u32 2147483647, %v950
    %vm961 = vcmp.eq.f32.partialorder %v960, 8.507059e+37
    %v962 = vand.u32 %v950, 2147483648
    %v963 = vor.u32 1.1754944e-38, %v962
    %v964 = vsel %vm961, %v963, %v959
    %v965 = vmul.f32 1.0, %v964
    %v966 = vadd.f32 %v941, %v896
    %v968 = vrot.slane %v966, 6
    %969 = vrot.lane.b32.xlu0 %v968, 64
    %v970 = vpop.permute.xlu0 %969
    %v972 = vmul.f32 %v965, %v970
    %974 = vrot.lane.b32.xlu0 %v972, 64
    %v975 = vpop.permute.xlu0 %974
    %v977 = vadd.f32 %v833, %v975
    %v978 = vtanh.pop %v977
    %v979 = vsub.f32 1.0, %v965
    %981 = vrot.lane.b32.xlu0 %v978, 96
    %v982 = vpop.permute.xlu0 %981
    %v984 = vmul.f32 %v979, %v982
    %v985 = vrot.slane %v917, 6
    %v987 = vmul.f32 %v965, %v985
    %v988 = vadd.f32 %v984, %v987
    %v990 = vrot.slane %v988, 2
    %991 = vrot.lane.b32.xlu0 %v990, 96
    %v992 = vpop.permute.xlu0 %991
    %v993 = vsel %vm849, %v992, 0
    %995 = vmatpush.msra.mxu0 0.0
    %996 = vmatpush.msra.mxu0 0.0
    %997 = vmatpush.msra.mxu0 0.0
    %998 = vmatpush.msra.mxu0 0.0
    %999 = vmatpush.msra.mxu0 0.0
    %1000 = vmatpush.msra.mxu0 0.0
    %1001 = vmatpush.msra.mxu0 0.0
    %1002 = vmatpush.msra.mxu0 0.0
    %1003 = vmatpush.msra.mxu0 0.0
    %1004 = vmatpush.msra.mxu0 0.0
    %1005 = vmatpush.msra.mxu0 0.0
    %1006 = vmatpush.msra.mxu0 0.0
    %1007 = vmatpush.msra.mxu0 %v847
    %1008 = vmatpush.msra.mxu0 %v846
    %1009 = vmatpush.msra.mxu0 %v845
    %1010 = vmatpush.msra.mxu0 %v844
    %1011 = vmatmul.f32.gmra.mxu0 %v993
    %v1012 = vpop.f32.mrf.mxu0
    %v1013 = vadd.f32 0.0, %v1012
    %1014 = vdwg.mxu0
    %v1016 = vrot.slane %v1013, 4
    %v1018 = vadd.f32 %v833, %v1016
    %v1019 = vxor.u32 %v1018, 2147483648
    %v1020 = vmul.f32 %v1019, 1.442695
    %v1021 = vpow.pop %v1020
    %v1022 = vadd.f32 %v1021, 1.0
    %v1023 = vrcp.pop %v1022
    %v1024 = vmul.f32 %v1022, %v1023
    %v1025 = vsub.f32 1.0, %v1024
    %v1026 = vmul.f32 %v1023, %v1025
    %v1027 = vadd.f32 %v1023, %v1026
    %vm1028 = vweird.f32 %v1022
    %vm1029 = vweird.f32 %v1023
    %vm1030 = vmor %vm1028, %vm1029
    %v1031 = vsel %vm1030, %v1023, %v1027
    %v1032 = vand.u32 2147483647, %v1022
    %vm1033 = vcmp.eq.f32.partialorder %v1032, 8.507059e+37
    %v1034 = vand.u32 %v1022, 2147483648
    %v1035 = vor.u32 1.1754944e-38, %v1034
    %v1036 = vsel %vm1033, %v1035, %v1031
    %v1037 = vmul.f32 1.0, %v1036
    %v1038 = vadd.f32 %v1013, %v896
    %v1040 = vrot.slane %v1038, 4
    %1041 = vrot.lane.b32.xlu0 %v1040, 64
    %v1042 = vpop.permute.xlu0 %1041
    %v1044 = vmul.f32 %v1037, %v1042
    %1046 = vrot.lane.b32.xlu0 %v1044, 64
    %v1047 = vpop.permute.xlu0 %1046
    %v1049 = vadd.f32 %v833, %v1047
    %v1050 = vtanh.pop %v1049
    %v1051 = vsub.f32 1.0, %v1037
    %1053 = vrot.lane.b32.xlu0 %v1050, 96
    %v1054 = vpop.permute.xlu0 %1053
    %v1056 = vmul.f32 %v1051, %v1054
    %v1057 = vrot.slane %v988, 6
    %v1059 = vmul.f32 %v1037, %v1057
    %v1060 = vadd.f32 %v1056, %v1059
    %v1062 = vrot.slane %v1060, 4
    %1063 = vrot.lane.b32.xlu0 %v1062, 96
    %v1064 = vpop.permute.xlu0 %1063
    %v1065 = vsel %vm849, %v1064, 0
    %1067 = vmatpush.msra.mxu0 0.0
    %1068 = vmatpush.msra.mxu0 0.0
    %1069 = vmatpush.msra.mxu0 0.0
    %1070 = vmatpush.msra.mxu0 0.0
    %1071 = vmatpush.msra.mxu0 0.0
    %1072 = vmatpush.msra.mxu0 0.0
    %1073 = vmatpush.msra.mxu0 0.0
    %1074 = vmatpush.msra.mxu0 0.0
    %1075 = vmatpush.msra.mxu0 0.0
    %1076 = vmatpush.msra.mxu0 0.0
    %1077 = vmatpush.msra.mxu0 0.0
    %1078 = vmatpush.msra.mxu0 0.0
    %1079 = vmatpush.msra.mxu0 %v847
    %1080 = vmatpush.msra.mxu0 %v846
    %1081 = vmatpush.msra.mxu0 %v845
    %1082 = vmatpush.msra.mxu0 %v844
    %1083 = vmatmul.f32.gmra.mxu0 %v1065
    %v1084 = vpop.f32.mrf.mxu0
    %v1085 = vadd.f32 0.0, %v1084
    %1086 = vdwg.mxu0
    %v1088 = vrot.slane %v1085, 2
    %v1090 = vadd.f32 %v833, %v1088
    %v1091 = vxor.u32 %v1090, 2147483648
    %v1092 = vmul.f32 %v1091, 1.442695
    %v1093 = vpow.pop %v1092
    %v1094 = vadd.f32 %v1093, 1.0
    %v1095 = vrcp.pop %v1094
    %v1096 = vmul.f32 %v1094, %v1095
    %v1097 = vsub.f32 1.0, %v1096
    %v1098 = vmul.f32 %v1095, %v1097
    %v1099 = vadd.f32 %v1095, %v1098
    %vm1100 = vweird.f32 %v1094
    %vm1101 = vweird.f32 %v1095
    %vm1102 = vmor %vm1100, %vm1101
    %v1103 = vsel %vm1102, %v1095, %v1099
    %v1104 = vand.u32 2147483647, %v1094
    %vm1105 = vcmp.eq.f32.partialorder %v1104, 8.507059e+37
    %v1106 = vand.u32 %v1094, 2147483648
    %v1107 = vor.u32 1.1754944e-38, %v1106
    %v1108 = vsel %vm1105, %v1107, %v1103
    %v1109 = vmul.f32 1.0, %v1108
    %v1110 = vadd.f32 %v1085, %v896
    %v1112 = vrot.slane %v1110, 2
    %1113 = vrot.lane.b32.xlu0 %v1112, 64
    %v1114 = vpop.permute.xlu0 %1113
    %v1116 = vmul.f32 %v1109, %v1114
    %1118 = vrot.lane.b32.xlu0 %v1116, 64
    %v1119 = vpop.permute.xlu0 %1118
    %v1121 = vadd.f32 %v833, %v1119
    %v1122 = vtanh.pop %v1121
    %v1123 = vsub.f32 1.0, %v1109
    %1125 = vrot.lane.b32.xlu0 %v1122, 96
    %v1126 = vpop.permute.xlu0 %1125
    %v1128 = vmul.f32 %v1123, %v1126
    %v1129 = vrot.slane %v1060, 6
    %v1131 = vmul.f32 %v1109, %v1129
    %v1132 = vadd.f32 %v1128, %v1131
    %v1134 = vrot.slane %v1132, 6
    %1135 = vrot.lane.b32.xlu0 %v1134, 96
    %v1136 = vpop.permute.xlu0 %1135
    %v1137 = vsel %vm849, %v1136, 0
    %1139 = vmatpush.msra.mxu0 0.0
    %1140 = vmatpush.msra.mxu0 0.0
    %1141 = vmatpush.msra.mxu0 0.0
    %1142 = vmatpush.msra.mxu0 0.0
    %1143 = vmatpush.msra.mxu0 0.0
    %1144 = vmatpush.msra.mxu0 0.0
    %1145 = vmatpush.msra.mxu0 0.0
    %1146 = vmatpush.msra.mxu0 0.0
    %1147 = vmatpush.msra.mxu0 0.0
    %1148 = vmatpush.msra.mxu0 0.0
    %1149 = vmatpush.msra.mxu0 0.0
    %1150 = vmatpush.msra.mxu0 0.0
    %1151 = vmatpush.msra.mxu0 %v847
    %1152 = vmatpush.msra.mxu0 %v846
    %1153 = vmatpush.msra.mxu0 %v845
    %1154 = vmatpush.msra.mxu0 %v844
    %1155 = vmatmul.f32.gmra.mxu0 %v1137
    %v1156 = vpop.f32.mrf.mxu0
    %v1157 = vadd.f32 0.0, %v1156
    %1158 = vdwg.mxu0
    %v1159 = vadd.f32 %v836, %v1157
    %v1160 = vxor.u32 %v1159, 2147483648
    %v1161 = vmul.f32 %v1160, 1.442695
    %v1162 = vpow.pop %v1161
    %v1163 = vadd.f32 %v1162, 1.0
    %v1164 = vrcp.pop %v1163
    %v1165 = vmul.f32 %v1163, %v1164
    %v1166 = vsub.f32 1.0, %v1165
    %v1167 = vmul.f32 %v1164, %v1166
    %v1168 = vadd.f32 %v1164, %v1167
    %vm1169 = vweird.f32 %v1163
    %vm1170 = vweird.f32 %v1164
    %vm1171 = vmor %vm1169, %vm1170
    %v1172 = vsel %vm1171, %v1164, %v1168
    %v1173 = vand.u32 2147483647, %v1163
    %vm1174 = vcmp.eq.f32.partialorder %v1173, 8.507059e+37
    %v1175 = vand.u32 %v1163, 2147483648
    %v1176 = vor.u32 1.1754944e-38, %v1175
    %v1177 = vsel %vm1174, %v1176, %v1172
    %v1178 = vmul.f32 1.0, %v1177
    %v1179 = vadd.f32 %v1157, %v896
    %1181 = vrot.lane.b32.xlu0 %v1179, 64
    %v1182 = vpop.permute.xlu0 %1181
    %v1184 = vmul.f32 %v1178, %v1182
    %1186 = vrot.lane.b32.xlu0 %v1184, 64
    %v1187 = vpop.permute.xlu0 %1186
    %v1189 = vadd.f32 %v836, %v1187
    %v1190 = vtanh.pop %v1189
    %v1191 = vsub.f32 1.0, %v1178
    %1193 = vrot.lane.b32.xlu0 %v1190, 96
    %v1194 = vpop.permute.xlu0 %1193
    %v1196 = vmul.f32 %v1191, %v1194
    %v1198 = vmul.f32 %v1178, %v1134
    %v1199 = vadd.f32 %v1196, %v1198
    %1201 = vrot.lane.b32.xlu0 %v1199, 96
    %v1202 = vpop.permute.xlu0 %1201
    %v1203 = vsel %vm849, %v1202, 0
    %1205 = vmatpush.msra.mxu0 0.0
    %1206 = vmatpush.msra.mxu0 0.0
    %1207 = vmatpush.msra.mxu0 0.0
    %1208 = vmatpush.msra.mxu0 0.0
    %1209 = vmatpush.msra.mxu0 0.0
    %1210 = vmatpush.msra.mxu0 0.0
    %1211 = vmatpush.msra.mxu0 0.0
    %1212 = vmatpush.msra.mxu0 0.0
    %1213 = vmatpush.msra.mxu0 0.0
    %1214 = vmatpush.msra.mxu0 0.0
    %1215 = vmatpush.msra.mxu0 0.0
    %1216 = vmatpush.msra.mxu0 0.0
    %1217 = vmatpush.msra.mxu0 %v847
    %1218 = vmatpush.msra.mxu0 %v846
    %1219 = vmatpush.msra.mxu0 %v845
    %1220 = vmatpush.msra.mxu0 %v844
    %1221 = vmatmul.f32.gmra.mxu0 %v1203
    %v1222 = vpop.f32.mrf.mxu0
    %v1223 = vadd.f32 0.0, %v1222
    %1224 = vdwg.mxu0
    %v1226 = vrot.slane %v1223, 6
    %v1228 = vadd.f32 %v836, %v1226
    %v1229 = vxor.u32 %v1228, 2147483648
    %v1230 = vmul.f32 %v1229, 1.442695
    %v1231 = vpow.pop %v1230
    %v1232 = vadd.f32 %v1231, 1.0
    %v1233 = vrcp.pop %v1232
    %v1234 = vmul.f32 %v1232, %v1233
    %v1235 = vsub.f32 1.0, %v1234
    %v1236 = vmul.f32 %v1233, %v1235
    %v1237 = vadd.f32 %v1233, %v1236
    %vm1238 = vweird.f32 %v1232
    %vm1239 = vweird.f32 %v1233
    %vm1240 = vmor %vm1238, %vm1239
    %v1241 = vsel %vm1240, %v1233, %v1237
    %v1242 = vand.u32 2147483647, %v1232
    %vm1243 = vcmp.eq.f32.partialorder %v1242, 8.507059e+37
    %v1244 = vand.u32 %v1232, 2147483648
    %v1245 = vor.u32 1.1754944e-38, %v1244
    %v1246 = vsel %vm1243, %v1245, %v1241
    %v1247 = vmul.f32 1.0, %v1246
    %v1248 = vadd.f32 %v1223, %v896
    %v1250 = vrot.slane %v1248, 6
    %1251 = vrot.lane.b32.xlu0 %v1250, 64
    %v1252 = vpop.permute.xlu0 %1251
    %v1254 = vmul.f32 %v1247, %v1252
    %1256 = vrot.lane.b32.xlu0 %v1254, 64
    %v1257 = vpop.permute.xlu0 %1256
    %v1259 = vadd.f32 %v836, %v1257
    %v1260 = vtanh.pop %v1259
    %v1261 = vsub.f32 1.0, %v1247
    %1263 = vrot.lane.b32.xlu0 %v1260, 96
    %v1264 = vpop.permute.xlu0 %1263
    %v1266 = vmul.f32 %v1261, %v1264
    %v1267 = vrot.slane %v1199, 6
    %v1269 = vmul.f32 %v1247, %v1267
    %v1270 = vadd.f32 %v1266, %v1269
    %v1272 = vrot.slane %v1270, 2
    %1273 = vrot.lane.b32.xlu0 %v1272, 96
    %v1274 = vpop.permute.xlu0 %1273
    %v1275 = vsel %vm849, %v1274, 0
    %1277 = vmatpush.msra.mxu0 0.0
    %1278 = vmatpush.msra.mxu0 0.0
    %1279 = vmatpush.msra.mxu0 0.0
    %1280 = vmatpush.msra.mxu0 0.0
    %1281 = vmatpush.msra.mxu0 0.0
    %1282 = vmatpush.msra.mxu0 0.0
    %1283 = vmatpush.msra.mxu0 0.0
    %1284 = vmatpush.msra.mxu0 0.0
    %1285 = vmatpush.msra.mxu0 0.0
    %1286 = vmatpush.msra.mxu0 0.0
    %1287 = vmatpush.msra.mxu0 0.0
    %1288 = vmatpush.msra.mxu0 0.0
    %1289 = vmatpush.msra.mxu0 %v847
    %1290 = vmatpush.msra.mxu0 %v846
    %1291 = vmatpush.msra.mxu0 %v845
    %1292 = vmatpush.msra.mxu0 %v844
    %1293 = vmatmul.f32.gmra.mxu0 %v1275
    %v1294 = vpop.f32.mrf.mxu0
    %v1295 = vadd.f32 0.0, %v1294
    %1296 = vdwg.mxu0
    %v1298 = vrot.slane %v1295, 4
    %v1300 = vadd.f32 %v836, %v1298
    %v1301 = vxor.u32 %v1300, 2147483648
    %v1302 = vmul.f32 %v1301, 1.442695
    %v1303 = vpow.pop %v1302
    %v1304 = vadd.f32 %v1303, 1.0
    %v1305 = vrcp.pop %v1304
    %v1306 = vmul.f32 %v1304, %v1305
    %v1307 = vsub.f32 1.0, %v1306
    %v1308 = vmul.f32 %v1305, %v1307
    %v1309 = vadd.f32 %v1305, %v1308
    %vm1310 = vweird.f32 %v1304
    %vm1311 = vweird.f32 %v1305
    %vm1312 = vmor %vm1310, %vm1311
    %v1313 = vsel %vm1312, %v1305, %v1309
    %v1314 = vand.u32 2147483647, %v1304
    %vm1315 = vcmp.eq.f32.partialorder %v1314, 8.507059e+37
    %v1316 = vand.u32 %v1304, 2147483648
    %v1317 = vor.u32 1.1754944e-38, %v1316
    %v1318 = vsel %vm1315, %v1317, %v1313
    %v1319 = vmul.f32 1.0, %v1318
    %v1320 = vadd.f32 %v1295, %v896
    %v1322 = vrot.slane %v1320, 4
    %1323 = vrot.lane.b32.xlu0 %v1322, 64
    %v1324 = vpop.permute.xlu0 %1323
    %v1326 = vmul.f32 %v1319, %v1324
    %1328 = vrot.lane.b32.xlu0 %v1326, 64
    %v1329 = vpop.permute.xlu0 %1328
    %v1331 = vadd.f32 %v836, %v1329
    %v1332 = vtanh.pop %v1331
    %v1333 = vsub.f32 1.0, %v1319
    %1335 = vrot.lane.b32.xlu0 %v1332, 96
    %v1336 = vpop.permute.xlu0 %1335
    %v1338 = vmul.f32 %v1333, %v1336
    %v1339 = vrot.slane %v1270, 6
    %v1341 = vmul.f32 %v1319, %v1339
    %v1342 = vadd.f32 %v1338, %v1341
    %v1344 = vrot.slane %v1342, 4
    %1345 = vrot.lane.b32.xlu0 %v1344, 96
    %v1346 = vpop.permute.xlu0 %1345
    %v1347 = vsel %vm849, %v1346, 0
    %1349 = vmatpush.msra.mxu0 0.0
    %1350 = vmatpush.msra.mxu0 0.0
    %1351 = vmatpush.msra.mxu0 0.0
    %1352 = vmatpush.msra.mxu0 0.0
    %1353 = vmatpush.msra.mxu0 0.0
    %1354 = vmatpush.msra.mxu0 0.0
    %1355 = vmatpush.msra.mxu0 0.0
    %1356 = vmatpush.msra.mxu0 0.0
    %1357 = vmatpush.msra.mxu0 0.0
    %1358 = vmatpush.msra.mxu0 0.0
    %1359 = vmatpush.msra.mxu0 0.0
    %1360 = vmatpush.msra.mxu0 0.0
    %1361 = vmatpush.msra.mxu0 %v847
    %1362 = vmatpush.msra.mxu0 %v846
    %1363 = vmatpush.msra.mxu0 %v845
    %1364 = vmatpush.msra.mxu0 %v844
    %1365 = vmatmul.f32.gmra.mxu0 %v1347
    %v1366 = vpop.f32.mrf.mxu0
    %v1367 = vadd.f32 0.0, %v1366
    %1368 = vdwg.mxu0
    %v1370 = vrot.slane %v1367, 2
    %v1372 = vadd.f32 %v836, %v1370
    %v1373 = vxor.u32 %v1372, 2147483648
    %v1374 = vmul.f32 %v1373, 1.442695
    %v1375 = vpow.pop %v1374
    %v1376 = vadd.f32 %v1375, 1.0
    %v1377 = vrcp.pop %v1376
    %v1378 = vmul.f32 %v1376, %v1377
    %v1379 = vsub.f32 1.0, %v1378
    %v1380 = vmul.f32 %v1377, %v1379
    %v1381 = vadd.f32 %v1377, %v1380
    %vm1382 = vweird.f32 %v1376
    %vm1383 = vweird.f32 %v1377
    %vm1384 = vmor %vm1382, %vm1383
    %v1385 = vsel %vm1384, %v1377, %v1381
    %v1386 = vand.u32 2147483647, %v1376
    %vm1387 = vcmp.eq.f32.partialorder %v1386, 8.507059e+37
    %v1388 = vand.u32 %v1376, 2147483648
    %v1389 = vor.u32 1.1754944e-38, %v1388
    %v1390 = vsel %vm1387, %v1389, %v1385
    %v1391 = vmul.f32 1.0, %v1390
    %v1392 = vadd.f32 %v1367, %v896
    %v1394 = vrot.slane %v1392, 2
    %1395 = vrot.lane.b32.xlu0 %v1394, 64
    %v1396 = vpop.permute.xlu0 %1395
    %v1398 = vmul.f32 %v1391, %v1396
    %1400 = vrot.lane.b32.xlu0 %v1398, 64
    %v1401 = vpop.permute.xlu0 %1400
    %v1403 = vadd.f32 %v836, %v1401
    %v1404 = vtanh.pop %v1403
    %v1405 = vsub.f32 1.0, %v1391
    %1407 = vrot.lane.b32.xlu0 %v1404, 96
    %v1408 = vpop.permute.xlu0 %1407
    %v1410 = vmul.f32 %v1405, %v1408
    %v1411 = vrot.slane %v1342, 6
    %v1413 = vmul.f32 %v1391, %v1411
    %v1414 = vadd.f32 %v1410, %v1413
    %v1416 = vrot.slane %v1414, 6
    %1417 = vrot.lane.b32.xlu0 %v1416, 96
    %v1418 = vpop.permute.xlu0 %1417
    %v1419 = vsel %vm849, %v1418, 0
    %1421 = vmatpush.msra.mxu0 0.0
    %1422 = vmatpush.msra.mxu0 0.0
    %1423 = vmatpush.msra.mxu0 0.0
    %1424 = vmatpush.msra.mxu0 0.0
    %1425 = vmatpush.msra.mxu0 0.0
    %1426 = vmatpush.msra.mxu0 0.0
    %1427 = vmatpush.msra.mxu0 0.0
    %1428 = vmatpush.msra.mxu0 0.0
    %1429 = vmatpush.msra.mxu0 0.0
    %1430 = vmatpush.msra.mxu0 0.0
    %1431 = vmatpush.msra.mxu0 0.0
    %1432 = vmatpush.msra.mxu0 0.0
    %1433 = vmatpush.msra.mxu0 %v847
    %1434 = vmatpush.msra.mxu0 %v846
    %1435 = vmatpush.msra.mxu0 %v845
    %1436 = vmatpush.msra.mxu0 %v844
    %1437 = vmatmul.f32.gmra.mxu0 %v1419
    %v1438 = vpop.f32.mrf.mxu0
    %v1439 = vadd.f32 0.0, %v1438
    %1440 = vdwg.mxu0
    %v1441 = vadd.f32 %v839, %v1439
    %v1442 = vxor.u32 %v1441, 2147483648
    %v1443 = vmul.f32 %v1442, 1.442695
    %v1444 = vpow.pop %v1443
    %v1445 = vadd.f32 %v1444, 1.0
    %v1446 = vrcp.pop %v1445
    %v1447 = vmul.f32 %v1445, %v1446
    %v1448 = vsub.f32 1.0, %v1447
    %v1449 = vmul.f32 %v1446, %v1448
    %v1450 = vadd.f32 %v1446, %v1449
    %vm1451 = vweird.f32 %v1445
    %vm1452 = vweird.f32 %v1446
    %vm1453 = vmor %vm1451, %vm1452
    %v1454 = vsel %vm1453, %v1446, %v1450
    %v1455 = vand.u32 2147483647, %v1445
    %vm1456 = vcmp.eq.f32.partialorder %v1455, 8.507059e+37
    %v1457 = vand.u32 %v1445, 2147483648
    %v1458 = vor.u32 1.1754944e-38, %v1457
    %v1459 = vsel %vm1456, %v1458, %v1454
    %v1460 = vmul.f32 1.0, %v1459
    %v1461 = vadd.f32 %v1439, %v896
    %1463 = vrot.lane.b32.xlu0 %v1461, 64
    %v1464 = vpop.permute.xlu0 %1463
    %v1466 = vmul.f32 %v1460, %v1464
    %1468 = vrot.lane.b32.xlu0 %v1466, 64
    %v1469 = vpop.permute.xlu0 %1468
    %v1471 = vadd.f32 %v839, %v1469
    %v1472 = vtanh.pop %v1471
    %v1473 = vsub.f32 1.0, %v1460
    %1475 = vrot.lane.b32.xlu0 %v1472, 96
    %v1476 = vpop.permute.xlu0 %1475
    %v1478 = vmul.f32 %v1473, %v1476
    %v1480 = vmul.f32 %v1460, %v1416
    %v1481 = vadd.f32 %v1478, %v1480
    %1483 = vrot.lane.b32.xlu0 %v1481, 96
    %v1484 = vpop.permute.xlu0 %1483
    %v1485 = vsel %vm849, %v1484, 0
    %1487 = vmatpush.msra.mxu0 0.0
    %1488 = vmatpush.msra.mxu0 0.0
    %1489 = vmatpush.msra.mxu0 0.0
    %1490 = vmatpush.msra.mxu0 0.0
    %1491 = vmatpush.msra.mxu0 0.0
    %1492 = vmatpush.msra.mxu0 0.0
    %1493 = vmatpush.msra.mxu0 0.0
    %1494 = vmatpush.msra.mxu0 0.0
    %1495 = vmatpush.msra.mxu0 0.0
    %1496 = vmatpush.msra.mxu0 0.0
    %1497 = vmatpush.msra.mxu0 0.0
    %1498 = vmatpush.msra.mxu0 0.0
    %1499 = vmatpush.msra.mxu0 %v847
    %1500 = vmatpush.msra.mxu0 %v846
    %1501 = vmatpush.msra.mxu0 %v845
    %1502 = vmatpush.msra.mxu0 %v844
    %1503 = vmatmul.f32.gmra.mxu0 %v1485
    %v1504 = vpop.f32.mrf.mxu0
    %v1505 = vadd.f32 0.0, %v1504
    %1506 = vdwg.mxu0
    %v1508 = vrot.slane %v1505, 6
    %v1510 = vadd.f32 %v839, %v1508
    %v1511 = vxor.u32 %v1510, 2147483648
    %v1512 = vmul.f32 %v1511, 1.442695
    %v1513 = vpow.pop %v1512
    %v1514 = vadd.f32 %v1513, 1.0
    %v1515 = vrcp.pop %v1514
    %v1516 = vmul.f32 %v1514, %v1515
    %v1517 = vsub.f32 1.0, %v1516
    %v1518 = vmul.f32 %v1515, %v1517
    %v1519 = vadd.f32 %v1515, %v1518
    %vm1520 = vweird.f32 %v1514
    %vm1521 = vweird.f32 %v1515
    %vm1522 = vmor %vm1520, %vm1521
    %v1523 = vsel %vm1522, %v1515, %v1519
    %v1524 = vand.u32 2147483647, %v1514
    %vm1525 = vcmp.eq.f32.partialorder %v1524, 8.507059e+37
    %v1526 = vand.u32 %v1514, 2147483648
    %v1527 = vor.u32 1.1754944e-38, %v1526
    %v1528 = vsel %vm1525, %v1527, %v1523
    %v1529 = vmul.f32 1.0, %v1528
    %v1530 = vadd.f32 %v1505, %v896
    %v1532 = vrot.slane %v1530, 6
    %1533 = vrot.lane.b32.xlu0 %v1532, 64
    %v1534 = vpop.permute.xlu0 %1533
    %v1536 = vmul.f32 %v1529, %v1534
    %1538 = vrot.lane.b32.xlu0 %v1536, 64
    %v1539 = vpop.permute.xlu0 %1538
    %v1541 = vadd.f32 %v839, %v1539
    %v1542 = vtanh.pop %v1541
    %v1543 = vsub.f32 1.0, %v1529
    %1545 = vrot.lane.b32.xlu0 %v1542, 96
    %v1546 = vpop.permute.xlu0 %1545
    %v1548 = vmul.f32 %v1543, %v1546
    %v1549 = vrot.slane %v1481, 6
    %v1551 = vmul.f32 %v1529, %v1549
    %v1552 = vadd.f32 %v1548, %v1551
    %v1554 = vrot.slane %v1552, 2
    %1555 = vrot.lane.b32.xlu0 %v1554, 96
    %v1556 = vpop.permute.xlu0 %1555
    %v1557 = vsel %vm849, %v1556, 0
    %1559 = vmatpush.msra.mxu0 0.0
    %1560 = vmatpush.msra.mxu0 0.0
    %1561 = vmatpush.msra.mxu0 0.0
    %1562 = vmatpush.msra.mxu0 0.0
    %1563 = vmatpush.msra.mxu0 0.0
    %1564 = vmatpush.msra.mxu0 0.0
    %1565 = vmatpush.msra.mxu0 0.0
    %1566 = vmatpush.msra.mxu0 0.0
    %1567 = vmatpush.msra.mxu0 0.0
    %1568 = vmatpush.msra.mxu0 0.0
    %1569 = vmatpush.msra.mxu0 0.0
    %1570 = vmatpush.msra.mxu0 0.0
    %1571 = vmatpush.msra.mxu0 %v847
    %1572 = vmatpush.msra.mxu0 %v846
    %1573 = vmatpush.msra.mxu0 %v845
    %1574 = vmatpush.msra.mxu0 %v844
    %1575 = vmatmul.f32.gmra.mxu0 %v1557
    %v1576 = vpop.f32.mrf.mxu0
    %v1577 = vadd.f32 0.0, %v1576
    %1578 = vdwg.mxu0
    %v1580 = vrot.slane %v1577, 4
    %v1582 = vadd.f32 %v839, %v1580
    %v1583 = vxor.u32 %v1582, 2147483648
    %v1584 = vmul.f32 %v1583, 1.442695
    %v1585 = vpow.pop %v1584
    %v1586 = vadd.f32 %v1585, 1.0
    %v1587 = vrcp.pop %v1586
    %v1588 = vmul.f32 %v1586, %v1587
    %v1589 = vsub.f32 1.0, %v1588
    %v1590 = vmul.f32 %v1587, %v1589
    %v1591 = vadd.f32 %v1587, %v1590
    %vm1592 = vweird.f32 %v1586
    %vm1593 = vweird.f32 %v1587
    %vm1594 = vmor %vm1592, %vm1593
    %v1595 = vsel %vm1594, %v1587, %v1591
    %v1596 = vand.u32 2147483647, %v1586
    %vm1597 = vcmp.eq.f32.partialorder %v1596, 8.507059e+37
    %v1598 = vand.u32 %v1586, 2147483648
    %v1599 = vor.u32 1.1754944e-38, %v1598
    %v1600 = vsel %vm1597, %v1599, %v1595
    %v1601 = vmul.f32 1.0, %v1600
    %v1602 = vadd.f32 %v1577, %v896
    %v1604 = vrot.slane %v1602, 4
    %1605 = vrot.lane.b32.xlu0 %v1604, 64
    %v1606 = vpop.permute.xlu0 %1605
    %v1608 = vmul.f32 %v1601, %v1606
    %1610 = vrot.lane.b32.xlu0 %v1608, 64
    %v1611 = vpop.permute.xlu0 %1610
    %v1613 = vadd.f32 %v839, %v1611
    %v1614 = vtanh.pop %v1613
    %v1615 = vsub.f32 1.0, %v1601
    %1617 = vrot.lane.b32.xlu0 %v1614, 96
    %v1618 = vpop.permute.xlu0 %1617
    %v1620 = vmul.f32 %v1615, %v1618
    %v1621 = vrot.slane %v1552, 6
    %v1623 = vmul.f32 %v1601, %v1621
    %v1624 = vadd.f32 %v1620, %v1623
    %v1626 = vrot.slane %v1624, 4
    %1627 = vrot.lane.b32.xlu0 %v1626, 96
    %v1628 = vpop.permute.xlu0 %1627
    %v1629 = vsel %vm849, %v1628, 0
    %1631 = vmatpush.msra.mxu0 0.0
    %1632 = vmatpush.msra.mxu0 0.0
    %1633 = vmatpush.msra.mxu0 0.0
    %1634 = vmatpush.msra.mxu0 0.0
    %1635 = vmatpush.msra.mxu0 0.0
    %1636 = vmatpush.msra.mxu0 0.0
    %1637 = vmatpush.msra.mxu0 0.0
    %1638 = vmatpush.msra.mxu0 0.0
    %1639 = vmatpush.msra.mxu0 0.0
    %1640 = vmatpush.msra.mxu0 0.0
    %1641 = vmatpush.msra.mxu0 0.0
    %1642 = vmatpush.msra.mxu0 0.0
    %1643 = vmatpush.msra.mxu0 %v847
    %1644 = vmatpush.msra.mxu0 %v846
    %1645 = vmatpush.msra.mxu0 %v845
    %1646 = vmatpush.msra.mxu0 %v844
    %1647 = vmatmul.f32.gmra.mxu0 %v1629
    %v1648 = vpop.f32.mrf.mxu0
    %v1649 = vadd.f32 0.0, %v1648
    %1650 = vdwg.mxu0
    %v1652 = vrot.slane %v1649, 2
    %v1654 = vadd.f32 %v839, %v1652
    %v1655 = vxor.u32 %v1654, 2147483648
    %v1656 = vmul.f32 %v1655, 1.442695
    %v1657 = vpow.pop %v1656
    %v1658 = vadd.f32 %v1657, 1.0
    %v1659 = vrcp.pop %v1658
    %v1660 = vmul.f32 %v1658, %v1659
    %v1661 = vsub.f32 1.0, %v1660
    %v1662 = vmul.f32 %v1659, %v1661
    %v1663 = vadd.f32 %v1659, %v1662
    %vm1664 = vweird.f32 %v1658
    %vm1665 = vweird.f32 %v1659
    %vm1666 = vmor %vm1664, %vm1665
    %v1667 = vsel %vm1666, %v1659, %v1663
    %v1668 = vand.u32 2147483647, %v1658
    %vm1669 = vcmp.eq.f32.partialorder %v1668, 8.507059e+37
    %v1670 = vand.u32 %v1658, 2147483648
    %v1671 = vor.u32 1.1754944e-38, %v1670
    %v1672 = vsel %vm1669, %v1671, %v1667
    %v1673 = vmul.f32 1.0, %v1672
    %v1674 = vadd.f32 %v1649, %v896
    %v1676 = vrot.slane %v1674, 2
    %1677 = vrot.lane.b32.xlu0 %v1676, 64
    %v1678 = vpop.permute.xlu0 %1677
    %v1680 = vmul.f32 %v1673, %v1678
    %1682 = vrot.lane.b32.xlu0 %v1680, 64
    %v1683 = vpop.permute.xlu0 %1682
    %v1685 = vadd.f32 %v839, %v1683
    %v1686 = vtanh.pop %v1685
    %v1687 = vsub.f32 1.0, %v1673
    %1689 = vrot.lane.b32.xlu0 %v1686, 96
    %v1690 = vpop.permute.xlu0 %1689
    %v1692 = vmul.f32 %v1687, %v1690
    %v1693 = vrot.slane %v1624, 6
    %v1695 = vmul.f32 %v1673, %v1693
    %v1696 = vadd.f32 %v1692, %v1695
    %v1698 = vrot.slane %v1696, 6
    %1699 = vrot.lane.b32.xlu0 %v1698, 96
    %v1700 = vpop.permute.xlu0 %1699
    %v1701 = vsel %vm849, %v1700, 0
    %1703 = vmatpush.msra.mxu0 0.0
    %1704 = vmatpush.msra.mxu0 0.0
    %1705 = vmatpush.msra.mxu0 0.0
    %1706 = vmatpush.msra.mxu0 0.0
    %1707 = vmatpush.msra.mxu0 0.0
    %1708 = vmatpush.msra.mxu0 0.0
    %1709 = vmatpush.msra.mxu0 0.0
    %1710 = vmatpush.msra.mxu0 0.0
    %1711 = vmatpush.msra.mxu0 0.0
    %1712 = vmatpush.msra.mxu0 0.0
    %1713 = vmatpush.msra.mxu0 0.0
    %1714 = vmatpush.msra.mxu0 0.0
    %1715 = vmatpush.msra.mxu0 %v847
    %1716 = vmatpush.msra.mxu0 %v846
    %1717 = vmatpush.msra.mxu0 %v845
    %1718 = vmatpush.msra.mxu0 %v844
    %1719 = vmatmul.f32.gmra.mxu0 %v1701
    %v1720 = vpop.f32.mrf.mxu0
    %v1721 = vadd.f32 0.0, %v1720
    %1722 = vdwg.mxu0
    %v1723 = vadd.f32 %v842, %v1721
    %v1724 = vxor.u32 %v1723, 2147483648
    %v1725 = vmul.f32 %v1724, 1.442695
    %v1726 = vpow.pop %v1725
    %v1727 = vadd.f32 %v1726, 1.0
    %v1728 = vrcp.pop %v1727
    %v1729 = vmul.f32 %v1727, %v1728
    %v1730 = vsub.f32 1.0, %v1729
    %v1731 = vmul.f32 %v1728, %v1730
    %v1732 = vadd.f32 %v1728, %v1731
    %vm1733 = vweird.f32 %v1727
    %vm1734 = vweird.f32 %v1728
    %vm1735 = vmor %vm1733, %vm1734
    %v1736 = vsel %vm1735, %v1728, %v1732
    %v1737 = vand.u32 2147483647, %v1727
    %vm1738 = vcmp.eq.f32.partialorder %v1737, 8.507059e+37
    %v1739 = vand.u32 %v1727, 2147483648
    %v1740 = vor.u32 1.1754944e-38, %v1739
    %v1741 = vsel %vm1738, %v1740, %v1736
    %v1742 = vmul.f32 1.0, %v1741
    %v1743 = vadd.f32 %v1721, %v896
    %1745 = vrot.lane.b32.xlu0 %v1743, 64
    %v1746 = vpop.permute.xlu0 %1745
    %v1748 = vmul.f32 %v1742, %v1746
    %1750 = vrot.lane.b32.xlu0 %v1748, 64
    %v1751 = vpop.permute.xlu0 %1750
    %v1753 = vadd.f32 %v842, %v1751
    %v1754 = vtanh.pop %v1753
    %v1755 = vsub.f32 1.0, %v1742
    %1757 = vrot.lane.b32.xlu0 %v1754, 96
    %v1758 = vpop.permute.xlu0 %1757
    %v1760 = vmul.f32 %v1755, %v1758
    %v1762 = vmul.f32 %v1742, %v1698
    %v1763 = vadd.f32 %v1760, %v1762
    %1765 = vrot.lane.b32.xlu0 %v1763, 96
    %v1766 = vpop.permute.xlu0 %1765
    %v1767 = vsel %vm849, %v1766, 0
    %1769 = vmatpush.msra.mxu0 0.0
    %1770 = vmatpush.msra.mxu0 0.0
    %1771 = vmatpush.msra.mxu0 0.0
    %1772 = vmatpush.msra.mxu0 0.0
    %1773 = vmatpush.msra.mxu0 0.0
    %1774 = vmatpush.msra.mxu0 0.0
    %1775 = vmatpush.msra.mxu0 0.0
    %1776 = vmatpush.msra.mxu0 0.0
    %1777 = vmatpush.msra.mxu0 0.0
    %1778 = vmatpush.msra.mxu0 0.0
    %1779 = vmatpush.msra.mxu0 0.0
    %1780 = vmatpush.msra.mxu0 0.0
    %1781 = vmatpush.msra.mxu0 %v847
    %1782 = vmatpush.msra.mxu0 %v846
    %1783 = vmatpush.msra.mxu0 %v845
    %1784 = vmatpush.msra.mxu0 %v844
    %1785 = vmatmul.f32.gmra.mxu0 %v1767
    %v1786 = vpop.f32.mrf.mxu0
    %v1787 = vadd.f32 0.0, %v1786
    %1788 = vdwg.mxu0
    %v1790 = vrot.slane %v1787, 6
    %v1792 = vadd.f32 %v842, %v1790
    %v1793 = vxor.u32 %v1792, 2147483648
    %v1794 = vmul.f32 %v1793, 1.442695
    %v1795 = vpow.pop %v1794
    %v1796 = vadd.f32 %v1795, 1.0
    %v1797 = vrcp.pop %v1796
    %v1798 = vmul.f32 %v1796, %v1797
    %v1799 = vsub.f32 1.0, %v1798
    %v1800 = vmul.f32 %v1797, %v1799
    %v1801 = vadd.f32 %v1797, %v1800
    %vm1802 = vweird.f32 %v1796
    %vm1803 = vweird.f32 %v1797
    %vm1804 = vmor %vm1802, %vm1803
    %v1805 = vsel %vm1804, %v1797, %v1801
    %v1806 = vand.u32 2147483647, %v1796
    %vm1807 = vcmp.eq.f32.partialorder %v1806, 8.507059e+37
    %v1808 = vand.u32 %v1796, 2147483648
    %v1809 = vor.u32 1.1754944e-38, %v1808
    %v1810 = vsel %vm1807, %v1809, %v1805
    %v1811 = vmul.f32 1.0, %v1810
    %v1812 = vadd.f32 %v1787, %v896
    %v1814 = vrot.slane %v1812, 6
    %1815 = vrot.lane.b32.xlu0 %v1814, 64
    %v1816 = vpop.permute.xlu0 %1815
    %v1818 = vmul.f32 %v1811, %v1816
    %1820 = vrot.lane.b32.xlu0 %v1818, 64
    %v1821 = vpop.permute.xlu0 %1820
    %v1823 = vadd.f32 %v842, %v1821
    %v1824 = vtanh.pop %v1823
    %v1825 = vsub.f32 1.0, %v1811
    %1827 = vrot.lane.b32.xlu0 %v1824, 96
    %v1828 = vpop.permute.xlu0 %1827
    %v1830 = vmul.f32 %v1825, %v1828
    %v1831 = vrot.slane %v1763, 6
    %v1833 = vmul.f32 %v1811, %v1831
    %v1834 = vadd.f32 %v1830, %v1833
    %v1836 = vrot.slane %v1834, 2
    %1837 = vrot.lane.b32.xlu0 %v1836, 96
    %v1838 = vpop.permute.xlu0 %1837
    %v1839 = vsel %vm849, %v1838, 0
    %1841 = vmatpush.msra.mxu0 0.0
    %1842 = vmatpush.msra.mxu0 0.0
    %1843 = vmatpush.msra.mxu0 0.0
    %1844 = vmatpush.msra.mxu0 0.0
    %1845 = vmatpush.msra.mxu0 0.0
    %1846 = vmatpush.msra.mxu0 0.0
    %1847 = vmatpush.msra.mxu0 0.0
    %1848 = vmatpush.msra.mxu0 0.0
    %1849 = vmatpush.msra.mxu0 0.0
    %1850 = vmatpush.msra.mxu0 0.0
    %1851 = vmatpush.msra.mxu0 0.0
    %1852 = vmatpush.msra.mxu0 0.0
    %1853 = vmatpush.msra.mxu0 %v847
    %1854 = vmatpush.msra.mxu0 %v846
    %1855 = vmatpush.msra.mxu0 %v845
    %1856 = vmatpush.msra.mxu0 %v844
    %1857 = vmatmul.f32.gmra.mxu0 %v1839
    %v1858 = vpop.f32.mrf.mxu0
    %v1859 = vadd.f32 0.0, %v1858
    %1860 = vdwg.mxu0
    %v1862 = vrot.slane %v1859, 4
    %v1864 = vadd.f32 %v842, %v1862
    %v1865 = vxor.u32 %v1864, 2147483648
    %v1866 = vmul.f32 %v1865, 1.442695
    %v1867 = vpow.pop %v1866
    %v1868 = vadd.f32 %v1867, 1.0
    %v1869 = vrcp.pop %v1868
    %v1870 = vmul.f32 %v1868, %v1869
    %v1871 = vsub.f32 1.0, %v1870
    %v1872 = vmul.f32 %v1869, %v1871
    %v1873 = vadd.f32 %v1869, %v1872
    %vm1874 = vweird.f32 %v1868
    %vm1875 = vweird.f32 %v1869
    %vm1876 = vmor %vm1874, %vm1875
    %v1877 = vsel %vm1876, %v1869, %v1873
    %v1878 = vand.u32 2147483647, %v1868
    %vm1879 = vcmp.eq.f32.partialorder %v1878, 8.507059e+37
    %v1880 = vand.u32 %v1868, 2147483648
    %v1881 = vor.u32 1.1754944e-38, %v1880
    %v1882 = vsel %vm1879, %v1881, %v1877
    %v1883 = vmul.f32 1.0, %v1882
    %v1884 = vadd.f32 %v1859, %v896
    %v1886 = vrot.slane %v1884, 4
    %1887 = vrot.lane.b32.xlu0 %v1886, 64
    %v1888 = vpop.permute.xlu0 %1887
    %v1890 = vmul.f32 %v1883, %v1888
    %1892 = vrot.lane.b32.xlu0 %v1890, 64
    %v1893 = vpop.permute.xlu0 %1892
    %v1895 = vadd.f32 %v842, %v1893
    %v1896 = vtanh.pop %v1895
    %v1897 = vsub.f32 1.0, %v1883
    %1899 = vrot.lane.b32.xlu0 %v1896, 96
    %v1900 = vpop.permute.xlu0 %1899
    %v1902 = vmul.f32 %v1897, %v1900
    %v1903 = vrot.slane %v1834, 6
    %v1905 = vmul.f32 %v1883, %v1903
    %v1906 = vadd.f32 %v1902, %v1905
    %v1908 = vrot.slane %v1906, 4
    %1909 = vrot.lane.b32.xlu0 %v1908, 96
    %v1910 = vpop.permute.xlu0 %1909
    %v1911 = vsel %vm849, %v1910, 0
    %1913 = vmatpush.msra.mxu0 0.0
    %1914 = vmatpush.msra.mxu0 0.0
    %1915 = vmatpush.msra.mxu0 0.0
    %1916 = vmatpush.msra.mxu0 0.0
    %1917 = vmatpush.msra.mxu0 0.0
    %1918 = vmatpush.msra.mxu0 0.0
    %1919 = vmatpush.msra.mxu0 0.0
    %1920 = vmatpush.msra.mxu0 0.0
    %1921 = vmatpush.msra.mxu0 0.0
    %1922 = vmatpush.msra.mxu0 0.0
    %1923 = vmatpush.msra.mxu0 0.0
    %1924 = vmatpush.msra.mxu0 0.0
    %1925 = vmatpush.msra.mxu0 %v847
    %1926 = vmatpush.msra.mxu0 %v846
    %1927 = vmatpush.msra.mxu0 %v845
    %1928 = vmatpush.msra.mxu0 %v844
    %1929 = vmatmul.f32.gmra.mxu0 %v1911
    %v1930 = vpop.f32.mrf.mxu0
    %v1931 = vadd.f32 0.0, %v1930
    %1932 = vdwg.mxu0
    %v1934 = vrot.slane %v1931, 2
    %v1936 = vadd.f32 %v842, %v1934
    %v1937 = vxor.u32 %v1936, 2147483648
    %v1938 = vmul.f32 %v1937, 1.442695
    %v1939 = vpow.pop %v1938
    %v1940 = vadd.f32 %v1939, 1.0
    %v1941 = vrcp.pop %v1940
    %v1942 = vmul.f32 %v1940, %v1941
    %v1943 = vsub.f32 1.0, %v1942
    %v1944 = vmul.f32 %v1941, %v1943
    %v1945 = vadd.f32 %v1941, %v1944
    %vm1946 = vweird.f32 %v1940
    %vm1947 = vweird.f32 %v1941
    %vm1948 = vmor %vm1946, %vm1947
    %v1949 = vsel %vm1948, %v1941, %v1945
    %v1950 = vand.u32 2147483647, %v1940
    %vm1951 = vcmp.eq.f32.partialorder %v1950, 8.507059e+37
    %v1952 = vand.u32 %v1940, 2147483648
    %v1953 = vor.u32 1.1754944e-38, %v1952
    %v1954 = vsel %vm1951, %v1953, %v1949
    %v1955 = vmul.f32 1.0, %v1954
    %v1956 = vadd.f32 %v1931, %v896
    %v1958 = vrot.slane %v1956, 2
    %1959 = vrot.lane.b32.xlu0 %v1958, 64
    %v1960 = vpop.permute.xlu0 %1959
    %v1962 = vmul.f32 %v1955, %v1960
    %1964 = vrot.lane.b32.xlu0 %v1962, 64
    %v1965 = vpop.permute.xlu0 %1964
    %v1967 = vadd.f32 %v842, %v1965
    %v1968 = vtanh.pop %v1967
    %v1969 = vsub.f32 1.0, %v1955
    %1971 = vrot.lane.b32.xlu0 %v1968, 96
    %v1972 = vpop.permute.xlu0 %1971
    %v1974 = vmul.f32 %v1969, %v1972
    %v1975 = vrot.slane %v1906, 6
    %v1977 = vmul.f32 %v1955, %v1975
    %v1978 = vadd.f32 %v1974, %v1977
    %v1979 = vld [vmem:[#allocation14] sm:$0xff]
    %v1980 = vld [vmem:[#allocation15] sm:$0x1]
    %v1981 = vsel %vm226, 0.0, 0
    %1983 = vmatpush.msra.mxu0 0.0
    %1984 = vmatpush.msra.mxu0 0.0
    %1985 = vmatpush.msra.mxu0 0.0
    %1986 = vmatpush.msra.mxu0 0.0
    %1987 = vmatpush.msra.mxu0 0.0
    %1988 = vmatpush.msra.mxu0 0.0
    %1989 = vmatpush.msra.mxu0 0.0
    %1990 = vmatpush.msra.mxu0 0.0
    %1991 = vmatpush.msra.mxu0 0.0
    %1992 = vmatpush.msra.mxu0 0.0
    %1993 = vmatpush.msra.mxu0 0.0
    %1994 = vmatpush.msra.mxu0 0.0
    %1995 = vmatpush.msra.mxu0 0.0
    %1996 = vmatpush.msra.mxu0 0.0
    %1997 = vmatpush.msra.mxu0 0.0
    %1998 = vmatpush.msra.mxu0 %v1979
    %1999 = vmatmul.f32.gmra.mxu0 %v1981
    %v2000 = vpop.f32.mrf.mxu0
    %v2001 = vadd.f32 0.0, %v2000
    %2002 = vdwg.mxu0
    %2004 = vrot.lane.b32.xlu0 %v2001, 96
    %v2005 = vpop.permute.xlu0 %2004
    %v2007 = vadd.f32 %v836, %v2005
    %v2008 = vxor.u32 %v2007, 2147483648
    %v2009 = vmul.f32 %v2008, 1.442695
    %v2010 = vpow.pop %v2009
    %v2011 = vadd.f32 %v2010, 1.0
    %v2012 = vrcp.pop %v2011
    %v2013 = vmul.f32 %v2011, %v2012
    %v2014 = vsub.f32 1.0, %v2013
    %v2015 = vmul.f32 %v2012, %v2014
    %v2016 = vadd.f32 %v2012, %v2015
    %vm2017 = vweird.f32 %v2011
    %vm2018 = vweird.f32 %v2012
    %vm2019 = vmor %vm2017, %vm2018
    %v2020 = vsel %vm2019, %v2012, %v2016
    %v2021 = vand.u32 2147483647, %v2011
    %vm2022 = vcmp.eq.f32.partialorder %v2021, 8.507059e+37
    %v2023 = vand.u32 %v2011, 2147483648
    %v2024 = vor.u32 1.1754944e-38, %v2023
    %v2025 = vsel %vm2022, %v2024, %v2020
    %v2026 = vmul.f32 1.0, %v2025
    %v2028 = vperm.slane %v1980, 0
    %2029 = vrot.lane.b32.xlu0 %v2028, 16
    %v2030 = vpop.permute.xlu0 %2029
    %v2032 = vadd.f32 %v2001, %v2030
    %2034 = vrot.lane.b32.xlu0 %v2032, 80
    %v2035 = vpop.permute.xlu0 %2034
    %v2037 = vmul.f32 %v2026, %v2035
    %2039 = vrot.lane.b32.xlu0 %v2037, 16
    %v2040 = vpop.permute.xlu0 %2039
    %v2042 = vadd.f32 %v836, %v2040
    %v2043 = vtanh.pop %v2042
    %v2044 = vsub.f32 1.0, %v2026
    %2046 = vrot.lane.b32.xlu0 %v2043, 120
    %v2047 = vpop.permute.xlu0 %2046
    %v2049 = vmul.f32 %v2044, %v2047
    %v2050 = vmul.f32 %v2026, 0.0
    %v2051 = vadd.f32 %v2049, %v2050
    %2053 = vrot.lane.b32.xlu0 %v2051, 24
    %v2054 = vpop.permute.xlu0 %2053
    %v2055 = vsel %vm226, %v2054, 0
    %2057 = vmatpush.msra.mxu0 0.0
    %2058 = vmatpush.msra.mxu0 0.0
    %2059 = vmatpush.msra.mxu0 0.0
    %2060 = vmatpush.msra.mxu0 0.0
    %2061 = vmatpush.msra.mxu0 0.0
    %2062 = vmatpush.msra.mxu0 0.0
    %2063 = vmatpush.msra.mxu0 0.0
    %2064 = vmatpush.msra.mxu0 0.0
    %2065 = vmatpush.msra.mxu0 0.0
    %2066 = vmatpush.msra.mxu0 0.0
    %2067 = vmatpush.msra.mxu0 0.0
    %2068 = vmatpush.msra.mxu0 0.0
    %2069 = vmatpush.msra.mxu0 0.0
    %2070 = vmatpush.msra.mxu0 0.0
    %2071 = vmatpush.msra.mxu0 0.0
    %2072 = vmatpush.msra.mxu0 %v1979
    %2073 = vmatmul.f32.gmra.mxu0 %v2055
    %v2074 = vpop.f32.mrf.mxu0
    %v2075 = vadd.f32 0.0, %v2074
    %2076 = vdwg.mxu0
    %v2078 = vrot.slane %v2075, 4
    %2079 = vrot.lane.b32.xlu0 %v2078, 96
    %v2080 = vpop.permute.xlu0 %2079
    %v2082 = vadd.f32 %v836, %v2080
    %v2083 = vxor.u32 %v2082, 2147483648
    %v2084 = vmul.f32 %v2083, 1.442695
    %v2085 = vpow.pop %v2084
    %v2086 = vadd.f32 %v2085, 1.0
    %v2087 = vrcp.pop %v2086
    %v2088 = vmul.f32 %v2086, %v2087
    %v2089 = vsub.f32 1.0, %v2088
    %v2090 = vmul.f32 %v2087, %v2089
    %v2091 = vadd.f32 %v2087, %v2090
    %vm2092 = vweird.f32 %v2086
    %vm2093 = vweird.f32 %v2087
    %vm2094 = vmor %vm2092, %vm2093
    %v2095 = vsel %vm2094, %v2087, %v2091
    %v2096 = vand.u32 2147483647, %v2086
    %vm2097 = vcmp.eq.f32.partialorder %v2096, 8.507059e+37
    %v2098 = vand.u32 %v2086, 2147483648
    %v2099 = vor.u32 1.1754944e-38, %v2098
    %v2100 = vsel %vm2097, %v2099, %v2095
    %v2101 = vmul.f32 1.0, %v2100
    %v2102 = vadd.f32 %v2075, %v2030
    %v2104 = vrot.slane %v2102, 4
    %2105 = vrot.lane.b32.xlu0 %v2104, 80
    %v2106 = vpop.permute.xlu0 %2105
    %v2108 = vmul.f32 %v2101, %v2106
    %2110 = vrot.lane.b32.xlu0 %v2108, 16
    %v2111 = vpop.permute.xlu0 %2110
    %v2113 = vadd.f32 %v836, %v2111
    %v2114 = vtanh.pop %v2113
    %v2115 = vsub.f32 1.0, %v2101
    %2117 = vrot.lane.b32.xlu0 %v2114, 120
    %v2118 = vpop.permute.xlu0 %2117
    %v2120 = vmul.f32 %v2115, %v2118
    %v2121 = vrot.slane %v2051, 4
    %v2123 = vmul.f32 %v2101, %v2121
    %v2124 = vadd.f32 %v2120, %v2123
    %v2126 = vrot.slane %v2124, 4
    %2127 = vrot.lane.b32.xlu0 %v2126, 24
    %v2128 = vpop.permute.xlu0 %2127
    %v2129 = vsel %vm226, %v2128, 0
    %2131 = vmatpush.msra.mxu0 0.0
    %2132 = vmatpush.msra.mxu0 0.0
    %2133 = vmatpush.msra.mxu0 0.0
    %2134 = vmatpush.msra.mxu0 0.0
    %2135 = vmatpush.msra.mxu0 0.0
    %2136 = vmatpush.msra.mxu0 0.0
    %2137 = vmatpush.msra.mxu0 0.0
    %2138 = vmatpush.msra.mxu0 0.0
    %2139 = vmatpush.msra.mxu0 0.0
    %2140 = vmatpush.msra.mxu0 0.0
    %2141 = vmatpush.msra.mxu0 0.0
    %2142 = vmatpush.msra.mxu0 0.0
    %2143 = vmatpush.msra.mxu0 0.0
    %2144 = vmatpush.msra.mxu0 0.0
    %2145 = vmatpush.msra.mxu0 0.0
    %2146 = vmatpush.msra.mxu0 %v1979
    %2147 = vmatmul.f32.gmra.mxu0 %v2129
    %v2148 = vpop.f32.mrf.mxu0
    %v2149 = vadd.f32 0.0, %v2148
    %2150 = vdwg.mxu0
    %2152 = vrot.lane.b32.xlu0 %v2149, 96
    %v2153 = vpop.permute.xlu0 %2152
    %v2155 = vadd.f32 %v839, %v2153
    %v2156 = vxor.u32 %v2155, 2147483648
    %v2157 = vmul.f32 %v2156, 1.442695
    %v2158 = vpow.pop %v2157
    %v2159 = vadd.f32 %v2158, 1.0
    %v2160 = vrcp.pop %v2159
    %v2161 = vmul.f32 %v2159, %v2160
    %v2162 = vsub.f32 1.0, %v2161
    %v2163 = vmul.f32 %v2160, %v2162
    %v2164 = vadd.f32 %v2160, %v2163
    %vm2165 = vweird.f32 %v2159
    %vm2166 = vweird.f32 %v2160
    %vm2167 = vmor %vm2165, %vm2166
    %v2168 = vsel %vm2167, %v2160, %v2164
    %v2169 = vand.u32 2147483647, %v2159
    %vm2170 = vcmp.eq.f32.partialorder %v2169, 8.507059e+37
    %v2171 = vand.u32 %v2159, 2147483648
    %v2172 = vor.u32 1.1754944e-38, %v2171
    %v2173 = vsel %vm2170, %v2172, %v2168
    %v2174 = vmul.f32 1.0, %v2173
    %v2175 = vadd.f32 %v2149, %v2030
    %2177 = vrot.lane.b32.xlu0 %v2175, 80
    %v2178 = vpop.permute.xlu0 %2177
    %v2180 = vmul.f32 %v2174, %v2178
    %2182 = vrot.lane.b32.xlu0 %v2180, 16
    %v2183 = vpop.permute.xlu0 %2182
    %v2185 = vadd.f32 %v839, %v2183
    %v2186 = vtanh.pop %v2185
    %v2187 = vsub.f32 1.0, %v2174
    %2189 = vrot.lane.b32.xlu0 %v2186, 120
    %v2190 = vpop.permute.xlu0 %2189
    %v2192 = vmul.f32 %v2187, %v2190
    %v2194 = vmul.f32 %v2174, %v2126
    %v2195 = vadd.f32 %v2192, %v2194
    %2197 = vrot.lane.b32.xlu0 %v2195, 24
    %v2198 = vpop.permute.xlu0 %2197
    %v2199 = vsel %vm226, %v2198, 0
    %2201 = vmatpush.msra.mxu0 0.0
    %2202 = vmatpush.msra.mxu0 0.0
    %2203 = vmatpush.msra.mxu0 0.0
    %2204 = vmatpush.msra.mxu0 0.0
    %2205 = vmatpush.msra.mxu0 0.0
    %2206 = vmatpush.msra.mxu0 0.0
    %2207 = vmatpush.msra.mxu0 0.0
    %2208 = vmatpush.msra.mxu0 0.0
    %2209 = vmatpush.msra.mxu0 0.0
    %2210 = vmatpush.msra.mxu0 0.0
    %2211 = vmatpush.msra.mxu0 0.0
    %2212 = vmatpush.msra.mxu0 0.0
    %2213 = vmatpush.msra.mxu0 0.0
    %2214 = vmatpush.msra.mxu0 0.0
    %2215 = vmatpush.msra.mxu0 0.0
    %2216 = vmatpush.msra.mxu0 %v1979
    %2217 = vmatmul.f32.gmra.mxu0 %v2199
    %v2218 = vpop.f32.mrf.mxu0
    %v2219 = vadd.f32 0.0, %v2218
    %2220 = vdwg.mxu0
    %v2222 = vrot.slane %v2219, 4
    %2223 = vrot.lane.b32.xlu0 %v2222, 96
    %v2224 = vpop.permute.xlu0 %2223
    %v2226 = vadd.f32 %v839, %v2224
    %v2227 = vxor.u32 %v2226, 2147483648
    %v2228 = vmul.f32 %v2227, 1.442695
    %v2229 = vpow.pop %v2228
    %v2230 = vadd.f32 %v2229, 1.0
    %v2231 = vrcp.pop %v2230
    %v2232 = vmul.f32 %v2230, %v2231
    %v2233 = vsub.f32 1.0, %v2232
    %v2234 = vmul.f32 %v2231, %v2233
    %v2235 = vadd.f32 %v2231, %v2234
    %vm2236 = vweird.f32 %v2230
    %vm2237 = vweird.f32 %v2231
    %vm2238 = vmor %vm2236, %vm2237
    %v2239 = vsel %vm2238, %v2231, %v2235
    %v2240 = vand.u32 2147483647, %v2230
    %vm2241 = vcmp.eq.f32.partialorder %v2240, 8.507059e+37
    %v2242 = vand.u32 %v2230, 2147483648
    %v2243 = vor.u32 1.1754944e-38, %v2242
    %v2244 = vsel %vm2241, %v2243, %v2239
    %v2245 = vmul.f32 1.0, %v2244
    %v2246 = vadd.f32 %v2219, %v2030
    %v2248 = vrot.slane %v2246, 4
    %2249 = vrot.lane.b32.xlu0 %v2248, 80
    %v2250 = vpop.permute.xlu0 %2249
    %v2252 = vmul.f32 %v2245, %v2250
    %2254 = vrot.lane.b32.xlu0 %v2252, 16
    %v2255 = vpop.permute.xlu0 %2254
    %v2257 = vadd.f32 %v839, %v2255
    %v2258 = vtanh.pop %v2257
    %v2259 = vsub.f32 1.0, %v2245
    %2261 = vrot.lane.b32.xlu0 %v2258, 120
    %v2262 = vpop.permute.xlu0 %2261
    %v2264 = vmul.f32 %v2259, %v2262
    %v2265 = vrot.slane %v2195, 4
    %v2267 = vmul.f32 %v2245, %v2265
    %v2268 = vadd.f32 %v2264, %v2267
    %v2270 = vrot.slane %v2268, 4
    %2271 = vrot.lane.b32.xlu0 %v2270, 24
    %v2272 = vpop.permute.xlu0 %2271
    %v2273 = vsel %vm226, %v2272, 0
    %2275 = vmatpush.msra.mxu0 0.0
    %2276 = vmatpush.msra.mxu0 0.0
    %2277 = vmatpush.msra.mxu0 0.0
    %2278 = vmatpush.msra.mxu0 0.0
    %2279 = vmatpush.msra.mxu0 0.0
    %2280 = vmatpush.msra.mxu0 0.0
    %2281 = vmatpush.msra.mxu0 0.0
    %2282 = vmatpush.msra.mxu0 0.0
    %2283 = vmatpush.msra.mxu0 0.0
    %2284 = vmatpush.msra.mxu0 0.0
    %2285 = vmatpush.msra.mxu0 0.0
    %2286 = vmatpush.msra.mxu0 0.0
    %2287 = vmatpush.msra.mxu0 0.0
    %2288 = vmatpush.msra.mxu0 0.0
    %2289 = vmatpush.msra.mxu0 0.0
    %2290 = vmatpush.msra.mxu0 %v1979
    %2291 = vmatmul.f32.gmra.mxu0 %v2273
    %v2292 = vpop.f32.mrf.mxu0
    %v2293 = vadd.f32 0.0, %v2292
    %2294 = vdwg.mxu0
    %2296 = vrot.lane.b32.xlu0 %v2293, 96
    %v2297 = vpop.permute.xlu0 %2296
    %v2299 = vadd.f32 %v842, %v2297
    %v2300 = vxor.u32 %v2299, 2147483648
    %v2301 = vmul.f32 %v2300, 1.442695
    %v2302 = vpow.pop %v2301
    %v2303 = vadd.f32 %v2302, 1.0
    %v2304 = vrcp.pop %v2303
    %v2305 = vmul.f32 %v2303, %v2304
    %v2306 = vsub.f32 1.0, %v2305
    %v2307 = vmul.f32 %v2304, %v2306
    %v2308 = vadd.f32 %v2304, %v2307
    %vm2309 = vweird.f32 %v2303
    %vm2310 = vweird.f32 %v2304
    %vm2311 = vmor %vm2309, %vm2310
    %v2312 = vsel %vm2311, %v2304, %v2308
    %v2313 = vand.u32 2147483647, %v2303
    %vm2314 = vcmp.eq.f32.partialorder %v2313, 8.507059e+37
    %v2315 = vand.u32 %v2303, 2147483648
    %v2316 = vor.u32 1.1754944e-38, %v2315
    %v2317 = vsel %vm2314, %v2316, %v2312
    %v2318 = vmul.f32 1.0, %v2317
    %v2319 = vadd.f32 %v2293, %v2030
    %2321 = vrot.lane.b32.xlu0 %v2319, 80
    %v2322 = vpop.permute.xlu0 %2321
    %v2324 = vmul.f32 %v2318, %v2322
    %2326 = vrot.lane.b32.xlu0 %v2324, 16
    %v2327 = vpop.permute.xlu0 %2326
    %v2329 = vadd.f32 %v842, %v2327
    %v2330 = vtanh.pop %v2329
    %v2331 = vsub.f32 1.0, %v2318
    %2333 = vrot.lane.b32.xlu0 %v2330, 120
    %v2334 = vpop.permute.xlu0 %2333
    %v2336 = vmul.f32 %v2331, %v2334
    %v2338 = vmul.f32 %v2318, %v2270
    %v2339 = vadd.f32 %v2336, %v2338
    %2341 = vrot.lane.b32.xlu0 %v2339, 24
    %v2342 = vpop.permute.xlu0 %2341
    %v2343 = vsel %vm226, %v2342, 0
    %2345 = vmatpush.msra.mxu0 0.0
    %2346 = vmatpush.msra.mxu0 0.0
    %2347 = vmatpush.msra.mxu0 0.0
    %2348 = vmatpush.msra.mxu0 0.0
    %2349 = vmatpush.msra.mxu0 0.0
    %2350 = vmatpush.msra.mxu0 0.0
    %2351 = vmatpush.msra.mxu0 0.0
    %2352 = vmatpush.msra.mxu0 0.0
    %2353 = vmatpush.msra.mxu0 0.0
    %2354 = vmatpush.msra.mxu0 0.0
    %2355 = vmatpush.msra.mxu0 0.0
    %2356 = vmatpush.msra.mxu0 0.0
    %2357 = vmatpush.msra.mxu0 0.0
    %2358 = vmatpush.msra.mxu0 0.0
    %2359 = vmatpush.msra.mxu0 0.0
    %2360 = vmatpush.msra.mxu0 %v1979
    %2361 = vmatmul.f32.gmra.mxu0 %v2343
    %v2362 = vpop.f32.mrf.mxu0
    %v2363 = vadd.f32 0.0, %v2362
    %2364 = vdwg.mxu0
    %v2366 = vrot.slane %v2363, 4
    %2367 = vrot.lane.b32.xlu0 %v2366, 96
    %v2368 = vpop.permute.xlu0 %2367
    %v2370 = vadd.f32 %v842, %v2368
    %v2371 = vxor.u32 %v2370, 2147483648
    %v2372 = vmul.f32 %v2371, 1.442695
    %v2373 = vpow.pop %v2372
    %v2374 = vadd.f32 %v2373, 1.0
    %v2375 = vrcp.pop %v2374
    %v2376 = vmul.f32 %v2374, %v2375
    %v2377 = vsub.f32 1.0, %v2376
    %v2378 = vmul.f32 %v2375, %v2377
    %v2379 = vadd.f32 %v2375, %v2378
    %vm2380 = vweird.f32 %v2374
    %vm2381 = vweird.f32 %v2375
    %vm2382 = vmor %vm2380, %vm2381
    %v2383 = vsel %vm2382, %v2375, %v2379
    %v2384 = vand.u32 2147483647, %v2374
    %vm2385 = vcmp.eq.f32.partialorder %v2384, 8.507059e+37
    %v2386 = vand.u32 %v2374, 2147483648
    %v2387 = vor.u32 1.1754944e-38, %v2386
    %v2388 = vsel %vm2385, %v2387, %v2383
    %v2389 = vmul.f32 1.0, %v2388
    %v2390 = vadd.f32 %v2363, %v2030
    %v2392 = vrot.slane %v2390, 4
    %2393 = vrot.lane.b32.xlu0 %v2392, 80
    %v2394 = vpop.permute.xlu0 %2393
    %v2396 = vmul.f32 %v2389, %v2394
    %2398 = vrot.lane.b32.xlu0 %v2396, 16
    %v2399 = vpop.permute.xlu0 %2398
    %v2401 = vadd.f32 %v842, %v2399
    %v2402 = vtanh.pop %v2401
    %v2403 = vsub.f32 1.0, %v2389
    %2405 = vrot.lane.b32.xlu0 %v2402, 120
    %v2406 = vpop.permute.xlu0 %2405
    %v2408 = vmul.f32 %v2403, %v2406
    %v2409 = vrot.slane %v2339, 4
    %v2411 = vmul.f32 %v2389, %v2409
    %v2412 = vadd.f32 %v2408, %v2411
    %v2413 = vld [vmem:[%s13] sm:$0xff]
    %v2414 = vld [vmem:[%s13 + $0x8] sm:$0xff]
    %v2415 = vld [vmem:[%s13 + $0x10] sm:$0xff]
    %v2416 = vld [vmem:[%s13 + $0x18] sm:$0xff]
    %v2417 = vld [vmem:[#allocation18] sm:$0x1]
    %v2419 = vperm.slane %v2417, 0
    %v2422 = vrot.slane %v1978, 6
    %2423 = vrot.lane.b32.xlu0 %v2422, 96
    %v2424 = vpop.permute.xlu0 %2423
    %v2425 = vsel %vm849, %v2424, 0
    %2427 = vmatpush.msra.mxu0 0.0
    %2428 = vmatpush.msra.mxu0 0.0
    %2429 = vmatpush.msra.mxu0 0.0
    %2430 = vmatpush.msra.mxu0 0.0
    %2431 = vmatpush.msra.mxu0 0.0
    %2432 = vmatpush.msra.mxu0 0.0
    %2433 = vmatpush.msra.mxu0 0.0
    %2434 = vmatpush.msra.mxu0 0.0
    %2435 = vmatpush.msra.mxu0 0.0
    %2436 = vmatpush.msra.mxu0 0.0
    %2437 = vmatpush.msra.mxu0 0.0
    %2438 = vmatpush.msra.mxu0 0.0
    %2439 = vmatpush.msra.mxu0 %v2416
    %2440 = vmatpush.msra.mxu0 %v2415
    %2441 = vmatpush.msra.mxu0 %v2414
    %2442 = vmatpush.msra.mxu0 %v2413
    %2443 = vmatmul.f32.gmra.mxu0 %v2425
    %v2444 = vpop.f32.mrf.mxu0
    %v2445 = vadd.f32 %v2419, %v2444
    %2446 = vdwg.mxu0
    %v2447 = vld [vmem:[#allocation17] sm:$0xff]
    %v2449 = vrot.slane %v2412, 4
    %2450 = vrot.lane.b32.xlu0 %v2449, 24
    %v2451 = vpop.permute.xlu0 %2450
    %v2452 = vsel %vm226, %v2451, 0
    %2454 = vmatpush.msra.mxu0 0.0
    %2455 = vmatpush.msra.mxu0 0.0
    %2456 = vmatpush.msra.mxu0 0.0
    %2457 = vmatpush.msra.mxu0 0.0
    %2458 = vmatpush.msra.mxu0 0.0
    %2459 = vmatpush.msra.mxu0 0.0
    %2460 = vmatpush.msra.mxu0 0.0
    %2461 = vmatpush.msra.mxu0 0.0
    %2462 = vmatpush.msra.mxu0 0.0
    %2463 = vmatpush.msra.mxu0 0.0
    %2464 = vmatpush.msra.mxu0 0.0
    %2465 = vmatpush.msra.mxu0 0.0
    %2466 = vmatpush.msra.mxu0 0.0
    %2467 = vmatpush.msra.mxu0 0.0
    %2468 = vmatpush.msra.mxu0 0.0
    %2469 = vmatpush.msra.mxu0 %v2447
    %2470 = vmatmul.f32.gmra.mxu0 %v2452
    %v2471 = vpop.f32.mrf.mxu0
    %v2472 = vadd.f32 0.0, %v2471
    %2473 = vdwg.mxu0
    %v2474 = vadd.f32 %v2445, %v2472
    %s2475 = scalar_lea.vmem [#allocation17], 8
    %v2476 = vld [vmem:[%s2475] sm:$0xff]
    %v2477 = vrot.slane %v2412, 6
    %2478 = vrot.lane.b32.xlu0 %v2477, 24
    %v2479 = vpop.permute.xlu0 %2478
    %v2480 = vsel %vm226, %v2479, 0
    %2482 = vmatpush.msra.mxu0 0.0
    %2483 = vmatpush.msra.mxu0 0.0
    %2484 = vmatpush.msra.mxu0 0.0
    %2485 = vmatpush.msra.mxu0 0.0
    %2486 = vmatpush.msra.mxu0 0.0
    %2487 = vmatpush.msra.mxu0 0.0
    %2488 = vmatpush.msra.mxu0 0.0
    %2489 = vmatpush.msra.mxu0 0.0
    %2490 = vmatpush.msra.mxu0 0.0
    %2491 = vmatpush.msra.mxu0 0.0
    %2492 = vmatpush.msra.mxu0 0.0
    %2493 = vmatpush.msra.mxu0 0.0
    %2494 = vmatpush.msra.mxu0 0.0
    %2495 = vmatpush.msra.mxu0 0.0
    %2496 = vmatpush.msra.mxu0 0.0
    %2497 = vmatpush.msra.mxu0 %v2476
    %2498 = vmatmul.f32.gmra.mxu0 %v2480
    %v2499 = vpop.f32.mrf.mxu0
    %v2500 = vadd.f32 0.0, %v2499
    %2501 = vdwg.mxu0
    %v2502 = vadd.f32 %v2474, %v2500
    %v2503 = vld [vmem:[#allocation20] sm:$0xf]
    %v2504 = vperm.slane %v2503, 0
    %2506 = vrot.lane.b32.xlu0 %v2504, 96
    %v2507 = vpop.permute.xlu0 %2506
    %v2509 = vmul.f32 %v679, %v2507
    %2511 = vrot.lane.b32.xlu0 %v2509, 32
    %v2512 = vpop.permute.xlu0 %2511
    %v2514 = vadd.f32 %v2502, %v2512
    %v2515 = vperm.slane %v2503, 1
    %2517 = vrot.lane.b32.xlu0 %v2515, 104
    %v2518 = vpop.permute.xlu0 %2517
    %v2520 = vmul.f32 %v679, %v2518
    %2522 = vrot.lane.b32.xlu0 %v2520, 24
    %v2523 = vpop.permute.xlu0 %2522
    %v2525 = vadd.f32 %v2514, %v2523
    %v2526 = vperm.slane %v2503, 2
    %2528 = vrot.lane.b32.xlu0 %v2526, 112
    %v2529 = vpop.permute.xlu0 %2528
    %v2531 = vmul.f32 %v679, %v2529
    %2533 = vrot.lane.b32.xlu0 %v2531, 16
    %v2534 = vpop.permute.xlu0 %2533
    %v2536 = vadd.f32 %v2525, %v2534
    %v2537 = vperm.slane %v2503, 3
    %2539 = vrot.lane.b32.xlu0 %v2537, 120
    %v2540 = vpop.permute.xlu0 %2539
    %v2542 = vmul.f32 %v679, %v2540
    %2544 = vrot.lane.b32.xlu0 %v2542, 8
    %v2545 = vpop.permute.xlu0 %2544
    %v2547 = vadd.f32 %v2536, %v2545
    %v2548 = vxor.u32 %v2547, 2147483648
    %v2549 = vmul.f32 %v2548, 1.442695
    %v2550 = vpow.pop %v2549
    %v2551 = vadd.f32 %v2550, 1.0
    %v2552 = vrcp.pop %v2551
    %v2553 = vmul.f32 %v2551, %v2552
    %v2554 = vsub.f32 1.0, %v2553
    %v2555 = vmul.f32 %v2552, %v2554
    %v2556 = vadd.f32 %v2552, %v2555
    %vm2557 = vweird.f32 %v2551
    %vm2558 = vweird.f32 %v2552
    %vm2559 = vmor %vm2557, %vm2558
    %v2560 = vsel %vm2559, %v2552, %v2556
    %v2561 = vand.u32 2147483647, %v2551
    %vm2562 = vcmp.eq.f32.partialorder %v2561, 8.507059e+37
    %v2563 = vand.u32 %v2551, 2147483648
    %v2564 = vor.u32 1.1754944e-38, %v2563
    %v2565 = vsel %vm2562, %v2564, %v2560
    %v2566 = vmul.f32 1.0, %v2565
    %2567 = vst.msk [vmem:[#allocation21] sm:$0x3] %vm680, %v2566
    // Predicated region
    $region114: #{forward.1} parent=1 // pred_check
      _
    $region115: #{forward.1} parent=1 // pred_check_branch
      %2569 = sbr.rel (0) target = $region117
    $region116: #{forward.1} parent=1 // pred_region
      %2571 = vsyncadd [#allocation5], 0
      %s2573 = sshll.u32 [#allocation21], 4
      %s2574 = int_to_ptr.vmem [resolvable:$true] %s2573
      %s2575 = sshll.u32 %s17, 4
      %s2576 = int_to_ptr.hbm [resolvable:$true] %s2575
      %2578 = dma.vmem_to_hbm [thread:$0]  %s2574, 32, %s2576, [#allocation5]
    $region117: #{forward.1} parent=1 // pred_fallthru
      _
    // Predicated region
    $region118: #{forward.1} parent=1 // pred_check
      _
    $region119: #{forward.1} parent=1 // pred_check_branch
      %2580 = sbr.rel (0) target = $region121
    $region120: #{forward.1} parent=1 // pred_region
      %2582 = dma.done [#allocation5], 32
    $region121: #{forward.1} parent=1 // pred_fallthru
      _
    %2583 = vsyncpa [#allocation4], 1
    %2584 = vsyncpa [#allocation7], 1
    %2585 = vsyncpa [#allocation10], 1
    %2586 = vsyncpa [#allocation13], 1
    %2587 = vsyncpa [#allocation16], 1
    %2588 = vsyncpa [#allocation19], 1
    %2589 = vsyncpa [#allocation5], 1

</llo_original>
